<compile_context>
chip_gen: v7x
topology: tpu7x:2x2x1
jax: 0.10.0
libtpu: 0.0.40
codegen_flags: <defaults>
</compile_context>

<pallas_src>
import functools

import numpy as np
import jax
import jax.numpy as jnp
from jax.experimental import pallas as pl
from jax.experimental.pallas import tpu as pltpu

# ----------------------------------------------------------------------------
# Module hyper-parameters (from the PyTorch source)
# ----------------------------------------------------------------------------
AUDIO_WINDOW_LENGTH = 256
DISC_CONV_FILTER_COUNTS = [8, 16, 32, 64]
DISC_CONV_KERNEL_SIZES = [7, 7, 7, 7]
DISC_CONV_STRIDES = [4, 4, 4, 4]
DISC_DENSE_LAYER_SIZES = [32]
LEAKY_SLOPE = 0.01          # nn.LeakyReLU default
BN_EPS = 1e-5               # nn.BatchNorm1d default (eval mode / running stats)


# ----------------------------------------------------------------------------
# Pallas kernel: the ENTIRE forward as a chained matmul block in VMEM
# ----------------------------------------------------------------------------
def _disc_audio_kernel(x_ref, *refs):
    """refs = (W1, b1, W2, b2, ..., W6, b6, out_ref).

    h = x
    for each layer: h = act(h @ W + b)   (LeakyReLU, last layer Sigmoid)
    Weights are bf16 (single-pass MXU); bias/activations stay f32.
    All intermediates stay in vregs/VMEM; only the final (TB, 1) tile is stored.
    """
    o_ref = refs[-1]
    wb = refs[:-1]
    n_layers = len(wb) // 2

    h = x_ref[...]                                   # bf16 (or f32 -> cast below)
    for li in range(n_layers):
        w_ref = wb[2 * li]
        b_ref = wb[2 * li + 1]
        y = jnp.dot(h.astype(jnp.bfloat16), w_ref[...],
                    preferred_element_type=jnp.float32) + b_ref[...]
        if li < n_layers - 1:
            h = jnp.where(y > 0, y, LEAKY_SLOPE * y)                  # LeakyReLU (f32)
        else:
            h = pl.reciprocal(1.0 + jnp.exp(-y), approx=True)         # Sigmoid (EUP)
    o_ref[...] = h.astype(o_ref.dtype)


def _choose_row_tile(batch):
    """>=2 grid steps when B >= 16 (v7x megacore), 8-row aligned, capped at 512."""
    if batch < 16:
        return batch                                 # single full-dim block
    tb = ((pl.cdiv(batch, 2) + 7) // 8) * 8
    return min(tb, 512)                              # 512 cap: safe on v5e scoped VMEM


def discriminator_audio_forward(prepared, x, *, single_buffer_weights=True):
    """prepared = (mats, biases) from prepare_params; x:(B, 256) -> (B, 1) f32."""
    mats, biases = prepared
    B, F = x.shape
    TB = _choose_row_tile(B)
    grid = (pl.cdiv(B, TB),)

    in_specs = [pl.BlockSpec((TB, F), lambda i: (i, 0))]
    args = [x]
    # Grid-invariant operands: single-buffer them (copied once, no 2nd VMEM buffer).
    w_kwargs = {"pipeline_mode": pl.Buffered(1)} if single_buffer_weights else {}
    for M, b in zip(mats, biases):
        in_specs.append(pl.BlockSpec(M.shape, lambda i: (0, 0), **w_kwargs))
        in_specs.append(pl.BlockSpec(b.shape, lambda i: (0, 0), **w_kwargs))
        args.append(M)
        args.append(b)
    out_dim = mats[-1].shape[1]   # = 1

    return pl.pallas_call(
        _disc_audio_kernel,
        out_shape=jax.ShapeDtypeStruct((B, out_dim), jnp.float32),
        grid=grid,
        in_specs=in_specs,
        out_specs=pl.BlockSpec((TB, out_dim), lambda i: (i, 0)),
        compiler_params=pltpu.CompilerParams(
            dimension_semantics=("parallel",),
            vmem_limit_bytes=32 * 1024 * 1024),
    )(*args)


# ----------------------------------------------------------------------------
# One-time host-side parameter folding (BN + Conv1d -> dense bf16 matrix + f32 bias)
# ----------------------------------------------------------------------------
def _fold_bn(bn):
    gamma = np.asarray(bn["gamma"], np.float32)
    beta = np.asarray(bn["beta"], np.float32)
    mean = np.asarray(bn["mean"], np.float32)
    var = np.asarray(bn["var"], np.float32)
    s = gamma / np.sqrt(var + BN_EPS)       # BN scale
    t = beta - mean * s                     # BN shift
    return s, t


def prepare_params(params):
    """Fold every layer into (M:bf16, bias:f32) so the forward is a matmul chain.

    Channels-last flattening everywhere: column index = pos*C + c.  For the
    first layer Cin=1 so columns == raw sample positions; for the last conv
    layer Lout=1 so columns == channels, matching torch's x.view(-1, C*L).
    """
    mats, biases = [], []
    Lin, Cin = AUDIO_WINDOW_LENGTH, 1

    for i, Cout in enumerate(DISC_CONV_FILTER_COUNTS):
        w = np.asarray(params["conv"][i]["w"], np.float32)       # (Cout, Cin, K)
        b = np.asarray(params["conv"][i]["b"], np.float32)       # (Cout,)
        s, t = _fold_bn(params["conv_bn"][i])
        K = DISC_CONV_KERNEL_SIZES[i]
        stride = DISC_CONV_STRIDES[i]
        pad = (K - 1) // 2
        Lout = (Lin + 2 * pad - K) // stride + 1

        ws = w * s[None, :, None]                                # BN scale folded in
        M = np.zeros((Lin, Cin, Lout, Cout), np.float32)
        bias = np.tile(b[None, :], (Lout, 1)).astype(np.float32)
        for pout in range(Lout):
            for k in range(K):
                pin = stride * pout + k - pad
                if 0 <= pin < Lin:                               # non-padded tap
                    M[pin, :, pout, :] = ws[:, :, k].T           # (Cin, Cout)
                    bias[pout] += w[:, :, k] @ t                 # BN shift (valid taps only)
        mats.append(jnp.asarray(M.reshape(Lin * Cin, Lout * Cout), dtype=jnp.bfloat16))
        biases.append(jnp.asarray(bias.reshape(1, Lout * Cout), dtype=jnp.float32))
        Lin, Cin = Lout, Cout

    # Dense head: BN(F) -> Linear(F, O) folded the same way.
    for j in range(len(params["dense"])):
        w = np.asarray(params["dense"][j]["w"], np.float32)      # (O, F)
        b = np.asarray(params["dense"][j]["b"], np.float32)      # (O,)
        s, t = _fold_bn(params["dense_bn"][j])
        mats.append(jnp.asarray((w * s[None, :]).T, dtype=jnp.bfloat16))     # (F, O)
        biases.append(jnp.asarray((b + w @ t)[None, :], dtype=jnp.float32))  # (1, O)
    return tuple(mats), tuple(biases)


# ----------------------------------------------------------------------------
# Deterministic parameter initialization (shapes from the module's __init__)
# ----------------------------------------------------------------------------
def _init_bn(key, c):
    k1, k2, k3, k4 = jax.random.split(key, 4)
    return {
        "gamma": 1.0 + 0.1 * jax.random.normal(k1, (c,), jnp.float32),
        "beta": 0.1 * jax.random.normal(k2, (c,), jnp.float32),
        "mean": 0.1 * jax.random.normal(k3, (c,), jnp.float32),
        "var": jax.random.uniform(k4, (c,), jnp.float32, 0.5, 1.5),
    }


def init_params(key):
    params = {"conv": [], "conv_bn": [], "dense": [], "dense_bn": []}
    in_channels = 1
    for i, out_channels in enumerate(DISC_CONV_FILTER_COUNTS):
        K = DISC_CONV_KERNEL_SIZES[i]
        key, kb, kw, kbias = jax.random.split(key, 4)
        params["conv_bn"].append(_init_bn(kb, in_channels))
        fan_in = in_channels * K
        params["conv"].append({
            "w": jax.random.normal(kw, (out_channels, in_channels, K), jnp.float32)
                 / jnp.sqrt(fan_in),
            "b": 0.1 * jax.random.normal(kbias, (out_channels,), jnp.float32),
        })
        in_channels = out_channels

    # in_size after conv stack: 256 // (4*4*4*4) = 1 -> flattened = 1 * 64 = 64
    in_size = (AUDIO_WINDOW_LENGTH // int(np.prod(DISC_CONV_STRIDES))) \
        * DISC_CONV_FILTER_COUNTS[-1]
    dense_sizes = DISC_DENSE_LAYER_SIZES + [1]       # final Linear(32, 1) + Sigmoid
    for out_size in dense_sizes:
        key, kb, kw, kbias = jax.random.split(key, 4)
        params["dense_bn"].append(_init_bn(kb, in_size))
        params["dense"].append({
            "w": jax.random.normal(kw, (out_size, in_size), jnp.float32)
                 / jnp.sqrt(in_size),
            "b": 0.1 * jax.random.normal(kbias, (out_size,), jnp.float32),
        })
        in_size = out_size
    return params


# ----------------------------------------------------------------------------
# Pure-JAX reference (eval-mode BN, exact layer-by-layer, f32) for correctness
# ----------------------------------------------------------------------------
def _ref_conv1d(h, w, b, stride, pad):
    Bsz, Cin, Lin = h.shape
    Cout, _, K = w.shape
    hp = jnp.pad(h, ((0, 0), (0, 0), (pad, pad)))
    Lout = (Lin + 2 * pad - K) // stride + 1
    taps = [hp[:, :, k: k + stride * (Lout - 1) + 1: stride] for k in range(K)]
    patches = jnp.stack(taps, axis=2)                            # (B, Cin, K, Lout)
    y = jnp.einsum("bckl,ock->bol", patches, w,
                   precision=jax.lax.Precision.HIGHEST)
    return y + b[None, :, None]


def reference_forward(params, x):
    h = x[:, None, :].astype(jnp.float32)                        # (B, 1, 256)
    for i in range(len(DISC_CONV_FILTER_COUNTS)):
        bn = params["conv_bn"][i]
        s = bn["gamma"] / jnp.sqrt(bn["var"] + BN_EPS)
        t = bn["beta"] - bn["mean"] * s
        h = h * s[None, :, None] + t[None, :, None]              # BN (eval)
        h = _ref_conv1d(h, params["conv"][i]["w"], params["conv"][i]["b"],
                        DISC_CONV_STRIDES[i], (DISC_CONV_KERNEL_SIZES[i] - 1) // 2)
        h = jnp.where(h > 0, h, LEAKY_SLOPE * h)
    h = h.reshape(h.shape[0], -1)                                # (B, 64); L=1
    for j in range(len(params["dense"])):
        bn = params["dense_bn"][j]
        s = bn["gamma"] / jnp.sqrt(bn["var"] + BN_EPS)
        t = bn["beta"] - bn["mean"] * s
        h = h * s[None, :] + t[None, :]
        h = jnp.dot(h, params["dense"][j]["w"].T,
                    precision=jax.lax.Precision.HIGHEST) + params["dense"][j]["b"][None, :]
        if j < len(params["dense"]) - 1:
            h = jnp.where(h > 0, h, LEAKY_SLOPE * h)
        else:
            h = jax.nn.sigmoid(h)
    return h


# ----------------------------------------------------------------------------
if __name__ == "__main__":
    key = jax.random.PRNGKey(0)
    key, kx, kp = jax.random.split(key, 3)

    params = init_params(kp)
    prepared = prepare_params(params)     # one-time host-side folding (bf16 weights)

    def make_forward(single_buffer_weights):
        return jax.jit(functools.partial(
            discriminator_audio_forward,
            single_buffer_weights=single_buffer_weights))

    fwd_buffered = make_forward(True)     # pl.Buffered(1) on weights (preferred)
    fwd_default = make_forward(False)     # fallback: default double buffering

    def run(x):
        try:
            return jax.block_until_ready(fwd_buffered(prepared, x))
        except Exception:
            # pipeline_mode=pl.Buffered(1) not supported by this JAX build.
            return jax.block_until_ready(fwd_default(prepared, x))

    # ---- small batch (single grid step) -------------------------------------
    B = 4
    x_f32 = jax.random.normal(kx, (B, AUDIO_WINDOW_LENGTH), jnp.float32)
    x_bf16 = x_f32.astype(jnp.bfloat16)   # [feedback] bf16 input stream
    y = run(x_bf16)

    assert y.shape == (B, 1), y.shape
    assert y.dtype == jnp.float32
    assert bool(jnp.all(jnp.isfinite(y)))
    # approx EUP reciprocal may overshoot the open (0,1) sigmoid range by ~1e-4.
    assert bool(jnp.all((y >= -1e-3) & (y <= 1.0 + 1e-3)))

    y_ref = reference_forward(params, x_f32)
    assert bool(jnp.max(jnp.abs(y - y_ref)) < 5e-2), (y, y_ref)

    # ---- larger batch: exercises the multi-step "parallel" grid (v7x 2 TCs) --
    B2 = 32
    key, kx2 = jax.random.split(key)
    x2_f32 = jax.random.normal(kx2, (B2, AUDIO_WINDOW_LENGTH), jnp.float32)
    y2 = run(x2_f32.astype(jnp.bfloat16))
    y2_ref = reference_forward(params, x2_f32)
    assert y2.shape == (B2, 1)
    assert bool(jnp.all(jnp.isfinite(y2)))
    assert bool(jnp.max(jnp.abs(y2 - y2_ref)) < 5e-2)

    print("KERNEL_OK")
</pallas_src>

<mosaic_0001>
module attributes {stable_mosaic.version = 11 : i64} {
  func.func @_disc_audio_kernel(%arg0: i32, %arg1: memref<4x256xbf16, #tpu.memory_space<vmem>>, %arg2: memref<256x512xbf16, #tpu.memory_space<vmem>>, %arg3: memref<1x512xf32, #tpu.memory_space<vmem>>, %arg4: memref<512x256xbf16, #tpu.memory_space<vmem>>, %arg5: memref<1x256xf32, #tpu.memory_space<vmem>>, %arg6: memref<256x128xbf16, #tpu.memory_space<vmem>>, %arg7: memref<1x128xf32, #tpu.memory_space<vmem>>, %arg8: memref<128x64xbf16, #tpu.memory_space<vmem>>, %arg9: memref<1x64xf32, #tpu.memory_space<vmem>>, %arg10: memref<64x32xbf16, #tpu.memory_space<vmem>>, %arg11: memref<1x32xf32, #tpu.memory_space<vmem>>, %arg12: memref<32x1xbf16, #tpu.memory_space<vmem>>, %arg13: memref<1x1xf32, #tpu.memory_space<vmem>>, %arg14: memref<4x1xf32, #tpu.memory_space<vmem>>) attributes {dimension_semantics = [#tpu.dimension_semantics<parallel>], iteration_bounds = array<i64: 1>, scalar_prefetch = 0 : i64, scratch_operands = 0 : i64, tpu.core_type = #tpu.core_type<tc>, window_params = [{transform_indices = @transform_0, window_bounds = array<i64: 4, 256>}, {pipeline_mode = #tpu.pipeline_mode<synchronous>, transform_indices = @transform_1, window_bounds = array<i64: 256, 512>}, {pipeline_mode = #tpu.pipeline_mode<synchronous>, transform_indices = @transform_2, window_bounds = array<i64: 1, 512>}, {pipeline_mode = #tpu.pipeline_mode<synchronous>, transform_indices = @transform_3, window_bounds = array<i64: 512, 256>}, {pipeline_mode = #tpu.pipeline_mode<synchronous>, transform_indices = @transform_4, window_bounds = array<i64: 1, 256>}, {pipeline_mode = #tpu.pipeline_mode<synchronous>, transform_indices = @transform_5, window_bounds = array<i64: 256, 128>}, {pipeline_mode = #tpu.pipeline_mode<synchronous>, transform_indices = @transform_6, window_bounds = array<i64: 1, 128>}, {pipeline_mode = #tpu.pipeline_mode<synchronous>, transform_indices = @transform_7, window_bounds = array<i64: 128, 64>}, {pipeline_mode = #tpu.pipeline_mode<synchronous>, transform_indices = @transform_8, window_bounds = array<i64: 1, 64>}, {pipeline_mode = #tpu.pipeline_mode<synchronous>, transform_indices = @transform_9, window_bounds = array<i64: 64, 32>}, {pipeline_mode = #tpu.pipeline_mode<synchronous>, transform_indices = @transform_10, window_bounds = array<i64: 1, 32>}, {pipeline_mode = #tpu.pipeline_mode<synchronous>, transform_indices = @transform_11, window_bounds = array<i64: 32, 1>}, {pipeline_mode = #tpu.pipeline_mode<synchronous>, transform_indices = @transform_12, window_bounds = array<i64: 1, 1>}, {transform_indices = @transform_13, window_bounds = array<i64: 4, 1>}]} {
    %c0 = arith.constant 0 : index
    %c0_0 = arith.constant 0 : index
    %0 = vector.load %arg1[%c0, %c0_0] : memref<4x256xbf16, #tpu.memory_space<vmem>>, vector<4x256xbf16>
    %c0_1 = arith.constant 0 : index
    %c0_2 = arith.constant 0 : index
    %1 = vector.load %arg2[%c0_1, %c0_2] : memref<256x512xbf16, #tpu.memory_space<vmem>>, vector<256x512xbf16>
    %cst = arith.constant dense<0.000000e+00> : vector<4x512xf32>
    %2 = tpu.matmul %0, %1, %cst {dimension_numbers = #tpu.dot_dimension_numbers<[1], [0], [0], [1], [0, 0, 1, 1], [], []>} : vector<4x256xbf16>, vector<256x512xbf16>, vector<4x512xf32> -> vector<4x512xf32>
    %c0_3 = arith.constant 0 : index
    %c0_4 = arith.constant 0 : index
    %3 = vector.load %arg3[%c0_3, %c0_4] : memref<1x512xf32, #tpu.memory_space<vmem>>, vector<1x512xf32>
    %4 = vector.broadcast %3 : vector<1x512xf32> to vector<4x512xf32>
    %5 = arith.addf %2, %4 : vector<4x512xf32>
    %cst_5 = arith.constant 0.000000e+00 : f32
    %6 = vector.broadcast %cst_5 : f32 to vector<4x512xf32>
    %7 = arith.cmpf ogt, %5, %6 : vector<4x512xf32>
    %cst_6 = arith.constant 0.00999999977 : f32
    %8 = vector.broadcast %cst_6 : f32 to vector<4x512xf32>
    %9 = arith.mulf %8, %5 : vector<4x512xf32>
    %10 = arith.select %7, %5, %9 : vector<4x512xi1>, vector<4x512xf32>
    %11 = arith.truncf %10 : vector<4x512xf32> to vector<4x512xbf16>
    %c0_7 = arith.constant 0 : index
    %c0_8 = arith.constant 0 : index
    %12 = vector.load %arg4[%c0_7, %c0_8] : memref<512x256xbf16, #tpu.memory_space<vmem>>, vector<512x256xbf16>
    %cst_9 = arith.constant dense<0.000000e+00> : vector<4x256xf32>
    %13 = tpu.matmul %11, %12, %cst_9 {dimension_numbers = #tpu.dot_dimension_numbers<[1], [0], [0], [1], [0, 0, 1, 1], [], []>} : vector<4x512xbf16>, vector<512x256xbf16>, vector<4x256xf32> -> vector<4x256xf32>
    %c0_10 = arith.constant 0 : index
    %c0_11 = arith.constant 0 : index
    %14 = vector.load %arg5[%c0_10, %c0_11] : memref<1x256xf32, #tpu.memory_space<vmem>>, vector<1x256xf32>
    %15 = vector.broadcast %14 : vector<1x256xf32> to vector<4x256xf32>
    %16 = arith.addf %13, %15 : vector<4x256xf32>
    %cst_12 = arith.constant 0.000000e+00 : f32
    %17 = vector.broadcast %cst_12 : f32 to vector<4x256xf32>
    %18 = arith.cmpf ogt, %16, %17 : vector<4x256xf32>
    %cst_13 = arith.constant 0.00999999977 : f32
    %19 = vector.broadcast %cst_13 : f32 to vector<4x256xf32>
    %20 = arith.mulf %19, %16 : vector<4x256xf32>
    %21 = arith.select %18, %16, %20 : vector<4x256xi1>, vector<4x256xf32>
    %22 = arith.truncf %21 : vector<4x256xf32> to vector<4x256xbf16>
    %c0_14 = arith.constant 0 : index
    %c0_15 = arith.constant 0 : index
    %23 = vector.load %arg6[%c0_14, %c0_15] : memref<256x128xbf16, #tpu.memory_space<vmem>>, vector<256x128xbf16>
    %cst_16 = arith.constant dense<0.000000e+00> : vector<4x128xf32>
    %24 = tpu.matmul %22, %23, %cst_16 {dimension_numbers = #tpu.dot_dimension_numbers<[1], [0], [0], [1], [0, 0, 1, 1], [], []>} : vector<4x256xbf16>, vector<256x128xbf16>, vector<4x128xf32> -> vector<4x128xf32>
    %c0_17 = arith.constant 0 : index
    %c0_18 = arith.constant 0 : index
    %25 = vector.load %arg7[%c0_17, %c0_18] : memref<1x128xf32, #tpu.memory_space<vmem>>, vector<1x128xf32>
    %26 = vector.broadcast %25 : vector<1x128xf32> to vector<4x128xf32>
    %27 = arith.addf %24, %26 : vector<4x128xf32>
    %cst_19 = arith.constant 0.000000e+00 : f32
    %28 = vector.broadcast %cst_19 : f32 to vector<4x128xf32>
    %29 = arith.cmpf ogt, %27, %28 : vector<4x128xf32>
    %cst_20 = arith.constant 0.00999999977 : f32
    %30 = vector.broadcast %cst_20 : f32 to vector<4x128xf32>
    %31 = arith.mulf %30, %27 : vector<4x128xf32>
    %32 = arith.select %29, %27, %31 : vector<4x128xi1>, vector<4x128xf32>
    %33 = arith.truncf %32 : vector<4x128xf32> to vector<4x128xbf16>
    %c0_21 = arith.constant 0 : index
    %c0_22 = arith.constant 0 : index
    %34 = vector.load %arg8[%c0_21, %c0_22] : memref<128x64xbf16, #tpu.memory_space<vmem>>, vector<128x64xbf16>
    %cst_23 = arith.constant dense<0.000000e+00> : vector<4x64xf32>
    %35 = tpu.matmul %33, %34, %cst_23 {dimension_numbers = #tpu.dot_dimension_numbers<[1], [0], [0], [1], [0, 0, 1, 1], [], []>} : vector<4x128xbf16>, vector<128x64xbf16>, vector<4x64xf32> -> vector<4x64xf32>
    %c0_24 = arith.constant 0 : index
    %c0_25 = arith.constant 0 : index
    %36 = vector.load %arg9[%c0_24, %c0_25] : memref<1x64xf32, #tpu.memory_space<vmem>>, vector<1x64xf32>
    %37 = vector.broadcast %36 : vector<1x64xf32> to vector<4x64xf32>
    %38 = arith.addf %35, %37 : vector<4x64xf32>
    %cst_26 = arith.constant 0.000000e+00 : f32
    %39 = vector.broadcast %cst_26 : f32 to vector<4x64xf32>
    %40 = arith.cmpf ogt, %38, %39 : vector<4x64xf32>
    %cst_27 = arith.constant 0.00999999977 : f32
    %41 = vector.broadcast %cst_27 : f32 to vector<4x64xf32>
    %42 = arith.mulf %41, %38 : vector<4x64xf32>
    %43 = arith.select %40, %38, %42 : vector<4x64xi1>, vector<4x64xf32>
    %44 = arith.truncf %43 : vector<4x64xf32> to vector<4x64xbf16>
    %c0_28 = arith.constant 0 : index
    %c0_29 = arith.constant 0 : index
    %45 = vector.load %arg10[%c0_28, %c0_29] : memref<64x32xbf16, #tpu.memory_space<vmem>>, vector<64x32xbf16>
    %cst_30 = arith.constant dense<0.000000e+00> : vector<4x32xf32>
    %46 = tpu.matmul %44, %45, %cst_30 {dimension_numbers = #tpu.dot_dimension_numbers<[1], [0], [0], [1], [0, 0, 1, 1], [], []>} : vector<4x64xbf16>, vector<64x32xbf16>, vector<4x32xf32> -> vector<4x32xf32>
    %c0_31 = arith.constant 0 : index
    %c0_32 = arith.constant 0 : index
    %47 = vector.load %arg11[%c0_31, %c0_32] : memref<1x32xf32, #tpu.memory_space<vmem>>, vector<1x32xf32>
    %48 = vector.broadcast %47 : vector<1x32xf32> to vector<4x32xf32>
    %49 = arith.addf %46, %48 : vector<4x32xf32>
    %cst_33 = arith.constant 0.000000e+00 : f32
    %50 = vector.broadcast %cst_33 : f32 to vector<4x32xf32>
    %51 = arith.cmpf ogt, %49, %50 : vector<4x32xf32>
    %cst_34 = arith.constant 0.00999999977 : f32
    %52 = vector.broadcast %cst_34 : f32 to vector<4x32xf32>
    %53 = arith.mulf %52, %49 : vector<4x32xf32>
    %54 = arith.select %51, %49, %53 : vector<4x32xi1>, vector<4x32xf32>
    %55 = arith.truncf %54 : vector<4x32xf32> to vector<4x32xbf16>
    %c0_35 = arith.constant 0 : index
    %c0_36 = arith.constant 0 : index
    %56 = vector.load %arg12[%c0_35, %c0_36] : memref<32x1xbf16, #tpu.memory_space<vmem>>, vector<32x1xbf16>
    %cst_37 = arith.constant dense<0.000000e+00> : vector<4x1xf32>
    %57 = tpu.matmul %55, %56, %cst_37 {dimension_numbers = #tpu.dot_dimension_numbers<[1], [0], [0], [1], [0, 0, 1, 1], [], []>} : vector<4x32xbf16>, vector<32x1xbf16>, vector<4x1xf32> -> vector<4x1xf32>
    %c0_38 = arith.constant 0 : index
    %c0_39 = arith.constant 0 : index
    %58 = vector.load %arg13[%c0_38, %c0_39] : memref<1x1xf32, #tpu.memory_space<vmem>>, vector<1x1xf32>
    %59 = vector.broadcast %58 : vector<1x1xf32> to vector<4x1xf32>
    %60 = arith.addf %57, %59 : vector<4x1xf32>
    %cst_40 = arith.constant 0.000000e+00 : f32
    %61 = vector.broadcast %cst_40 : f32 to vector<4x1xf32>
    %62 = arith.subf %61, %60 : vector<4x1xf32>
    %63 = math.exp %62 : vector<4x1xf32>
    %cst_41 = arith.constant 1.000000e+00 : f32
    %64 = vector.broadcast %cst_41 : f32 to vector<4x1xf32>
    %65 = arith.addf %64, %63 : vector<4x1xf32>
    %66 = tpu.reciprocal %65 {approx = true} : vector<4x1xf32> -> vector<4x1xf32>
    %c0_42 = arith.constant 0 : index
    %c0_43 = arith.constant 0 : index
    %67 = vector.load %arg14[%c0_42, %c0_43] : memref<4x1xf32, #tpu.memory_space<vmem>>, vector<4x1xf32>
    tpu.vector_store %arg14[%c0_42, %c0_43], %66 {strides = array<i32>} : memref<4x1xf32, #tpu.memory_space<vmem>>, vector<4x1xf32>,
    return
  }
  func.func @transform_0(%arg0: i32) -> (i32, i32) {
    %c0_i32 = arith.constant 0 : i32
    %c0_i32_0 = arith.constant 0 : i32
    return %arg0, %c0_i32 : i32, i32
  }
  func.func @transform_1(%arg0: i32) -> (i32, i32) {
    %c0_i32 = arith.constant 0 : i32
    %c0_i32_0 = arith.constant 0 : i32
    %c0_i32_1 = arith.constant 0 : i32
    return %c0_i32, %c0_i32_0 : i32, i32
  }
  func.func @transform_2(%arg0: i32) -> (i32, i32) {
    %c0_i32 = arith.constant 0 : i32
    %c0_i32_0 = arith.constant 0 : i32
    %c0_i32_1 = arith.constant 0 : i32
    return %c0_i32, %c0_i32_0 : i32, i32
  }
  func.func @transform_3(%arg0: i32) -> (i32, i32) {
    %c0_i32 = arith.constant 0 : i32
    %c0_i32_0 = arith.constant 0 : i32
    %c0_i32_1 = arith.constant 0 : i32
    return %c0_i32, %c0_i32_0 : i32, i32
  }
  func.func @transform_4(%arg0: i32) -> (i32, i32) {
    %c0_i32 = arith.constant 0 : i32
    %c0_i32_0 = arith.constant 0 : i32
    %c0_i32_1 = arith.constant 0 : i32
    return %c0_i32, %c0_i32_0 : i32, i32
  }
  func.func @transform_5(%arg0: i32) -> (i32, i32) {
    %c0_i32 = arith.constant 0 : i32
    %c0_i32_0 = arith.constant 0 : i32
    %c0_i32_1 = arith.constant 0 : i32
    return %c0_i32, %c0_i32_0 : i32, i32
  }
  func.func @transform_6(%arg0: i32) -> (i32, i32) {
    %c0_i32 = arith.constant 0 : i32
    %c0_i32_0 = arith.constant 0 : i32
    %c0_i32_1 = arith.constant 0 : i32
    return %c0_i32, %c0_i32_0 : i32, i32
  }
  func.func @transform_7(%arg0: i32) -> (i32, i32) {
    %c0_i32 = arith.constant 0 : i32
    %c0_i32_0 = arith.constant 0 : i32
    %c0_i32_1 = arith.constant 0 : i32
    return %c0_i32, %c0_i32_0 : i32, i32
  }
  func.func @transform_8(%arg0: i32) -> (i32, i32) {
    %c0_i32 = arith.constant 0 : i32
    %c0_i32_0 = arith.constant 0 : i32
    %c0_i32_1 = arith.constant 0 : i32
    return %c0_i32, %c0_i32_0 : i32, i32
  }
  func.func @transform_9(%arg0: i32) -> (i32, i32) {
    %c0_i32 = arith.constant 0 : i32
    %c0_i32_0 = arith.constant 0 : i32
    %c0_i32_1 = arith.constant 0 : i32
    return %c0_i32, %c0_i32_0 : i32, i32
  }
  func.func @transform_10(%arg0: i32) -> (i32, i32) {
    %c0_i32 = arith.constant 0 : i32
    %c0_i32_0 = arith.constant 0 : i32
    %c0_i32_1 = arith.constant 0 : i32
    return %c0_i32, %c0_i32_0 : i32, i32
  }
  func.func @transform_11(%arg0: i32) -> (i32, i32) {
    %c0_i32 = arith.constant 0 : i32
    %c0_i32_0 = arith.constant 0 : i32
    %c0_i32_1 = arith.constant 0 : i32
    return %c0_i32, %c0_i32_0 : i32, i32
  }
  func.func @transform_12(%arg0: i32) -> (i32, i32) {
    %c0_i32 = arith.constant 0 : i32
    %c0_i32_0 = arith.constant 0 : i32
    %c0_i32_1 = arith.constant 0 : i32
    return %c0_i32, %c0_i32_0 : i32, i32
  }
  func.func @transform_13(%arg0: i32) -> (i32, i32) {
    %c0_i32 = arith.constant 0 : i32
    %c0_i32_0 = arith.constant 0 : i32
    return %arg0, %c0_i32 : i32, i32
  }
}

module attributes {stable_mosaic.version = 11 : i64} {
  func.func @_disc_audio_kernel(%arg0: i32, %arg1: memref<4x256xbf16, #tpu.memory_space<vmem>>, %arg2: memref<256x512xbf16, #tpu.memory_space<vmem>>, %arg3: memref<1x512xf32, #tpu.memory_space<vmem>>, %arg4: memref<512x256xbf16, #tpu.memory_space<vmem>>, %arg5: memref<1x256xf32, #tpu.memory_space<vmem>>, %arg6: memref<256x128xbf16, #tpu.memory_space<vmem>>, %arg7: memref<1x128xf32, #tpu.memory_space<vmem>>, %arg8: memref<128x64xbf16, #tpu.memory_space<vmem>>, %arg9: memref<1x64xf32, #tpu.memory_space<vmem>>, %arg10: memref<64x32xbf16, #tpu.memory_space<vmem>>, %arg11: memref<1x32xf32, #tpu.memory_space<vmem>>, %arg12: memref<32x1xbf16, #tpu.memory_space<vmem>>, %arg13: memref<1x1xf32, #tpu.memory_space<vmem>>, %arg14: memref<4x1xf32, #tpu.memory_space<vmem>>) attributes {dimension_semantics = [#tpu.dimension_semantics<parallel>], iteration_bounds = array<i64: 1>, scalar_prefetch = 0 : i64, scratch_operands = 0 : i64, tpu.core_type = #tpu.core_type<tc>, window_params = [{transform_indices = @transform_0, window_bounds = array<i64: 4, 256>}, {pipeline_mode = #tpu.pipeline_mode<synchronous>, transform_indices = @transform_1, window_bounds = array<i64: 256, 512>}, {pipeline_mode = #tpu.pipeline_mode<synchronous>, transform_indices = @transform_2, window_bounds = array<i64: 1, 512>}, {pipeline_mode = #tpu.pipeline_mode<synchronous>, transform_indices = @transform_3, window_bounds = array<i64: 512, 256>}, {pipeline_mode = #tpu.pipeline_mode<synchronous>, transform_indices = @transform_4, window_bounds = array<i64: 1, 256>}, {pipeline_mode = #tpu.pipeline_mode<synchronous>, transform_indices = @transform_5, window_bounds = array<i64: 256, 128>}, {pipeline_mode = #tpu.pipeline_mode<synchronous>, transform_indices = @transform_6, window_bounds = array<i64: 1, 128>}, {pipeline_mode = #tpu.pipeline_mode<synchronous>, transform_indices = @transform_7, window_bounds = array<i64: 128, 64>}, {pipeline_mode = #tpu.pipeline_mode<synchronous>, transform_indices = @transform_8, window_bounds = array<i64: 1, 64>}, {pipeline_mode = #tpu.pipeline_mode<synchronous>, transform_indices = @transform_9, window_bounds = array<i64: 64, 32>}, {pipeline_mode = #tpu.pipeline_mode<synchronous>, transform_indices = @transform_10, window_bounds = array<i64: 1, 32>}, {pipeline_mode = #tpu.pipeline_mode<synchronous>, transform_indices = @transform_11, window_bounds = array<i64: 32, 1>}, {pipeline_mode = #tpu.pipeline_mode<synchronous>, transform_indices = @transform_12, window_bounds = array<i64: 1, 1>}, {transform_indices = @transform_13, window_bounds = array<i64: 4, 1>}]} {
    %c0 = arith.constant 0 : index
    %c0_0 = arith.constant 0 : index
    %0 = vector.load %arg1[%c0, %c0_0] : memref<4x256xbf16, #tpu.memory_space<vmem>>, vector<4x256xbf16>
    %c0_1 = arith.constant 0 : index
    %c0_2 = arith.constant 0 : index
    %1 = vector.load %arg2[%c0_1, %c0_2] : memref<256x512xbf16, #tpu.memory_space<vmem>>, vector<256x512xbf16>
    %cst = arith.constant dense<0.000000e+00> : vector<4x512xf32>
    %2 = tpu.matmul %0, %1, %cst {dimension_numbers = #tpu.dot_dimension_numbers<[1], [0], [0], [1], [0, 0, 1, 1], [], []>} : vector<4x256xbf16>, vector<256x512xbf16>, vector<4x512xf32> -> vector<4x512xf32>
    %c0_3 = arith.constant 0 : index
    %c0_4 = arith.constant 0 : index
    %3 = vector.load %arg3[%c0_3, %c0_4] : memref<1x512xf32, #tpu.memory_space<vmem>>, vector<1x512xf32>
    %4 = vector.broadcast %3 : vector<1x512xf32> to vector<4x512xf32>
    %5 = arith.addf %2, %4 : vector<4x512xf32>
    %cst_5 = arith.constant 0.000000e+00 : f32
    %6 = vector.broadcast %cst_5 : f32 to vector<4x512xf32>
    %7 = arith.cmpf ogt, %5, %6 : vector<4x512xf32>
    %cst_6 = arith.constant 0.00999999977 : f32
    %8 = vector.broadcast %cst_6 : f32 to vector<4x512xf32>
    %9 = arith.mulf %8, %5 : vector<4x512xf32>
    %10 = arith.select %7, %5, %9 : vector<4x512xi1>, vector<4x512xf32>
    %11 = arith.truncf %10 : vector<4x512xf32> to vector<4x512xbf16>
    %c0_7 = arith.constant 0 : index
    %c0_8 = arith.constant 0 : index
    %12 = vector.load %arg4[%c0_7, %c0_8] : memref<512x256xbf16, #tpu.memory_space<vmem>>, vector<512x256xbf16>
    %cst_9 = arith.constant dense<0.000000e+00> : vector<4x256xf32>
    %13 = tpu.matmul %11, %12, %cst_9 {dimension_numbers = #tpu.dot_dimension_numbers<[1], [0], [0], [1], [0, 0, 1, 1], [], []>} : vector<4x512xbf16>, vector<512x256xbf16>, vector<4x256xf32> -> vector<4x256xf32>
    %c0_10 = arith.constant 0 : index
    %c0_11 = arith.constant 0 : index
    %14 = vector.load %arg5[%c0_10, %c0_11] : memref<1x256xf32, #tpu.memory_space<vmem>>, vector<1x256xf32>
    %15 = vector.broadcast %14 : vector<1x256xf32> to vector<4x256xf32>
    %16 = arith.addf %13, %15 : vector<4x256xf32>
    %cst_12 = arith.constant 0.000000e+00 : f32
    %17 = vector.broadcast %cst_12 : f32 to vector<4x256xf32>
    %18 = arith.cmpf ogt, %16, %17 : vector<4x256xf32>
    %cst_13 = arith.constant 0.00999999977 : f32
    %19 = vector.broadcast %cst_13 : f32 to vector<4x256xf32>
    %20 = arith.mulf %19, %16 : vector<4x256xf32>
    %21 = arith.select %18, %16, %20 : vector<4x256xi1>, vector<4x256xf32>
    %22 = arith.truncf %21 : vector<4x256xf32> to vector<4x256xbf16>
    %c0_14 = arith.constant 0 : index
    %c0_15 = arith.constant 0 : index
    %23 = vector.load %arg6[%c0_14, %c0_15] : memref<256x128xbf16, #tpu.memory_space<vmem>>, vector<256x128xbf16>
    %cst_16 = arith.constant dense<0.000000e+00> : vector<4x128xf32>
    %24 = tpu.matmul %22, %23, %cst_16 {dimension_numbers = #tpu.dot_dimension_numbers<[1], [0], [0], [1], [0, 0, 1, 1], [], []>} : vector<4x256xbf16>, vector<256x128xbf16>, vector<4x128xf32> -> vector<4x128xf32>
    %c0_17 = arith.constant 0 : index
    %c0_18 = arith.constant 0 : index
    %25 = vector.load %arg7[%c0_17, %c0_18] : memref<1x128xf32, #tpu.memory_space<vmem>>, vector<1x128xf32>
    %26 = vector.broadcast %25 : vector<1x128xf32> to vector<4x128xf32>
    %27 = arith.addf %24, %26 : vector<4x128xf32>
    %cst_19 = arith.constant 0.000000e+00 : f32
    %28 = vector.broadcast %cst_19 : f32 to vector<4x128xf32>
    %29 = arith.cmpf ogt, %27, %28 : vector<4x128xf32>
    %cst_20 = arith.constant 0.00999999977 : f32
    %30 = vector.broadcast %cst_20 : f32 to vector<4x128xf32>
    %31 = arith.mulf %30, %27 : vector<4x128xf32>
    %32 = arith.select %29, %27, %31 : vector<4x128xi1>, vector<4x128xf32>
    %33 = arith.truncf %32 : vector<4x128xf32> to vector<4x128xbf16>
    %c0_21 = arith.constant 0 : index
    %c0_22 = arith.constant 0 : index
    %34 = vector.load %arg8[%c0_21, %c0_22] : memref<128x64xbf16, #tpu.memory_space<vmem>>, vector<128x64xbf16>
    %cst_23 = arith.constant dense<0.000000e+00> : vector<4x64xf32>
    %35 = tpu.matmul %33, %34, %cst_23 {dimension_numbers = #tpu.dot_dimension_numbers<[1], [0], [0], [1], [0, 0, 1, 1], [], []>} : vector<4x128xbf16>, vector<128x64xbf16>, vector<4x64xf32> -> vector<4x64xf32>
    %c0_24 = arith.constant 0 : index
    %c0_25 = arith.constant 0 : index
    %36 = vector.load %arg9[%c0_24, %c0_25] : memref<1x64xf32, #tpu.memory_space<vmem>>, vector<1x64xf32>
    %37 = vector.broadcast %36 : vector<1x64xf32> to vector<4x64xf32>
    %38 = arith.addf %35, %37 : vector<4x64xf32>
    %cst_26 = arith.constant 0.000000e+00 : f32
    %39 = vector.broadcast %cst_26 : f32 to vector<4x64xf32>
    %40 = arith.cmpf ogt, %38, %39 : vector<4x64xf32>
    %cst_27 = arith.constant 0.00999999977 : f32
    %41 = vector.broadcast %cst_27 : f32 to vector<4x64xf32>
    %42 = arith.mulf %41, %38 : vector<4x64xf32>
    %43 = arith.select %40, %38, %42 : vector<4x64xi1>, vector<4x64xf32>
    %44 = arith.truncf %43 : vector<4x64xf32> to vector<4x64xbf16>
    %c0_28 = arith.constant 0 : index
    %c0_29 = arith.constant 0 : index
    %45 = vector.load %arg10[%c0_28, %c0_29] : memref<64x32xbf16, #tpu.memory_space<vmem>>, vector<64x32xbf16>
    %cst_30 = arith.constant dense<0.000000e+00> : vector<4x32xf32>
    %46 = tpu.matmul %44, %45, %cst_30 {dimension_numbers = #tpu.dot_dimension_numbers<[1], [0], [0], [1], [0, 0, 1, 1], [], []>} : vector<4x64xbf16>, vector<64x32xbf16>, vector<4x32xf32> -> vector<4x32xf32>
    %c0_31 = arith.constant 0 : index
    %c0_32 = arith.constant 0 : index
    %47 = vector.load %arg11[%c0_31, %c0_32] : memref<1x32xf32, #tpu.memory_space<vmem>>, vector<1x32xf32>
    %48 = vector.broadcast %47 : vector<1x32xf32> to vector<4x32xf32>
    %49 = arith.addf %46, %48 : vector<4x32xf32>
    %cst_33 = arith.constant 0.000000e+00 : f32
    %50 = vector.broadcast %cst_33 : f32 to vector<4x32xf32>
    %51 = arith.cmpf ogt, %49, %50 : vector<4x32xf32>
    %cst_34 = arith.constant 0.00999999977 : f32
    %52 = vector.broadcast %cst_34 : f32 to vector<4x32xf32>
    %53 = arith.mulf %52, %49 : vector<4x32xf32>
    %54 = arith.select %51, %49, %53 : vector<4x32xi1>, vector<4x32xf32>
    %55 = arith.truncf %54 : vector<4x32xf32> to vector<4x32xbf16>
    %c0_35 = arith.constant 0 : index
    %c0_36 = arith.constant 0 : index
    %56 = vector.load %arg12[%c0_35, %c0_36] : memref<32x1xbf16, #tpu.memory_space<vmem>>, vector<32x1xbf16>
    %cst_37 = arith.constant dense<0.000000e+00> : vector<4x1xf32>
    %57 = tpu.matmul %55, %56, %cst_37 {dimension_numbers = #tpu.dot_dimension_numbers<[1], [0], [0], [1], [0, 0, 1, 1], [], []>} : vector<4x32xbf16>, vector<32x1xbf16>, vector<4x1xf32> -> vector<4x1xf32>
    %c0_38 = arith.constant 0 : index
    %c0_39 = arith.constant 0 : index
    %58 = vector.load %arg13[%c0_38, %c0_39] : memref<1x1xf32, #tpu.memory_space<vmem>>, vector<1x1xf32>
    %59 = vector.broadcast %58 : vector<1x1xf32> to vector<4x1xf32>
    %60 = arith.addf %57, %59 : vector<4x1xf32>
    %cst_40 = arith.constant 0.000000e+00 : f32
    %61 = vector.broadcast %cst_40 : f32 to vector<4x1xf32>
    %62 = arith.subf %61, %60 : vector<4x1xf32>
    %63 = math.exp %62 : vector<4x1xf32>
    %cst_41 = arith.constant 1.000000e+00 : f32
    %64 = vector.broadcast %cst_41 : f32 to vector<4x1xf32>
    %65 = arith.addf %64, %63 : vector<4x1xf32>
    %66 = tpu.reciprocal %65 {approx = true} : vector<4x1xf32> -> vector<4x1xf32>
    %c0_42 = arith.constant 0 : index
    %c0_43 = arith.constant 0 : index
    %67 = vector.load %arg14[%c0_42, %c0_43] : memref<4x1xf32, #tpu.memory_space<vmem>>, vector<4x1xf32>
    tpu.vector_store %arg14[%c0_42, %c0_43], %66 {strides = array<i32>} : memref<4x1xf32, #tpu.memory_space<vmem>>, vector<4x1xf32>,
    return
  }
  func.func @transform_0(%arg0: i32) -> (i32, i32) {
    %c0_i32 = arith.constant 0 : i32
    %c0_i32_0 = arith.constant 0 : i32
    return %arg0, %c0_i32 : i32, i32
  }
  func.func @transform_1(%arg0: i32) -> (i32, i32) {
    %c0_i32 = arith.constant 0 : i32
    %c0_i32_0 = arith.constant 0 : i32
    %c0_i32_1 = arith.constant 0 : i32
    return %c0_i32, %c0_i32_0 : i32, i32
  }
  func.func @transform_2(%arg0: i32) -> (i32, i32) {
    %c0_i32 = arith.constant 0 : i32
    %c0_i32_0 = arith.constant 0 : i32
    %c0_i32_1 = arith.constant 0 : i32
    return %c0_i32, %c0_i32_0 : i32, i32
  }
  func.func @transform_3(%arg0: i32) -> (i32, i32) {
    %c0_i32 = arith.constant 0 : i32
    %c0_i32_0 = arith.constant 0 : i32
    %c0_i32_1 = arith.constant 0 : i32
    return %c0_i32, %c0_i32_0 : i32, i32
  }
  func.func @transform_4(%arg0: i32) -> (i32, i32) {
    %c0_i32 = arith.constant 0 : i32
    %c0_i32_0 = arith.constant 0 : i32
    %c0_i32_1 = arith.constant 0 : i32
    return %c0_i32, %c0_i32_0 : i32, i32
  }
  func.func @transform_5(%arg0: i32) -> (i32, i32) {
    %c0_i32 = arith.constant 0 : i32
    %c0_i32_0 = arith.constant 0 : i32
    %c0_i32_1 = arith.constant 0 : i32
    return %c0_i32, %c0_i32_0 : i32, i32
  }
  func.func @transform_6(%arg0: i32) -> (i32, i32) {
    %c0_i32 = arith.constant 0 : i32
    %c0_i32_0 = arith.constant 0 : i32
    %c0_i32_1 = arith.constant 0 : i32
    return %c0_i32, %c0_i32_0 : i32, i32
  }
  func.func @transform_7(%arg0: i32) -> (i32, i32) {
    %c0_i32 = arith.constant 0 : i32
    %c0_i32_0 = arith.constant 0 : i32
    %c0_i32_1 = arith.constant 0 : i32
    return %c0_i32, %c0_i32_0 : i32, i32
  }
  func.func @transform_8(%arg0: i32) -> (i32, i32) {
    %c0_i32 = arith.constant 0 : i32
    %c0_i32_0 = arith.constant 0 : i32
    %c0_i32_1 = arith.constant 0 : i32
    return %c0_i32, %c0_i32_0 : i32, i32
  }
  func.func @transform_9(%arg0: i32) -> (i32, i32) {
    %c0_i32 = arith.constant 0 : i32
    %c0_i32_0 = arith.constant 0 : i32
    %c0_i32_1 = arith.constant 0 : i32
    return %c0_i32, %c0_i32_0 : i32, i32
  }
  func.func @transform_10(%arg0: i32) -> (i32, i32) {
    %c0_i32 = arith.constant 0 : i32
    %c0_i32_0 = arith.constant 0 : i32
    %c0_i32_1 = arith.constant 0 : i32
    return %c0_i32, %c0_i32_0 : i32, i32
  }
  func.func @transform_11(%arg0: i32) -> (i32, i32) {
    %c0_i32 = arith.constant 0 : i32
    %c0_i32_0 = arith.constant 0 : i32
    %c0_i32_1 = arith.constant 0 : i32
    return %c0_i32, %c0_i32_0 : i32, i32
  }
  func.func @transform_12(%arg0: i32) -> (i32, i32) {
    %c0_i32 = arith.constant 0 : i32
    %c0_i32_0 = arith.constant 0 : i32
    %c0_i32_1 = arith.constant 0 : i32
    return %c0_i32, %c0_i32_0 : i32, i32
  }
  func.func @transform_13(%arg0: i32) -> (i32, i32) {
    %c0_i32 = arith.constant 0 : i32
    %c0_i32_0 = arith.constant 0 : i32
    return %arg0, %c0_i32 : i32, i32
  }
}

</mosaic_0001>

<llo_original>
// kernel: discriminator_audio_forward.1
$region0: #{discriminator_audio_forward.1}
  #allocation0 [shape = 'u32[]', space=smem, size = 0x4, offset = 0x4, fixed_abs, tag = 'smem constant byte address 0x4 - core index']
  #allocation1 [shape = 'u32[144,128]{1,0:T(1,128)}', space=vmem, size = 0x12000, scoped, tag = 'internal scratch']
  #allocation2 [shape = 'f32[1,1]{1,0:T(1,128)S(1)}', space=vmem, size = 0x200, scoped, tag = 'scoped memory for discriminator_audio_forward.1']
  %s0 = inlined_call_operand.vmem [shape: bf16[4,256], index: 0, kind: input, shape index: {}]
  %s1 = inlined_call_operand.hbm [shape: bf16[256,512], index: 1, kind: input, shape index: {}]
  %s2 = inlined_call_operand.vmem [shape: f32[1,512], index: 2, kind: input, shape index: {}]
  %s3 = inlined_call_operand.hbm [shape: bf16[512,256], index: 3, kind: input, shape index: {}]
  %s4 = inlined_call_operand.vmem [shape: f32[1,256], index: 4, kind: input, shape index: {}]
  %s5 = inlined_call_operand.vmem [shape: bf16[256,128], index: 5, kind: input, shape index: {}]
  %s6 = inlined_call_operand.vmem [shape: f32[1,128], index: 6, kind: input, shape index: {}]
  %s7 = inlined_call_operand.vmem [shape: bf16[128,64], index: 7, kind: input, shape index: {}]
  %s8 = inlined_call_operand.vmem [shape: f32[1,64], index: 8, kind: input, shape index: {}]
  %s9 = inlined_call_operand.vmem [shape: bf16[64,32], index: 9, kind: input, shape index: {}]
  %s10 = inlined_call_operand.vmem [shape: f32[1,32], index: 10, kind: input, shape index: {}]
  %s11 = inlined_call_operand.vmem [shape: bf16[32,1], index: 11, kind: input, shape index: {}]
  %s12 = inlined_call_operand.<no memory space> [shape: f32[1,1], index: 12, kind: input, shape index: {}]
  %s13 = inlined_call_operand.vmem [shape: f32[4,1], index: 13, kind: output, shape index: {}]
  %s14 = sld [smem:[#allocation0]]
  $region70: #{discriminator_audio_forward.1} parent=0
    _
  %s16 = ssub.s32 1, %s14
  %s17 = scalar_select 0, %s16, %s14
  %v18 = vstv %s12
  %19 = vst [vmem:[#allocation2] sm:$0x1] %v18
  $region1: #{discriminator_audio_forward.1} parent=0
    #allocation3 [shape = 'u8[262144]{0}', space=vmem, size = 0x40000, scoped, tag = 'input window, operand 1, single buffered']
    #allocation4 [shape = 's32[1]{0}', space=sflag, size = 0x4, scoped, tag = 'scoped memory for discriminator_audio_forward.1']
    #allocation5 [shape = 'u8[262144]{0}', space=vmem, size = 0x40000, scoped, tag = 'input window, operand 3, single buffered']
    #allocation6 [shape = 's32[1]{0}', space=sflag, size = 0x4, scoped, tag = 'scoped memory for discriminator_audio_forward.1']
    %20 = vsyncpa [#allocation4], 0
    %21 = vsyncpa [#allocation6], 0
    // Predicated region
    $region2: #{discriminator_audio_forward.1} parent=1 // pred_check
      _
    $region3: #{discriminator_audio_forward.1} parent=1 // pred_check_branch
      %23 = sbr.rel (0) target = $region5
    $region4: #{discriminator_audio_forward.1} parent=1 // pred_region
      _
    $region5: #{discriminator_audio_forward.1} parent=1 // pred_fallthru
      _
    // Predicated region
    $region6: #{discriminator_audio_forward.1} parent=1 // pred_check
      _
    $region7: #{discriminator_audio_forward.1} parent=1 // pred_check_branch
      %25 = sbr.rel (0) target = $region9
    $region8: #{discriminator_audio_forward.1} parent=1 // pred_region
      %s27 = ssub.s32 8192, 8192
      %28 = vsyncadd [#allocation4], %s27
      %s29 = sshll.u32 [#allocation3], 4
      %s30 = int_to_ptr.vmem [resolvable:$true] %s29
      %35 = dma.hbm_to_vmem [thread:$0]  %s1, 8192, %s30, [#allocation4], 256, 256, 16
    $region9: #{discriminator_audio_forward.1} parent=1 // pred_fallthru
      _
    // Predicated region
    $region10: #{discriminator_audio_forward.1} parent=1 // pred_check
      _
    $region11: #{discriminator_audio_forward.1} parent=1 // pred_check_branch
      %37 = sbr.rel (0) target = $region13
    $region12: #{discriminator_audio_forward.1} parent=1 // pred_region
      _
    $region13: #{discriminator_audio_forward.1} parent=1 // pred_fallthru
      _
    // Predicated region
    $region14: #{discriminator_audio_forward.1} parent=1 // pred_check
      _
    $region15: #{discriminator_audio_forward.1} parent=1 // pred_check_branch
      %39 = sbr.rel (0) target = $region17
    $region16: #{discriminator_audio_forward.1} parent=1 // pred_region
      %s41 = ssub.s32 8192, 8192
      %42 = vsyncadd [#allocation6], %s41
      %s43 = sshll.u32 [#allocation5], 4
      %s44 = int_to_ptr.vmem [resolvable:$true] %s43
      %49 = dma.hbm_to_vmem [thread:$0]  %s3, 8192, %s44, [#allocation6], 128, 128, 8
    $region17: #{discriminator_audio_forward.1} parent=1 // pred_fallthru
      _
    // Predicated region
    $region18: #{discriminator_audio_forward.1} parent=1 // pred_check
      _
    $region19: #{discriminator_audio_forward.1} parent=1 // pred_check_branch
      %51 = sbr.rel (0) target = $region21
    $region20: #{discriminator_audio_forward.1} parent=1 // pred_region
      _
    $region21: #{discriminator_audio_forward.1} parent=1 // pred_fallthru
      _
    // Predicated region
    $region22: #{discriminator_audio_forward.1} parent=1 // pred_check
      _
    $region23: #{discriminator_audio_forward.1} parent=1 // pred_check_branch
      %53 = sbr.rel (0) target = $region25
    $region24: #{discriminator_audio_forward.1} parent=1 // pred_region
      _
    $region25: #{discriminator_audio_forward.1} parent=1 // pred_fallthru
      _
    // Predicated region
    $region26: #{discriminator_audio_forward.1} parent=1 // pred_check
      _
    $region27: #{discriminator_audio_forward.1} parent=1 // pred_check_branch
      %55 = sbr.rel (0) target = $region29
    $region28: #{discriminator_audio_forward.1} parent=1 // pred_region
      _
    $region29: #{discriminator_audio_forward.1} parent=1 // pred_fallthru
      _
    // Predicated region
    $region30: #{discriminator_audio_forward.1} parent=1 // pred_check
      _
    $region31: #{discriminator_audio_forward.1} parent=1 // pred_check_branch
      %57 = sbr.rel (0) target = $region33
    $region32: #{discriminator_audio_forward.1} parent=1 // pred_region
      _
    $region33: #{discriminator_audio_forward.1} parent=1 // pred_fallthru
      _
    // Predicated region
    $region34: #{discriminator_audio_forward.1} parent=1 // pred_check
      _
    $region35: #{discriminator_audio_forward.1} parent=1 // pred_check_branch
      %59 = sbr.rel (0) target = $region37
    $region36: #{discriminator_audio_forward.1} parent=1 // pred_region
      _
    $region37: #{discriminator_audio_forward.1} parent=1 // pred_fallthru
      _
    // Predicated region
    $region38: #{discriminator_audio_forward.1} parent=1 // pred_check
      _
    $region39: #{discriminator_audio_forward.1} parent=1 // pred_check_branch
      %61 = sbr.rel (0) target = $region41
    $region40: #{discriminator_audio_forward.1} parent=1 // pred_region
      _
    $region41: #{discriminator_audio_forward.1} parent=1 // pred_fallthru
      _
    // Predicated region
    $region42: #{discriminator_audio_forward.1} parent=1 // pred_check
      _
    $region43: #{discriminator_audio_forward.1} parent=1 // pred_check_branch
      %63 = sbr.rel (0) target = $region45
    $region44: #{discriminator_audio_forward.1} parent=1 // pred_region
      _
    $region45: #{discriminator_audio_forward.1} parent=1 // pred_fallthru
      _
    // Predicated region
    $region46: #{discriminator_audio_forward.1} parent=1 // pred_check
      _
    $region47: #{discriminator_audio_forward.1} parent=1 // pred_check_branch
      %65 = sbr.rel (0) target = $region49
    $region48: #{discriminator_audio_forward.1} parent=1 // pred_region
      _
    $region49: #{discriminator_audio_forward.1} parent=1 // pred_fallthru
      _
    // Predicated region
    $region50: #{discriminator_audio_forward.1} parent=1 // pred_check
      _
    $region51: #{discriminator_audio_forward.1} parent=1 // pred_check_branch
      %67 = sbr.rel (0) target = $region53
    $region52: #{discriminator_audio_forward.1} parent=1 // pred_region
      _
    $region53: #{discriminator_audio_forward.1} parent=1 // pred_fallthru
      _
    // Predicated region
    $region54: #{discriminator_audio_forward.1} parent=1 // pred_check
      _
    $region55: #{discriminator_audio_forward.1} parent=1 // pred_check_branch
      %69 = sbr.rel (0) target = $region57
    $region56: #{discriminator_audio_forward.1} parent=1 // pred_region
      %70 = dma.done [#allocation4], 8192
    $region57: #{discriminator_audio_forward.1} parent=1 // pred_fallthru
      _
    // Predicated region
    $region58: #{discriminator_audio_forward.1} parent=1 // pred_check
      _
    $region59: #{discriminator_audio_forward.1} parent=1 // pred_check_branch
      %72 = sbr.rel (0) target = $region61
    $region60: #{discriminator_audio_forward.1} parent=1 // pred_region
      %73 = dma.done [#allocation6], 8192
    $region61: #{discriminator_audio_forward.1} parent=1 // pred_fallthru
      _
    %v75 = vld [vmem:[%s0] sm:$0xf]
    %v76 = vld [vmem:[#allocation3] sm:$0xff]
    %v77 = vld [vmem:[#allocation3 + $0x8] sm:$0xff]
    %v78 = vld [vmem:[#allocation3 + $0x10] sm:$0xff]
    %v79 = vld [vmem:[#allocation3 + $0x18] sm:$0xff]
    %v80 = vld [vmem:[#allocation3 + $0x20] sm:$0xff]
    %v81 = vld [vmem:[#allocation3 + $0x28] sm:$0xff]
    %v82 = vld [vmem:[#allocation3 + $0x30] sm:$0xff]
    %v83 = vld [vmem:[#allocation3 + $0x38] sm:$0xff]
    %v84 = vld [vmem:[#allocation3 + $0x40] sm:$0xff]
    %v85 = vld [vmem:[#allocation3 + $0x48] sm:$0xff]
    %v86 = vld [vmem:[#allocation3 + $0x50] sm:$0xff]
    %v87 = vld [vmem:[#allocation3 + $0x58] sm:$0xff]
    %v88 = vld [vmem:[#allocation3 + $0x60] sm:$0xff]
    %v89 = vld [vmem:[#allocation3 + $0x68] sm:$0xff]
    %v90 = vld [vmem:[#allocation3 + $0x70] sm:$0xff]
    %v91 = vld [vmem:[#allocation3 + $0x78] sm:$0xff]
    %v92 = vld [vmem:[#allocation3 + $0x80] sm:$0xff]
    %v93 = vld [vmem:[#allocation3 + $0x88] sm:$0xff]
    %v94 = vld [vmem:[#allocation3 + $0x90] sm:$0xff]
    %v95 = vld [vmem:[#allocation3 + $0x98] sm:$0xff]
    %v96 = vld [vmem:[#allocation3 + $0xa0] sm:$0xff]
    %v97 = vld [vmem:[#allocation3 + $0xa8] sm:$0xff]
    %v98 = vld [vmem:[#allocation3 + $0xb0] sm:$0xff]
    %v99 = vld [vmem:[#allocation3 + $0xb8] sm:$0xff]
    %v100 = vld [vmem:[#allocation3 + $0xc0] sm:$0xff]
    %v101 = vld [vmem:[#allocation3 + $0xc8] sm:$0xff]
    %v102 = vld [vmem:[#allocation3 + $0xd0] sm:$0xff]
    %v103 = vld [vmem:[#allocation3 + $0xd8] sm:$0xff]
    %v104 = vld [vmem:[#allocation3 + $0xe0] sm:$0xff]
    %v105 = vld [vmem:[#allocation3 + $0xe8] sm:$0xff]
    %v106 = vld [vmem:[#allocation3 + $0xf0] sm:$0xff]
    %v107 = vld [vmem:[#allocation3 + $0xf8] sm:$0xff]
    %v108 = vld [vmem:[#allocation3 + $0x100] sm:$0xff]
    %v109 = vld [vmem:[#allocation3 + $0x108] sm:$0xff]
    %v110 = vld [vmem:[#allocation3 + $0x110] sm:$0xff]
    %v111 = vld [vmem:[#allocation3 + $0x118] sm:$0xff]
    %v112 = vld [vmem:[#allocation3 + $0x120] sm:$0xff]
    %v113 = vld [vmem:[#allocation3 + $0x128] sm:$0xff]
    %v114 = vld [vmem:[#allocation3 + $0x130] sm:$0xff]
    %v115 = vld [vmem:[#allocation3 + $0x138] sm:$0xff]
    %v116 = vld [vmem:[#allocation3 + $0x140] sm:$0xff]
    %v117 = vld [vmem:[#allocation3 + $0x148] sm:$0xff]
    %v118 = vld [vmem:[#allocation3 + $0x150] sm:$0xff]
    %v119 = vld [vmem:[#allocation3 + $0x158] sm:$0xff]
    %v120 = vld [vmem:[#allocation3 + $0x160] sm:$0xff]
    %v121 = vld [vmem:[#allocation3 + $0x168] sm:$0xff]
    %v122 = vld [vmem:[#allocation3 + $0x170] sm:$0xff]
    %v123 = vld [vmem:[#allocation3 + $0x178] sm:$0xff]
    %v124 = vld [vmem:[#allocation3 + $0x180] sm:$0xff]
    %v125 = vld [vmem:[#allocation3 + $0x188] sm:$0xff]
    %v126 = vld [vmem:[#allocation3 + $0x190] sm:$0xff]
    %v127 = vld [vmem:[#allocation3 + $0x198] sm:$0xff]
    %v128 = vld [vmem:[#allocation3 + $0x1a0] sm:$0xff]
    %v129 = vld [vmem:[#allocation3 + $0x1a8] sm:$0xff]
    %v130 = vld [vmem:[#allocation3 + $0x1b0] sm:$0xff]
    %v131 = vld [vmem:[#allocation3 + $0x1b8] sm:$0xff]
    %v132 = vld [vmem:[#allocation3 + $0x1c0] sm:$0xff]
    %v133 = vld [vmem:[#allocation3 + $0x1c8] sm:$0xff]
    %v134 = vld [vmem:[#allocation3 + $0x1d0] sm:$0xff]
    %v135 = vld [vmem:[#allocation3 + $0x1d8] sm:$0xff]
    %v136 = vld [vmem:[#allocation3 + $0x1e0] sm:$0xff]
    %v137 = vld [vmem:[#allocation3 + $0x1e8] sm:$0xff]
    %v138 = vld [vmem:[#allocation3 + $0x1f0] sm:$0xff]
    %v139 = vld [vmem:[#allocation3 + $0x1f8] sm:$0xff]
    %v140 = vld [vmem:[%s2] sm:$0xf]
    %v142 = vlaneseq
    %v143 = vshrl.u32 %v142, 7
    %v144 = vsub.s32 0, %v143
    %v145 = vrot.slane %v140, %v144
    %v146 = vlaneseq
    %v147 = vshrl.u32 %v146, 7
    %v148 = vsub.s32 1, %v147
    %v149 = vrot.slane %v140, %v148
    %v150 = vlaneseq
    %v151 = vshrl.u32 %v150, 7
    %v152 = vsub.s32 2, %v151
    %v153 = vrot.slane %v140, %v152
    %v154 = vlaneseq
    %v155 = vshrl.u32 %v154, 7
    %v156 = vsub.s32 3, %v155
    %v157 = vrot.slane %v140, %v156
    %v164 = vunpack.c.l.s4 1983009808
    %v165 = vunpack.c.0.s8 %v164
    %v166 = vlaneseq
    %v167 = vshrl.u32 %v166, 7
    %v168 = vsub.s32 %v165, %v167
    %v169 = vrot.slane %v75, %v168
    %v170 = vcombine.high %v169, %v169
    %v237 = vunpack.c.l.b16 %v76
    %v238 = vunpack.c.h.b16 %v76
    %v239 = vunpack.c.l.b16 %v77
    %v240 = vunpack.c.h.b16 %v77
    %v241 = vunpack.c.l.b16 %v78
    %v242 = vunpack.c.h.b16 %v78
    %v243 = vunpack.c.l.b16 %v79
    %v244 = vunpack.c.h.b16 %v79
    %v245 = vunpack.c.l.b16 %v80
    %v246 = vunpack.c.h.b16 %v80
    %v247 = vunpack.c.l.b16 %v81
    %v248 = vunpack.c.h.b16 %v81
    %v249 = vunpack.c.l.b16 %v82
    %v250 = vunpack.c.h.b16 %v82
    %v251 = vunpack.c.l.b16 %v83
    %v252 = vunpack.c.h.b16 %v83
    %v253 = vunpack.c.l.b16 %v84
    %v254 = vunpack.c.h.b16 %v84
    %v255 = vunpack.c.l.b16 %v85
    %v256 = vunpack.c.h.b16 %v85
    %v257 = vunpack.c.l.b16 %v86
    %v258 = vunpack.c.h.b16 %v86
    %v259 = vunpack.c.l.b16 %v87
    %v260 = vunpack.c.h.b16 %v87
    %v261 = vunpack.c.l.b16 %v88
    %v262 = vunpack.c.h.b16 %v88
    %v263 = vunpack.c.l.b16 %v89
    %v264 = vunpack.c.h.b16 %v89
    %v265 = vunpack.c.l.b16 %v90
    %v266 = vunpack.c.h.b16 %v90
    %v267 = vunpack.c.l.b16 %v91
    %v268 = vunpack.c.h.b16 %v91
    %v269 = vunpack.c.l.b16 %v92
    %v270 = vunpack.c.h.b16 %v92
    %v271 = vunpack.c.l.b16 %v93
    %v272 = vunpack.c.h.b16 %v93
    %v273 = vunpack.c.l.b16 %v94
    %v274 = vunpack.c.h.b16 %v94
    %v275 = vunpack.c.l.b16 %v95
    %v276 = vunpack.c.h.b16 %v95
    %v277 = vunpack.c.l.b16 %v96
    %v278 = vunpack.c.h.b16 %v96
    %v279 = vunpack.c.l.b16 %v97
    %v280 = vunpack.c.h.b16 %v97
    %v281 = vunpack.c.l.b16 %v98
    %v282 = vunpack.c.h.b16 %v98
    %v283 = vunpack.c.l.b16 %v99
    %v284 = vunpack.c.h.b16 %v99
    %v285 = vunpack.c.l.b16 %v100
    %v286 = vunpack.c.h.b16 %v100
    %v287 = vunpack.c.l.b16 %v101
    %v288 = vunpack.c.h.b16 %v101
    %v289 = vunpack.c.l.b16 %v102
    %v290 = vunpack.c.h.b16 %v102
    %v291 = vunpack.c.l.b16 %v103
    %v292 = vunpack.c.h.b16 %v103
    %v293 = vunpack.c.l.b16 %v104
    %v294 = vunpack.c.h.b16 %v104
    %v295 = vunpack.c.l.b16 %v105
    %v296 = vunpack.c.h.b16 %v105
    %v297 = vunpack.c.l.b16 %v106
    %v298 = vunpack.c.h.b16 %v106
    %v299 = vunpack.c.l.b16 %v107
    %v300 = vunpack.c.h.b16 %v107
    %v301 = vunpack.c.l.b16 %v108
    %v302 = vunpack.c.h.b16 %v108
    %v303 = vunpack.c.l.b16 %v109
    %v304 = vunpack.c.h.b16 %v109
    %v305 = vunpack.c.l.b16 %v110
    %v306 = vunpack.c.h.b16 %v110
    %v307 = vunpack.c.l.b16 %v111
    %v308 = vunpack.c.h.b16 %v111
    %v309 = vunpack.c.l.b16 %v112
    %v310 = vunpack.c.h.b16 %v112
    %v311 = vunpack.c.l.b16 %v113
    %v312 = vunpack.c.h.b16 %v113
    %v313 = vunpack.c.l.b16 %v114
    %v314 = vunpack.c.h.b16 %v114
    %v315 = vunpack.c.l.b16 %v115
    %v316 = vunpack.c.h.b16 %v115
    %v317 = vunpack.c.l.b16 %v116
    %v318 = vunpack.c.h.b16 %v116
    %v319 = vunpack.c.l.b16 %v117
    %v320 = vunpack.c.h.b16 %v117
    %v321 = vunpack.c.l.b16 %v118
    %v322 = vunpack.c.h.b16 %v118
    %v323 = vunpack.c.l.b16 %v119
    %v324 = vunpack.c.h.b16 %v119
    %v325 = vunpack.c.l.b16 %v120
    %v326 = vunpack.c.h.b16 %v120
    %v327 = vunpack.c.l.b16 %v121
    %v328 = vunpack.c.h.b16 %v121
    %v329 = vunpack.c.l.b16 %v122
    %v330 = vunpack.c.h.b16 %v122
    %v331 = vunpack.c.l.b16 %v123
    %v332 = vunpack.c.h.b16 %v123
    %v333 = vunpack.c.l.b16 %v124
    %v334 = vunpack.c.h.b16 %v124
    %v335 = vunpack.c.l.b16 %v125
    %v336 = vunpack.c.h.b16 %v125
    %v337 = vunpack.c.l.b16 %v126
    %v338 = vunpack.c.h.b16 %v126
    %v339 = vunpack.c.l.b16 %v127
    %v340 = vunpack.c.h.b16 %v127
    %v341 = vunpack.c.l.b16 %v128
    %v342 = vunpack.c.h.b16 %v128
    %v343 = vunpack.c.l.b16 %v129
    %v344 = vunpack.c.h.b16 %v129
    %v345 = vunpack.c.l.b16 %v130
    %v346 = vunpack.c.h.b16 %v130
    %v347 = vunpack.c.l.b16 %v131
    %v348 = vunpack.c.h.b16 %v131
    %v349 = vunpack.c.l.b16 %v132
    %v350 = vunpack.c.h.b16 %v132
    %v351 = vunpack.c.l.b16 %v133
    %v352 = vunpack.c.h.b16 %v133
    %v353 = vunpack.c.l.b16 %v134
    %v354 = vunpack.c.h.b16 %v134
    %v355 = vunpack.c.l.b16 %v135
    %v356 = vunpack.c.h.b16 %v135
    %v357 = vunpack.c.l.b16 %v136
    %v358 = vunpack.c.h.b16 %v136
    %v359 = vunpack.c.l.b16 %v137
    %v360 = vunpack.c.h.b16 %v137
    %v361 = vunpack.c.l.b16 %v138
    %v362 = vunpack.c.h.b16 %v138
    %v363 = vunpack.c.l.b16 %v139
    %v364 = vunpack.c.h.b16 %v139
    %v365 = vpack.c.b16 %v241, %v237
    %v366 = vpack.c.b16 %v242, %v238
    %v367 = vpack.c.b16 %v243, %v239
    %v368 = vpack.c.b16 %v244, %v240
    %v369 = vpack.c.b16 %v249, %v245
    %v370 = vpack.c.b16 %v250, %v246
    %v371 = vpack.c.b16 %v251, %v247
    %v372 = vpack.c.b16 %v252, %v248
    %v373 = vpack.c.b16 %v257, %v253
    %v374 = vpack.c.b16 %v258, %v254
    %v375 = vpack.c.b16 %v259, %v255
    %v376 = vpack.c.b16 %v260, %v256
    %v377 = vpack.c.b16 %v265, %v261
    %v378 = vpack.c.b16 %v266, %v262
    %v379 = vpack.c.b16 %v267, %v263
    %v380 = vpack.c.b16 %v268, %v264
    %v381 = vpack.c.b16 %v273, %v269
    %v382 = vpack.c.b16 %v274, %v270
    %v383 = vpack.c.b16 %v275, %v271
    %v384 = vpack.c.b16 %v276, %v272
    %v385 = vpack.c.b16 %v281, %v277
    %v386 = vpack.c.b16 %v282, %v278
    %v387 = vpack.c.b16 %v283, %v279
    %v388 = vpack.c.b16 %v284, %v280
    %v389 = vpack.c.b16 %v289, %v285
    %v390 = vpack.c.b16 %v290, %v286
    %v391 = vpack.c.b16 %v291, %v287
    %v392 = vpack.c.b16 %v292, %v288
    %v393 = vpack.c.b16 %v297, %v293
    %v394 = vpack.c.b16 %v298, %v294
    %v395 = vpack.c.b16 %v299, %v295
    %v396 = vpack.c.b16 %v300, %v296
    %v397 = vpack.c.b16 %v305, %v301
    %v398 = vpack.c.b16 %v306, %v302
    %v399 = vpack.c.b16 %v307, %v303
    %v400 = vpack.c.b16 %v308, %v304
    %v401 = vpack.c.b16 %v313, %v309
    %v402 = vpack.c.b16 %v314, %v310
    %v403 = vpack.c.b16 %v315, %v311
    %v404 = vpack.c.b16 %v316, %v312
    %v405 = vpack.c.b16 %v321, %v317
    %v406 = vpack.c.b16 %v322, %v318
    %v407 = vpack.c.b16 %v323, %v319
    %v408 = vpack.c.b16 %v324, %v320
    %v409 = vpack.c.b16 %v329, %v325
    %v410 = vpack.c.b16 %v330, %v326
    %v411 = vpack.c.b16 %v331, %v327
    %v412 = vpack.c.b16 %v332, %v328
    %v413 = vpack.c.b16 %v337, %v333
    %v414 = vpack.c.b16 %v338, %v334
    %v415 = vpack.c.b16 %v339, %v335
    %v416 = vpack.c.b16 %v340, %v336
    %v417 = vpack.c.b16 %v345, %v341
    %v418 = vpack.c.b16 %v346, %v342
    %v419 = vpack.c.b16 %v347, %v343
    %v420 = vpack.c.b16 %v348, %v344
    %v421 = vpack.c.b16 %v353, %v349
    %v422 = vpack.c.b16 %v354, %v350
    %v423 = vpack.c.b16 %v355, %v351
    %v424 = vpack.c.b16 %v356, %v352
    %v425 = vpack.c.b16 %v361, %v357
    %v426 = vpack.c.b16 %v362, %v358
    %v427 = vpack.c.b16 %v363, %v359
    %v428 = vpack.c.b16 %v364, %v360
    %493 = vmatprep.subr.bf16.mxu0 %v366
    %494 = vmatpush1.bf16.msra.mxu0 %v365
    %495 = vmatprep.subr.bf16.mxu0 %v370
    %496 = vmatpush1.bf16.msra.mxu0 %v369
    %497 = vmatprep.subr.bf16.mxu0 %v374
    %498 = vmatpush1.bf16.msra.mxu0 %v373
    %499 = vmatprep.subr.bf16.mxu0 %v378
    %500 = vmatpush1.bf16.msra.mxu0 %v377
    %501 = vmatprep.subr.bf16.mxu0 %v382
    %502 = vmatpush1.bf16.msra.mxu0 %v381
    %503 = vmatprep.subr.bf16.mxu0 %v386
    %504 = vmatpush1.bf16.msra.mxu0 %v385
    %505 = vmatprep.subr.bf16.mxu0 %v390
    %506 = vmatpush1.bf16.msra.mxu0 %v389
    %507 = vmatprep.subr.bf16.mxu0 %v394
    %508 = vmatpush1.bf16.msra.mxu0 %v393
    %509 = vmatprep.subr.bf16.mxu0 %v398
    %510 = vmatpush1.bf16.msra.mxu0 %v397
    %511 = vmatprep.subr.bf16.mxu0 %v402
    %512 = vmatpush1.bf16.msra.mxu0 %v401
    %513 = vmatprep.subr.bf16.mxu0 %v406
    %514 = vmatpush1.bf16.msra.mxu0 %v405
    %515 = vmatprep.subr.bf16.mxu0 %v410
    %516 = vmatpush1.bf16.msra.mxu0 %v409
    %517 = vmatprep.subr.bf16.mxu0 %v414
    %518 = vmatpush1.bf16.msra.mxu0 %v413
    %519 = vmatprep.subr.bf16.mxu0 %v418
    %520 = vmatpush1.bf16.msra.mxu0 %v417
    %521 = vmatprep.subr.bf16.mxu0 %v422
    %522 = vmatpush1.bf16.msra.mxu0 %v421
    %523 = vmatprep.subr.bf16.mxu0 %v426
    %524 = vmatpush1.bf16.msra.mxu0 %v425
    %525 = vmatprep.mubr.bf16.mxu0 %v170
    %526 = vmatmul.mubr.bf16.gmra.mrb[0].mxu0 %v169
    %v527 = vpop.f32.mrb[0].mxu0
    %v528 = vadd.f32 %v145, %v527
    %v529 = vpop.f32.mrb[0].mxu0
    %v530 = vadd.f32 %v149, %v529
    %v531 = vpop.f32.mrb[0].mxu0
    %v532 = vpop.f32.mrb[0].mxu0
    %533 = vdwg.mxu0
    %534 = vmatprep.subr.bf16.mxu0 %v368
    %535 = vmatpush1.bf16.msra.mxu0 %v367
    %536 = vmatprep.subr.bf16.mxu0 %v372
    %537 = vmatpush1.bf16.msra.mxu0 %v371
    %538 = vmatprep.subr.bf16.mxu0 %v376
    %539 = vmatpush1.bf16.msra.mxu0 %v375
    %540 = vmatprep.subr.bf16.mxu0 %v380
    %541 = vmatpush1.bf16.msra.mxu0 %v379
    %542 = vmatprep.subr.bf16.mxu0 %v384
    %543 = vmatpush1.bf16.msra.mxu0 %v383
    %544 = vmatprep.subr.bf16.mxu0 %v388
    %545 = vmatpush1.bf16.msra.mxu0 %v387
    %546 = vmatprep.subr.bf16.mxu0 %v392
    %547 = vmatpush1.bf16.msra.mxu0 %v391
    %548 = vmatprep.subr.bf16.mxu0 %v396
    %549 = vmatpush1.bf16.msra.mxu0 %v395
    %550 = vmatprep.subr.bf16.mxu0 %v400
    %551 = vmatpush1.bf16.msra.mxu0 %v399
    %552 = vmatprep.subr.bf16.mxu0 %v404
    %553 = vmatpush1.bf16.msra.mxu0 %v403
    %554 = vmatprep.subr.bf16.mxu0 %v408
    %555 = vmatpush1.bf16.msra.mxu0 %v407
    %556 = vmatprep.subr.bf16.mxu0 %v412
    %557 = vmatpush1.bf16.msra.mxu0 %v411
    %558 = vmatprep.subr.bf16.mxu0 %v416
    %559 = vmatpush1.bf16.msra.mxu0 %v415
    %560 = vmatprep.subr.bf16.mxu0 %v420
    %561 = vmatpush1.bf16.msra.mxu0 %v419
    %562 = vmatprep.subr.bf16.mxu0 %v424
    %563 = vmatpush1.bf16.msra.mxu0 %v423
    %564 = vmatprep.subr.bf16.mxu0 %v428
    %565 = vmatpush1.bf16.msra.mxu0 %v427
    %566 = vmatprep.mubr.bf16.mxu0 %v170
    %567 = vmatmul.mubr.bf16.gmra.mrb[0].mxu0 %v169
    %v568 = vpop.f32.mrb[0].mxu0
    %v569 = vadd.f32 %v153, %v568
    %v570 = vpop.f32.mrb[0].mxu0
    %v571 = vadd.f32 %v157, %v570
    %v572 = vpop.f32.mrb[0].mxu0
    %v573 = vpop.f32.mrb[0].mxu0
    %574 = vdwg.mxu0
    %vm575 = vcmp.gt.f32.partialorder %v528, 0.0
    %vm576 = vcmp.gt.f32.partialorder %v530, 0.0
    %vm577 = vcmp.gt.f32.partialorder %v569, 0.0
    %vm578 = vcmp.gt.f32.partialorder %v571, 0.0
    %v579 = vmul.f32 %v528, 0.01
    %v580 = vmul.f32 %v530, 0.01
    %v581 = vmul.f32 %v569, 0.01
    %v582 = vmul.f32 %v571, 0.01
    %v583 = vsel %vm575, %v528, %v579
    %v584 = vsel %vm576, %v530, %v580
    %v585 = vsel %vm577, %v569, %v581
    %v586 = vsel %vm578, %v571, %v582
    %v587 = vpack.c.bf16 %v583, %v583
    %v588 = vpack.c.bf16 %v584, %v584
    %v589 = vpack.c.bf16 %v585, %v585
    %v590 = vpack.c.bf16 %v586, %v586
    %v591 = vld [vmem:[#allocation5] sm:$0xff]
    %v592 = vld [vmem:[#allocation5 + $0x8] sm:$0xff]
    %v593 = vld [vmem:[#allocation5 + $0x10] sm:$0xff]
    %v594 = vld [vmem:[#allocation5 + $0x18] sm:$0xff]
    %v595 = vld [vmem:[#allocation5 + $0x20] sm:$0xff]
    %v596 = vld [vmem:[#allocation5 + $0x28] sm:$0xff]
    %v597 = vld [vmem:[#allocation5 + $0x30] sm:$0xff]
    %v598 = vld [vmem:[#allocation5 + $0x38] sm:$0xff]
    %v599 = vld [vmem:[#allocation5 + $0x40] sm:$0xff]
    %v600 = vld [vmem:[#allocation5 + $0x48] sm:$0xff]
    %v601 = vld [vmem:[#allocation5 + $0x50] sm:$0xff]
    %v602 = vld [vmem:[#allocation5 + $0x58] sm:$0xff]
    %v603 = vld [vmem:[#allocation5 + $0x60] sm:$0xff]
    %v604 = vld [vmem:[#allocation5 + $0x68] sm:$0xff]
    %v605 = vld [vmem:[#allocation5 + $0x70] sm:$0xff]
    %v606 = vld [vmem:[#allocation5 + $0x78] sm:$0xff]
    %v607 = vld [vmem:[#allocation5 + $0x80] sm:$0xff]
    %v608 = vld [vmem:[#allocation5 + $0x88] sm:$0xff]
    %v609 = vld [vmem:[#allocation5 + $0x90] sm:$0xff]
    %v610 = vld [vmem:[#allocation5 + $0x98] sm:$0xff]
    %v611 = vld [vmem:[#allocation5 + $0xa0] sm:$0xff]
    %v612 = vld [vmem:[#allocation5 + $0xa8] sm:$0xff]
    %v613 = vld [vmem:[#allocation5 + $0xb0] sm:$0xff]
    %v614 = vld [vmem:[#allocation5 + $0xb8] sm:$0xff]
    %v615 = vld [vmem:[#allocation5 + $0xc0] sm:$0xff]
    %v616 = vld [vmem:[#allocation5 + $0xc8] sm:$0xff]
    %v617 = vld [vmem:[#allocation5 + $0xd0] sm:$0xff]
    %v618 = vld [vmem:[#allocation5 + $0xd8] sm:$0xff]
    %v619 = vld [vmem:[#allocation5 + $0xe0] sm:$0xff]
    %v620 = vld [vmem:[#allocation5 + $0xe8] sm:$0xff]
    %v621 = vld [vmem:[#allocation5 + $0xf0] sm:$0xff]
    %v622 = vld [vmem:[#allocation5 + $0xf8] sm:$0xff]
    %v623 = vld [vmem:[#allocation5 + $0x100] sm:$0xff]
    %v624 = vld [vmem:[#allocation5 + $0x108] sm:$0xff]
    %v625 = vld [vmem:[#allocation5 + $0x110] sm:$0xff]
    %v626 = vld [vmem:[#allocation5 + $0x118] sm:$0xff]
    %v627 = vld [vmem:[#allocation5 + $0x120] sm:$0xff]
    %v628 = vld [vmem:[#allocation5 + $0x128] sm:$0xff]
    %v629 = vld [vmem:[#allocation5 + $0x130] sm:$0xff]
    %v630 = vld [vmem:[#allocation5 + $0x138] sm:$0xff]
    %v631 = vld [vmem:[#allocation5 + $0x140] sm:$0xff]
    %v632 = vld [vmem:[#allocation5 + $0x148] sm:$0xff]
    %v633 = vld [vmem:[#allocation5 + $0x150] sm:$0xff]
    %v634 = vld [vmem:[#allocation5 + $0x158] sm:$0xff]
    %v635 = vld [vmem:[#allocation5 + $0x160] sm:$0xff]
    %v636 = vld [vmem:[#allocation5 + $0x168] sm:$0xff]
    %v637 = vld [vmem:[#allocation5 + $0x170] sm:$0xff]
    %v638 = vld [vmem:[#allocation5 + $0x178] sm:$0xff]
    %v639 = vld [vmem:[#allocation5 + $0x180] sm:$0xff]
    %v640 = vld [vmem:[#allocation5 + $0x188] sm:$0xff]
    %v641 = vld [vmem:[#allocation5 + $0x190] sm:$0xff]
    %v642 = vld [vmem:[#allocation5 + $0x198] sm:$0xff]
    %v643 = vld [vmem:[#allocation5 + $0x1a0] sm:$0xff]
    %v644 = vld [vmem:[#allocation5 + $0x1a8] sm:$0xff]
    %v645 = vld [vmem:[#allocation5 + $0x1b0] sm:$0xff]
    %v646 = vld [vmem:[#allocation5 + $0x1b8] sm:$0xff]
    %v647 = vld [vmem:[#allocation5 + $0x1c0] sm:$0xff]
    %v648 = vld [vmem:[#allocation5 + $0x1c8] sm:$0xff]
    %v649 = vld [vmem:[#allocation5 + $0x1d0] sm:$0xff]
    %v650 = vld [vmem:[#allocation5 + $0x1d8] sm:$0xff]
    %v651 = vld [vmem:[#allocation5 + $0x1e0] sm:$0xff]
    %v652 = vld [vmem:[#allocation5 + $0x1e8] sm:$0xff]
    %v653 = vld [vmem:[#allocation5 + $0x1f0] sm:$0xff]
    %v654 = vld [vmem:[#allocation5 + $0x1f8] sm:$0xff]
    %v655 = vld [vmem:[%s4] sm:$0x3]
    %v657 = vlaneseq
    %v658 = vshrl.u32 %v657, 7
    %v659 = vsub.s32 0, %v658
    %v660 = vrot.slane %v655, %v659
    %v661 = vlaneseq
    %v662 = vshrl.u32 %v661, 7
    %v663 = vsub.s32 1, %v662
    %v664 = vrot.slane %v655, %v663
    %v731 = vunpack.c.l.b16 %v591
    %v732 = vunpack.c.h.b16 %v591
    %v733 = vunpack.c.l.b16 %v592
    %v734 = vunpack.c.h.b16 %v592
    %v735 = vunpack.c.l.b16 %v593
    %v736 = vunpack.c.h.b16 %v593
    %v737 = vunpack.c.l.b16 %v594
    %v738 = vunpack.c.h.b16 %v594
    %v739 = vunpack.c.l.b16 %v595
    %v740 = vunpack.c.h.b16 %v595
    %v741 = vunpack.c.l.b16 %v596
    %v742 = vunpack.c.h.b16 %v596
    %v743 = vunpack.c.l.b16 %v597
    %v744 = vunpack.c.h.b16 %v597
    %v745 = vunpack.c.l.b16 %v598
    %v746 = vunpack.c.h.b16 %v598
    %v747 = vunpack.c.l.b16 %v599
    %v748 = vunpack.c.h.b16 %v599
    %v749 = vunpack.c.l.b16 %v600
    %v750 = vunpack.c.h.b16 %v600
    %v751 = vunpack.c.l.b16 %v601
    %v752 = vunpack.c.h.b16 %v601
    %v753 = vunpack.c.l.b16 %v602
    %v754 = vunpack.c.h.b16 %v602
    %v755 = vunpack.c.l.b16 %v603
    %v756 = vunpack.c.h.b16 %v603
    %v757 = vunpack.c.l.b16 %v604
    %v758 = vunpack.c.h.b16 %v604
    %v759 = vunpack.c.l.b16 %v605
    %v760 = vunpack.c.h.b16 %v605
    %v761 = vunpack.c.l.b16 %v606
    %v762 = vunpack.c.h.b16 %v606
    %v763 = vunpack.c.l.b16 %v607
    %v764 = vunpack.c.h.b16 %v607
    %v765 = vunpack.c.l.b16 %v608
    %v766 = vunpack.c.h.b16 %v608
    %v767 = vunpack.c.l.b16 %v609
    %v768 = vunpack.c.h.b16 %v609
    %v769 = vunpack.c.l.b16 %v610
    %v770 = vunpack.c.h.b16 %v610
    %v771 = vunpack.c.l.b16 %v611
    %v772 = vunpack.c.h.b16 %v611
    %v773 = vunpack.c.l.b16 %v612
    %v774 = vunpack.c.h.b16 %v612
    %v775 = vunpack.c.l.b16 %v613
    %v776 = vunpack.c.h.b16 %v613
    %v777 = vunpack.c.l.b16 %v614
    %v778 = vunpack.c.h.b16 %v614
    %v779 = vunpack.c.l.b16 %v615
    %v780 = vunpack.c.h.b16 %v615
    %v781 = vunpack.c.l.b16 %v616
    %v782 = vunpack.c.h.b16 %v616
    %v783 = vunpack.c.l.b16 %v617
    %v784 = vunpack.c.h.b16 %v617
    %v785 = vunpack.c.l.b16 %v618
    %v786 = vunpack.c.h.b16 %v618
    %v787 = vunpack.c.l.b16 %v619
    %v788 = vunpack.c.h.b16 %v619
    %v789 = vunpack.c.l.b16 %v620
    %v790 = vunpack.c.h.b16 %v620
    %v791 = vunpack.c.l.b16 %v621
    %v792 = vunpack.c.h.b16 %v621
    %v793 = vunpack.c.l.b16 %v622
    %v794 = vunpack.c.h.b16 %v622
    %v795 = vunpack.c.l.b16 %v623
    %v796 = vunpack.c.h.b16 %v623
    %v797 = vunpack.c.l.b16 %v624
    %v798 = vunpack.c.h.b16 %v624
    %v799 = vunpack.c.l.b16 %v625
    %v800 = vunpack.c.h.b16 %v625
    %v801 = vunpack.c.l.b16 %v626
    %v802 = vunpack.c.h.b16 %v626
    %v803 = vunpack.c.l.b16 %v627
    %v804 = vunpack.c.h.b16 %v627
    %v805 = vunpack.c.l.b16 %v628
    %v806 = vunpack.c.h.b16 %v628
    %v807 = vunpack.c.l.b16 %v629
    %v808 = vunpack.c.h.b16 %v629
    %v809 = vunpack.c.l.b16 %v630
    %v810 = vunpack.c.h.b16 %v630
    %v811 = vunpack.c.l.b16 %v631
    %v812 = vunpack.c.h.b16 %v631
    %v813 = vunpack.c.l.b16 %v632
    %v814 = vunpack.c.h.b16 %v632
    %v815 = vunpack.c.l.b16 %v633
    %v816 = vunpack.c.h.b16 %v633
    %v817 = vunpack.c.l.b16 %v634
    %v818 = vunpack.c.h.b16 %v634
    %v819 = vunpack.c.l.b16 %v635
    %v820 = vunpack.c.h.b16 %v635
    %v821 = vunpack.c.l.b16 %v636
    %v822 = vunpack.c.h.b16 %v636
    %v823 = vunpack.c.l.b16 %v637
    %v824 = vunpack.c.h.b16 %v637
    %v825 = vunpack.c.l.b16 %v638
    %v826 = vunpack.c.h.b16 %v638
    %v827 = vunpack.c.l.b16 %v639
    %v828 = vunpack.c.h.b16 %v639
    %v829 = vunpack.c.l.b16 %v640
    %v830 = vunpack.c.h.b16 %v640
    %v831 = vunpack.c.l.b16 %v641
    %v832 = vunpack.c.h.b16 %v641
    %v833 = vunpack.c.l.b16 %v642
    %v834 = vunpack.c.h.b16 %v642
    %v835 = vunpack.c.l.b16 %v643
    %v836 = vunpack.c.h.b16 %v643
    %v837 = vunpack.c.l.b16 %v644
    %v838 = vunpack.c.h.b16 %v644
    %v839 = vunpack.c.l.b16 %v645
    %v840 = vunpack.c.h.b16 %v645
    %v841 = vunpack.c.l.b16 %v646
    %v842 = vunpack.c.h.b16 %v646
    %v843 = vunpack.c.l.b16 %v647
    %v844 = vunpack.c.h.b16 %v647
    %v845 = vunpack.c.l.b16 %v648
    %v846 = vunpack.c.h.b16 %v648
    %v847 = vunpack.c.l.b16 %v649
    %v848 = vunpack.c.h.b16 %v649
    %v849 = vunpack.c.l.b16 %v650
    %v850 = vunpack.c.h.b16 %v650
    %v851 = vunpack.c.l.b16 %v651
    %v852 = vunpack.c.h.b16 %v651
    %v853 = vunpack.c.l.b16 %v652
    %v854 = vunpack.c.h.b16 %v652
    %v855 = vunpack.c.l.b16 %v653
    %v856 = vunpack.c.h.b16 %v653
    %v857 = vunpack.c.l.b16 %v654
    %v858 = vunpack.c.h.b16 %v654
    %v859 = vpack.c.b16 %v733, %v731
    %v860 = vpack.c.b16 %v734, %v732
    %v861 = vpack.c.b16 %v737, %v735
    %v862 = vpack.c.b16 %v738, %v736
    %v863 = vpack.c.b16 %v741, %v739
    %v864 = vpack.c.b16 %v742, %v740
    %v865 = vpack.c.b16 %v745, %v743
    %v866 = vpack.c.b16 %v746, %v744
    %v867 = vpack.c.b16 %v749, %v747
    %v868 = vpack.c.b16 %v750, %v748
    %v869 = vpack.c.b16 %v753, %v751
    %v870 = vpack.c.b16 %v754, %v752
    %v871 = vpack.c.b16 %v757, %v755
    %v872 = vpack.c.b16 %v758, %v756
    %v873 = vpack.c.b16 %v761, %v759
    %v874 = vpack.c.b16 %v762, %v760
    %v875 = vpack.c.b16 %v765, %v763
    %v876 = vpack.c.b16 %v766, %v764
    %v877 = vpack.c.b16 %v769, %v767
    %v878 = vpack.c.b16 %v770, %v768
    %v879 = vpack.c.b16 %v773, %v771
    %v880 = vpack.c.b16 %v774, %v772
    %v881 = vpack.c.b16 %v777, %v775
    %v882 = vpack.c.b16 %v778, %v776
    %v883 = vpack.c.b16 %v781, %v779
    %v884 = vpack.c.b16 %v782, %v780
    %v885 = vpack.c.b16 %v785, %v783
    %v886 = vpack.c.b16 %v786, %v784
    %v887 = vpack.c.b16 %v789, %v787
    %v888 = vpack.c.b16 %v790, %v788
    %v889 = vpack.c.b16 %v793, %v791
    %v890 = vpack.c.b16 %v794, %v792
    %v891 = vpack.c.b16 %v797, %v795
    %v892 = vpack.c.b16 %v798, %v796
    %v893 = vpack.c.b16 %v801, %v799
    %v894 = vpack.c.b16 %v802, %v800
    %v895 = vpack.c.b16 %v805, %v803
    %v896 = vpack.c.b16 %v806, %v804
    %v897 = vpack.c.b16 %v809, %v807
    %v898 = vpack.c.b16 %v810, %v808
    %v899 = vpack.c.b16 %v813, %v811
    %v900 = vpack.c.b16 %v814, %v812
    %v901 = vpack.c.b16 %v817, %v815
    %v902 = vpack.c.b16 %v818, %v816
    %v903 = vpack.c.b16 %v821, %v819
    %v904 = vpack.c.b16 %v822, %v820
    %v905 = vpack.c.b16 %v825, %v823
    %v906 = vpack.c.b16 %v826, %v824
    %v907 = vpack.c.b16 %v829, %v827
    %v908 = vpack.c.b16 %v830, %v828
    %v909 = vpack.c.b16 %v833, %v831
    %v910 = vpack.c.b16 %v834, %v832
    %v911 = vpack.c.b16 %v837, %v835
    %v912 = vpack.c.b16 %v838, %v836
    %v913 = vpack.c.b16 %v841, %v839
    %v914 = vpack.c.b16 %v842, %v840
    %v915 = vpack.c.b16 %v845, %v843
    %v916 = vpack.c.b16 %v846, %v844
    %v917 = vpack.c.b16 %v849, %v847
    %v918 = vpack.c.b16 %v850, %v848
    %v919 = vpack.c.b16 %v853, %v851
    %v920 = vpack.c.b16 %v854, %v852
    %v921 = vpack.c.b16 %v857, %v855
    %v922 = vpack.c.b16 %v858, %v856
    %987 = vmatprep.subr.bf16.mxu0 %v860
    %988 = vmatpush1.bf16.msra.mxu0 %v859
    %989 = vmatprep.subr.bf16.mxu0 %v862
    %990 = vmatpush1.bf16.msra.mxu0 %v861
    %991 = vmatprep.subr.bf16.mxu0 %v864
    %992 = vmatpush1.bf16.msra.mxu0 %v863
    %993 = vmatprep.subr.bf16.mxu0 %v866
    %994 = vmatpush1.bf16.msra.mxu0 %v865
    %995 = vmatprep.subr.bf16.mxu0 %v868
    %996 = vmatpush1.bf16.msra.mxu0 %v867
    %997 = vmatprep.subr.bf16.mxu0 %v870
    %998 = vmatpush1.bf16.msra.mxu0 %v869
    %999 = vmatprep.subr.bf16.mxu0 %v872
    %1000 = vmatpush1.bf16.msra.mxu0 %v871
    %1001 = vmatprep.subr.bf16.mxu0 %v874
    %1002 = vmatpush1.bf16.msra.mxu0 %v873
    %1003 = vmatprep.subr.bf16.mxu0 %v876
    %1004 = vmatpush1.bf16.msra.mxu0 %v875
    %1005 = vmatprep.subr.bf16.mxu0 %v878
    %1006 = vmatpush1.bf16.msra.mxu0 %v877
    %1007 = vmatprep.subr.bf16.mxu0 %v880
    %1008 = vmatpush1.bf16.msra.mxu0 %v879
    %1009 = vmatprep.subr.bf16.mxu0 %v882
    %1010 = vmatpush1.bf16.msra.mxu0 %v881
    %1011 = vmatprep.subr.bf16.mxu0 %v884
    %1012 = vmatpush1.bf16.msra.mxu0 %v883
    %1013 = vmatprep.subr.bf16.mxu0 %v886
    %1014 = vmatpush1.bf16.msra.mxu0 %v885
    %1015 = vmatprep.subr.bf16.mxu0 %v888
    %1016 = vmatpush1.bf16.msra.mxu0 %v887
    %1017 = vmatprep.subr.bf16.mxu0 %v890
    %1018 = vmatpush1.bf16.msra.mxu0 %v889
    %1019 = vmatprep.mubr.bf16.mxu0 %v588
    %1020 = vmatmul.mubr.bf16.gmra.mrb[0].mxu0 %v587
    %v1021 = vpop.f32.mrb[0].mxu0
    %v1022 = vadd.f32 %v660, %v1021
    %v1023 = vpop.f32.mrb[0].mxu0
    %v1024 = vadd.f32 %v664, %v1023
    %v1025 = vpop.f32.mrb[0].mxu0
    %v1026 = vpop.f32.mrb[0].mxu0
    %1027 = vdwg.mxu0
    %1028 = vmatprep.subr.bf16.mxu0 %v892
    %1029 = vmatpush1.bf16.msra.mxu0 %v891
    %1030 = vmatprep.subr.bf16.mxu0 %v894
    %1031 = vmatpush1.bf16.msra.mxu0 %v893
    %1032 = vmatprep.subr.bf16.mxu0 %v896
    %1033 = vmatpush1.bf16.msra.mxu0 %v895
    %1034 = vmatprep.subr.bf16.mxu0 %v898
    %1035 = vmatpush1.bf16.msra.mxu0 %v897
    %1036 = vmatprep.subr.bf16.mxu0 %v900
    %1037 = vmatpush1.bf16.msra.mxu0 %v899
    %1038 = vmatprep.subr.bf16.mxu0 %v902
    %1039 = vmatpush1.bf16.msra.mxu0 %v901
    %1040 = vmatprep.subr.bf16.mxu0 %v904
    %1041 = vmatpush1.bf16.msra.mxu0 %v903
    %1042 = vmatprep.subr.bf16.mxu0 %v906
    %1043 = vmatpush1.bf16.msra.mxu0 %v905
    %1044 = vmatprep.subr.bf16.mxu0 %v908
    %1045 = vmatpush1.bf16.msra.mxu0 %v907
    %1046 = vmatprep.subr.bf16.mxu0 %v910
    %1047 = vmatpush1.bf16.msra.mxu0 %v909
    %1048 = vmatprep.subr.bf16.mxu0 %v912
    %1049 = vmatpush1.bf16.msra.mxu0 %v911
    %1050 = vmatprep.subr.bf16.mxu0 %v914
    %1051 = vmatpush1.bf16.msra.mxu0 %v913
    %1052 = vmatprep.subr.bf16.mxu0 %v916
    %1053 = vmatpush1.bf16.msra.mxu0 %v915
    %1054 = vmatprep.subr.bf16.mxu0 %v918
    %1055 = vmatpush1.bf16.msra.mxu0 %v917
    %1056 = vmatprep.subr.bf16.mxu0 %v920
    %1057 = vmatpush1.bf16.msra.mxu0 %v919
    %1058 = vmatprep.subr.bf16.mxu0 %v922
    %1059 = vmatpush1.bf16.msra.mxu0 %v921
    %1060 = vmatprep.mubr.bf16.mxu0 %v590
    %1061 = vmatmul.mubr.bf16.gmra.mrb[0].mxu0 %v589
    %v1062 = vpop.f32.mrb[0].mxu0
    %v1063 = vadd.f32 %v1022, %v1062
    %v1064 = vpop.f32.mrb[0].mxu0
    %v1065 = vadd.f32 %v1024, %v1064
    %v1066 = vpop.f32.mrb[0].mxu0
    %v1067 = vpop.f32.mrb[0].mxu0
    %1068 = vdwg.mxu0
    %vm1069 = vcmp.gt.f32.partialorder %v1063, 0.0
    %vm1070 = vcmp.gt.f32.partialorder %v1065, 0.0
    %v1071 = vmul.f32 %v1063, 0.01
    %v1072 = vmul.f32 %v1065, 0.01
    %v1073 = vsel %vm1069, %v1063, %v1071
    %v1074 = vsel %vm1070, %v1065, %v1072
    %v1075 = vpack.c.bf16 %v1073, %v1073
    %v1076 = vpack.c.bf16 %v1074, %v1074
    %v1077 = vld [vmem:[%s5] sm:$0xf]
    %v1078 = vld [vmem:[%s5 + $0x4] sm:$0xf]
    %v1079 = vld [vmem:[%s5 + $0x8] sm:$0xf]
    %v1080 = vld [vmem:[%s5 + $0xc] sm:$0xf]
    %v1081 = vld [vmem:[%s5 + $0x10] sm:$0xf]
    %v1082 = vld [vmem:[%s5 + $0x14] sm:$0xf]
    %v1083 = vld [vmem:[%s5 + $0x18] sm:$0xf]
    %v1084 = vld [vmem:[%s5 + $0x1c] sm:$0xf]
    %v1085 = vld [vmem:[%s5 + $0x20] sm:$0xf]
    %v1086 = vld [vmem:[%s5 + $0x24] sm:$0xf]
    %v1087 = vld [vmem:[%s5 + $0x28] sm:$0xf]
    %v1088 = vld [vmem:[%s5 + $0x2c] sm:$0xf]
    %v1089 = vld [vmem:[%s5 + $0x30] sm:$0xf]
    %v1090 = vld [vmem:[%s5 + $0x34] sm:$0xf]
    %v1091 = vld [vmem:[%s5 + $0x38] sm:$0xf]
    %v1092 = vld [vmem:[%s5 + $0x3c] sm:$0xf]
    %v1093 = vld [vmem:[%s5 + $0x40] sm:$0xf]
    %v1094 = vld [vmem:[%s5 + $0x44] sm:$0xf]
    %v1095 = vld [vmem:[%s5 + $0x48] sm:$0xf]
    %v1096 = vld [vmem:[%s5 + $0x4c] sm:$0xf]
    %v1097 = vld [vmem:[%s5 + $0x50] sm:$0xf]
    %v1098 = vld [vmem:[%s5 + $0x54] sm:$0xf]
    %v1099 = vld [vmem:[%s5 + $0x58] sm:$0xf]
    %v1100 = vld [vmem:[%s5 + $0x5c] sm:$0xf]
    %v1101 = vld [vmem:[%s5 + $0x60] sm:$0xf]
    %v1102 = vld [vmem:[%s5 + $0x64] sm:$0xf]
    %v1103 = vld [vmem:[%s5 + $0x68] sm:$0xf]
    %v1104 = vld [vmem:[%s5 + $0x6c] sm:$0xf]
    %v1105 = vld [vmem:[%s5 + $0x70] sm:$0xf]
    %v1106 = vld [vmem:[%s5 + $0x74] sm:$0xf]
    %v1107 = vld [vmem:[%s5 + $0x78] sm:$0xf]
    %v1108 = vld [vmem:[%s5 + $0x7c] sm:$0xf]
    %v1109 = vld [vmem:[%s6] sm:$0x1]
    %v1111 = vlaneseq
    %v1112 = vshrl.u32 %v1111, 7
    %v1113 = vsub.s32 0, %v1112
    %v1114 = vrot.slane %v1109, %v1113
    %v1148 = vunpack.c.l.b16 %v1077
    %v1149 = vunpack.c.l.b16 %v1078
    %v1150 = vunpack.c.l.b16 %v1079
    %v1151 = vunpack.c.l.b16 %v1080
    %v1152 = vunpack.c.l.b16 %v1081
    %v1153 = vunpack.c.l.b16 %v1082
    %v1154 = vunpack.c.l.b16 %v1083
    %v1155 = vunpack.c.l.b16 %v1084
    %v1156 = vunpack.c.l.b16 %v1085
    %v1157 = vunpack.c.l.b16 %v1086
    %v1158 = vunpack.c.l.b16 %v1087
    %v1159 = vunpack.c.l.b16 %v1088
    %v1160 = vunpack.c.l.b16 %v1089
    %v1161 = vunpack.c.l.b16 %v1090
    %v1162 = vunpack.c.l.b16 %v1091
    %v1163 = vunpack.c.l.b16 %v1092
    %v1164 = vunpack.c.l.b16 %v1093
    %v1165 = vunpack.c.l.b16 %v1094
    %v1166 = vunpack.c.l.b16 %v1095
    %v1167 = vunpack.c.l.b16 %v1096
    %v1168 = vunpack.c.l.b16 %v1097
    %v1169 = vunpack.c.l.b16 %v1098
    %v1170 = vunpack.c.l.b16 %v1099
    %v1171 = vunpack.c.l.b16 %v1100
    %v1172 = vunpack.c.l.b16 %v1101
    %v1173 = vunpack.c.l.b16 %v1102
    %v1174 = vunpack.c.l.b16 %v1103
    %v1175 = vunpack.c.l.b16 %v1104
    %v1176 = vunpack.c.l.b16 %v1105
    %v1177 = vunpack.c.l.b16 %v1106
    %v1178 = vunpack.c.l.b16 %v1107
    %v1179 = vunpack.c.l.b16 %v1108
    %v1180 = vpack.c.b16 %v1149, %v1148
    %v1181 = vpack.c.b16 %v1151, %v1150
    %v1182 = vpack.c.b16 %v1153, %v1152
    %v1183 = vpack.c.b16 %v1155, %v1154
    %v1184 = vpack.c.b16 %v1157, %v1156
    %v1185 = vpack.c.b16 %v1159, %v1158
    %v1186 = vpack.c.b16 %v1161, %v1160
    %v1187 = vpack.c.b16 %v1163, %v1162
    %v1188 = vpack.c.b16 %v1165, %v1164
    %v1189 = vpack.c.b16 %v1167, %v1166
    %v1190 = vpack.c.b16 %v1169, %v1168
    %v1191 = vpack.c.b16 %v1171, %v1170
    %v1192 = vpack.c.b16 %v1173, %v1172
    %v1193 = vpack.c.b16 %v1175, %v1174
    %v1194 = vpack.c.b16 %v1177, %v1176
    %v1195 = vpack.c.b16 %v1179, %v1178
    %1212 = vmatprep.subr.bf16.mxu0 0
    %1213 = vmatpush1.bf16.msra.mxu0 %v1180
    %1214 = vmatprep.subr.bf16.mxu0 0
    %1215 = vmatpush1.bf16.msra.mxu0 %v1181
    %1216 = vmatprep.subr.bf16.mxu0 0
    %1217 = vmatpush1.bf16.msra.mxu0 %v1182
    %1218 = vmatprep.subr.bf16.mxu0 0
    %1219 = vmatpush1.bf16.msra.mxu0 %v1183
    %1220 = vmatprep.subr.bf16.mxu0 0
    %1221 = vmatpush1.bf16.msra.mxu0 %v1184
    %1222 = vmatprep.subr.bf16.mxu0 0
    %1223 = vmatpush1.bf16.msra.mxu0 %v1185
    %1224 = vmatprep.subr.bf16.mxu0 0
    %1225 = vmatpush1.bf16.msra.mxu0 %v1186
    %1226 = vmatprep.subr.bf16.mxu0 0
    %1227 = vmatpush1.bf16.msra.mxu0 %v1187
    %1228 = vmatprep.subr.bf16.mxu0 0
    %1229 = vmatpush1.bf16.msra.mxu0 %v1188
    %1230 = vmatprep.subr.bf16.mxu0 0
    %1231 = vmatpush1.bf16.msra.mxu0 %v1189
    %1232 = vmatprep.subr.bf16.mxu0 0
    %1233 = vmatpush1.bf16.msra.mxu0 %v1190
    %1234 = vmatprep.subr.bf16.mxu0 0
    %1235 = vmatpush1.bf16.msra.mxu0 %v1191
    %1236 = vmatprep.subr.bf16.mxu0 0
    %1237 = vmatpush1.bf16.msra.mxu0 %v1192
    %1238 = vmatprep.subr.bf16.mxu0 0
    %1239 = vmatpush1.bf16.msra.mxu0 %v1193
    %1240 = vmatprep.subr.bf16.mxu0 0
    %1241 = vmatpush1.bf16.msra.mxu0 %v1194
    %1242 = vmatprep.subr.bf16.mxu0 0
    %1243 = vmatpush1.bf16.msra.mxu0 %v1195
    %1244 = vmatprep.mubr.bf16.mxu0 %v1076
    %1245 = vmatmul.mubr.bf16.gmra.mrb[0].mxu0 %v1075
    %v1246 = vpop.f32.mrb[0].mxu0
    %v1247 = vadd.f32 %v1114, %v1246
    %v1248 = vpop.f32.mrb[0].mxu0
    %v1249 = vpop.f32.mrb[0].mxu0
    %v1250 = vpop.f32.mrb[0].mxu0
    %1251 = vdwg.mxu0
    %vm1252 = vcmp.gt.f32.partialorder %v1247, 0.0
    %v1253 = vmul.f32 %v1247, 0.01
    %v1254 = vsel %vm1252, %v1247, %v1253
    %v1255 = vpack.c.bf16 %v1254, %v1254
    %v1256 = vld [vmem:[%s7] sm:$0xf]
    %v1257 = vld [vmem:[%s7 + $0x4] sm:$0xf]
    %v1258 = vld [vmem:[%s7 + $0x8] sm:$0xf]
    %v1259 = vld [vmem:[%s7 + $0xc] sm:$0xf]
    %v1260 = vld [vmem:[%s7 + $0x10] sm:$0xf]
    %v1261 = vld [vmem:[%s7 + $0x14] sm:$0xf]
    %v1262 = vld [vmem:[%s7 + $0x18] sm:$0xf]
    %v1263 = vld [vmem:[%s7 + $0x1c] sm:$0xf]
    %v1264 = vld [vmem:[%s7 + $0x20] sm:$0xf]
    %v1265 = vld [vmem:[%s7 + $0x24] sm:$0xf]
    %v1266 = vld [vmem:[%s7 + $0x28] sm:$0xf]
    %v1267 = vld [vmem:[%s7 + $0x2c] sm:$0xf]
    %v1268 = vld [vmem:[%s7 + $0x30] sm:$0xf]
    %v1269 = vld [vmem:[%s7 + $0x34] sm:$0xf]
    %v1270 = vld [vmem:[%s7 + $0x38] sm:$0xf]
    %v1271 = vld [vmem:[%s7 + $0x3c] sm:$0xf]
    %v1272 = vld [vmem:[%s8] sm:$0x1]
    %v1274 = vlaneseq
    %v1275 = vshrl.u32 %v1274, 7
    %v1276 = vsub.s32 0, %v1275
    %v1277 = vrot.slane %v1272, %v1276
    %v1295 = vunpack.c.l.b16 %v1256
    %v1296 = vunpack.c.l.b16 %v1257
    %v1297 = vunpack.c.l.b16 %v1258
    %v1298 = vunpack.c.l.b16 %v1259
    %v1299 = vunpack.c.l.b16 %v1260
    %v1300 = vunpack.c.l.b16 %v1261
    %v1301 = vunpack.c.l.b16 %v1262
    %v1302 = vunpack.c.l.b16 %v1263
    %v1303 = vunpack.c.l.b16 %v1264
    %v1304 = vunpack.c.l.b16 %v1265
    %v1305 = vunpack.c.l.b16 %v1266
    %v1306 = vunpack.c.l.b16 %v1267
    %v1307 = vunpack.c.l.b16 %v1268
    %v1308 = vunpack.c.l.b16 %v1269
    %v1309 = vunpack.c.l.b16 %v1270
    %v1310 = vunpack.c.l.b16 %v1271
    %v1311 = vpack.c.b16 %v1296, %v1295
    %v1312 = vpack.c.b16 %v1298, %v1297
    %v1313 = vpack.c.b16 %v1300, %v1299
    %v1314 = vpack.c.b16 %v1302, %v1301
    %v1315 = vpack.c.b16 %v1304, %v1303
    %v1316 = vpack.c.b16 %v1306, %v1305
    %v1317 = vpack.c.b16 %v1308, %v1307
    %v1318 = vpack.c.b16 %v1310, %v1309
    %1327 = vmatprep.subr.bf16.mxu0 0
    %1328 = vmatpush1.bf16.msra.mxu0 %v1311
    %1329 = vmatprep.subr.bf16.mxu0 0
    %1330 = vmatpush1.bf16.msra.mxu0 %v1312
    %1331 = vmatprep.subr.bf16.mxu0 0
    %1332 = vmatpush1.bf16.msra.mxu0 %v1313
    %1333 = vmatprep.subr.bf16.mxu0 0
    %1334 = vmatpush1.bf16.msra.mxu0 %v1314
    %1335 = vmatprep.subr.bf16.mxu0 0
    %1336 = vmatpush1.bf16.msra.mxu0 %v1315
    %1337 = vmatprep.subr.bf16.mxu0 0
    %1338 = vmatpush1.bf16.msra.mxu0 %v1316
    %1339 = vmatprep.subr.bf16.mxu0 0
    %1340 = vmatpush1.bf16.msra.mxu0 %v1317
    %1341 = vmatprep.subr.bf16.mxu0 0
    %1342 = vmatpush1.bf16.msra.mxu0 %v1318
    %1343 = vmatprep.subr.bf16.mxu0 0
    %1344 = vmatpush1.bf16.msra.mxu0 0
    %1345 = vmatprep.subr.bf16.mxu0 0
    %1346 = vmatpush1.bf16.msra.mxu0 0
    %1347 = vmatprep.subr.bf16.mxu0 0
    %1348 = vmatpush1.bf16.msra.mxu0 0
    %1349 = vmatprep.subr.bf16.mxu0 0
    %1350 = vmatpush1.bf16.msra.mxu0 0
    %1351 = vmatprep.subr.bf16.mxu0 0
    %1352 = vmatpush1.bf16.msra.mxu0 0
    %1353 = vmatprep.subr.bf16.mxu0 0
    %1354 = vmatpush1.bf16.msra.mxu0 0
    %1355 = vmatprep.subr.bf16.mxu0 0
    %1356 = vmatpush1.bf16.msra.mxu0 0
    %1357 = vmatprep.subr.bf16.mxu0 0
    %1358 = vmatpush1.bf16.msra.mxu0 0
    %1359 = vmatprep.mubr.bf16.mxu0 0
    %1360 = vmatmul.mubr.bf16.gmra.mrb[0].mxu0 %v1255
    %v1361 = vpop.f32.mrb[0].mxu0
    %v1362 = vadd.f32 %v1277, %v1361
    %v1363 = vpop.f32.mrb[0].mxu0
    %v1364 = vpop.f32.mrb[0].mxu0
    %v1365 = vpop.f32.mrb[0].mxu0
    %1366 = vdwg.mxu0
    %vm1367 = vcmp.gt.f32.partialorder %v1362, 0.0
    %v1368 = vmul.f32 %v1362, 0.01
    %v1369 = vsel %vm1367, %v1362, %v1368
    %v1370 = vpack.c.bf16 %v1369, %v1369
    %v1371 = vld [vmem:[%s9] sm:$0xf]
    %v1372 = vld [vmem:[%s9 + $0x4] sm:$0xf]
    %v1373 = vld [vmem:[%s9 + $0x8] sm:$0xf]
    %v1374 = vld [vmem:[%s9 + $0xc] sm:$0xf]
    %v1375 = vld [vmem:[%s9 + $0x10] sm:$0xf]
    %v1376 = vld [vmem:[%s9 + $0x14] sm:$0xf]
    %v1377 = vld [vmem:[%s9 + $0x18] sm:$0xf]
    %v1378 = vld [vmem:[%s9 + $0x1c] sm:$0xf]
    %v1379 = vld [vmem:[%s10] sm:$0x1]
    %v1381 = vlaneseq
    %v1382 = vshrl.u32 %v1381, 7
    %v1383 = vsub.s32 0, %v1382
    %v1384 = vrot.slane %v1379, %v1383
    %v1394 = vunpack.c.l.b16 %v1371
    %v1395 = vunpack.c.l.b16 %v1372
    %v1396 = vunpack.c.l.b16 %v1373
    %v1397 = vunpack.c.l.b16 %v1374
    %v1398 = vunpack.c.l.b16 %v1375
    %v1399 = vunpack.c.l.b16 %v1376
    %v1400 = vunpack.c.l.b16 %v1377
    %v1401 = vunpack.c.l.b16 %v1378
    %v1402 = vpack.c.b16 %v1395, %v1394
    %v1403 = vpack.c.b16 %v1397, %v1396
    %v1404 = vpack.c.b16 %v1399, %v1398
    %v1405 = vpack.c.b16 %v1401, %v1400
    %vm1410 = vcmask 523264
    %v1412 = vsel %vm1410, %v1370, 0
    %1414 = vmatprep.subr.bf16.mxu0 0
    %1415 = vmatpush1.bf16.msra.mxu0 %v1402
    %1416 = vmatprep.subr.bf16.mxu0 0
    %1417 = vmatpush1.bf16.msra.mxu0 %v1403
    %1418 = vmatprep.subr.bf16.mxu0 0
    %1419 = vmatpush1.bf16.msra.mxu0 %v1404
    %1420 = vmatprep.subr.bf16.mxu0 0
    %1421 = vmatpush1.bf16.msra.mxu0 %v1405
    %1422 = vmatprep.subr.bf16.mxu0 0
    %1423 = vmatpush1.bf16.msra.mxu0 0
    %1424 = vmatprep.subr.bf16.mxu0 0
    %1425 = vmatpush1.bf16.msra.mxu0 0
    %1426 = vmatprep.subr.bf16.mxu0 0
    %1427 = vmatpush1.bf16.msra.mxu0 0
    %1428 = vmatprep.subr.bf16.mxu0 0
    %1429 = vmatpush1.bf16.msra.mxu0 0
    %1430 = vmatprep.subr.bf16.mxu0 0
    %1431 = vmatpush1.bf16.msra.mxu0 0
    %1432 = vmatprep.subr.bf16.mxu0 0
    %1433 = vmatpush1.bf16.msra.mxu0 0
    %1434 = vmatprep.subr.bf16.mxu0 0
    %1435 = vmatpush1.bf16.msra.mxu0 0
    %1436 = vmatprep.subr.bf16.mxu0 0
    %1437 = vmatpush1.bf16.msra.mxu0 0
    %1438 = vmatprep.subr.bf16.mxu0 0
    %1439 = vmatpush1.bf16.msra.mxu0 0
    %1440 = vmatprep.subr.bf16.mxu0 0
    %1441 = vmatpush1.bf16.msra.mxu0 0
    %1442 = vmatprep.subr.bf16.mxu0 0
    %1443 = vmatpush1.bf16.msra.mxu0 0
    %1444 = vmatprep.subr.bf16.mxu0 0
    %1445 = vmatpush1.bf16.msra.mxu0 0
    %1446 = vmatprep.mubr.bf16.mxu0 0
    %1447 = vmatmul.mubr.bf16.gmra.mrb[0].mxu0 %v1412
    %v1448 = vpop.f32.mrb[0].mxu0
    %v1449 = vadd.f32 %v1384, %v1448
    %v1450 = vpop.f32.mrb[0].mxu0
    %v1451 = vpop.f32.mrb[0].mxu0
    %v1452 = vpop.f32.mrb[0].mxu0
    %1453 = vdwg.mxu0
    %vm1454 = vcmp.gt.f32.partialorder %v1449, 0.0
    %v1455 = vmul.f32 %v1449, 0.01
    %v1456 = vsel %vm1454, %v1449, %v1455
    %v1457 = vpack.c.bf16 %v1456, %v1456
    %v1458 = vld [vmem:[%s11] sm:$0xf]
    %v1459 = vld [vmem:[%s11 + $0x4] sm:$0xf]
    %v1460 = vld [vmem:[%s11 + $0x8] sm:$0xf]
    %v1461 = vld [vmem:[%s11 + $0xc] sm:$0xf]
    %v1462 = vld [vmem:[#allocation2] sm:$0x1]
    %v1464 = vlaneseq
    %v1465 = vshrl.u32 %v1464, 7
    %v1466 = vsub.s32 0, %v1465
    %v1467 = vrot.slane %v1462, %v1466
    %v1473 = vunpack.c.l.b16 %v1458
    %v1474 = vunpack.c.l.b16 %v1459
    %v1475 = vunpack.c.l.b16 %v1460
    %v1476 = vunpack.c.l.b16 %v1461
    %v1477 = vpack.c.b16 %v1474, %v1473
    %v1478 = vpack.c.b16 %v1476, %v1475
    %vm1481 = vcmask 261120
    %v1483 = vsel %vm1481, %v1457, 0
    %1485 = vmatprep.subr.bf16.mxu0 0
    %1486 = vmatpush1.bf16.msra.mxu0 %v1477
    %1487 = vmatprep.subr.bf16.mxu0 0
    %1488 = vmatpush1.bf16.msra.mxu0 %v1478
    %1489 = vmatprep.subr.bf16.mxu0 0
    %1490 = vmatpush1.bf16.msra.mxu0 0
    %1491 = vmatprep.subr.bf16.mxu0 0
    %1492 = vmatpush1.bf16.msra.mxu0 0
    %1493 = vmatprep.subr.bf16.mxu0 0
    %1494 = vmatpush1.bf16.msra.mxu0 0
    %1495 = vmatprep.subr.bf16.mxu0 0
    %1496 = vmatpush1.bf16.msra.mxu0 0
    %1497 = vmatprep.subr.bf16.mxu0 0
    %1498 = vmatpush1.bf16.msra.mxu0 0
    %1499 = vmatprep.subr.bf16.mxu0 0
    %1500 = vmatpush1.bf16.msra.mxu0 0
    %1501 = vmatprep.subr.bf16.mxu0 0
    %1502 = vmatpush1.bf16.msra.mxu0 0
    %1503 = vmatprep.subr.bf16.mxu0 0
    %1504 = vmatpush1.bf16.msra.mxu0 0
    %1505 = vmatprep.subr.bf16.mxu0 0
    %1506 = vmatpush1.bf16.msra.mxu0 0
    %1507 = vmatprep.subr.bf16.mxu0 0
    %1508 = vmatpush1.bf16.msra.mxu0 0
    %1509 = vmatprep.subr.bf16.mxu0 0
    %1510 = vmatpush1.bf16.msra.mxu0 0
    %1511 = vmatprep.subr.bf16.mxu0 0
    %1512 = vmatpush1.bf16.msra.mxu0 0
    %1513 = vmatprep.subr.bf16.mxu0 0
    %1514 = vmatpush1.bf16.msra.mxu0 0
    %1515 = vmatprep.subr.bf16.mxu0 0
    %1516 = vmatpush1.bf16.msra.mxu0 0
    %1517 = vmatprep.mubr.bf16.mxu0 0
    %1518 = vmatmul.mubr.bf16.gmra.mrb[0].mxu0 %v1483
    %v1519 = vpop.f32.mrb[0].mxu0
    %v1520 = vadd.f32 %v1467, %v1519
    %v1521 = vpop.f32.mrb[0].mxu0
    %v1522 = vpop.f32.mrb[0].mxu0
    %v1523 = vpop.f32.mrb[0].mxu0
    %1524 = vdwg.mxu0
    %v1525 = vsub.f32 0.0, %v1520
    %v1526 = vmul.f32 %v1525, 1.442695
    %v1527 = vpow.pop %v1526
    %v1528 = vadd.f32 %v1527, 1.0
    %v1529 = vrcp.pop %v1528
    %vm1530 = vcmask 3072
    %1531 = vst.msk [vmem:[%s13] sm:$0xf] %vm1530, %v1529
    // Predicated region
    $region62: #{discriminator_audio_forward.1} parent=1 // pred_check
      _
    $region63: #{discriminator_audio_forward.1} parent=1 // pred_check_branch
      %1533 = sbr.rel (0) target = $region65
    $region64: #{discriminator_audio_forward.1} parent=1 // pred_region
      _
    $region65: #{discriminator_audio_forward.1} parent=1 // pred_fallthru
      _
    // Predicated region
    $region66: #{discriminator_audio_forward.1} parent=1 // pred_check
      _
    $region67: #{discriminator_audio_forward.1} parent=1 // pred_check_branch
      %1535 = sbr.rel (0) target = $region69
    $region68: #{discriminator_audio_forward.1} parent=1 // pred_region
      _
    $region69: #{discriminator_audio_forward.1} parent=1 // pred_fallthru
      _
    %1536 = vsyncpa [#allocation4], 1
    %1537 = vsyncpa [#allocation6], 1

// kernel: discriminator_audio_forward.1
$region0: #{discriminator_audio_forward.1}
  #allocation0 [shape = 'u32[]', space=smem, size = 0x4, offset = 0x4, fixed_abs, tag = 'smem constant byte address 0x4 - core index']
  #allocation1 [shape = 'u32[144,128]{1,0:T(1,128)}', space=vmem, size = 0x12000, scoped, tag = 'internal scratch']
  #allocation2 [shape = 'f32[1,1]{1,0:T(1,128)S(1)}', space=vmem, size = 0x200, scoped, tag = 'scoped memory for discriminator_audio_forward.1']
  %s0 = inlined_call_operand.vmem [shape: bf16[4,256], index: 0, kind: input, shape index: {}]
  %s1 = inlined_call_operand.hbm [shape: bf16[256,512], index: 1, kind: input, shape index: {}]
  %s2 = inlined_call_operand.vmem [shape: f32[1,512], index: 2, kind: input, shape index: {}]
  %s3 = inlined_call_operand.hbm [shape: bf16[512,256], index: 3, kind: input, shape index: {}]
  %s4 = inlined_call_operand.vmem [shape: f32[1,256], index: 4, kind: input, shape index: {}]
  %s5 = inlined_call_operand.vmem [shape: bf16[256,128], index: 5, kind: input, shape index: {}]
  %s6 = inlined_call_operand.vmem [shape: f32[1,128], index: 6, kind: input, shape index: {}]
  %s7 = inlined_call_operand.vmem [shape: bf16[128,64], index: 7, kind: input, shape index: {}]
  %s8 = inlined_call_operand.vmem [shape: f32[1,64], index: 8, kind: input, shape index: {}]
  %s9 = inlined_call_operand.vmem [shape: bf16[64,32], index: 9, kind: input, shape index: {}]
  %s10 = inlined_call_operand.vmem [shape: f32[1,32], index: 10, kind: input, shape index: {}]
  %s11 = inlined_call_operand.vmem [shape: bf16[32,1], index: 11, kind: input, shape index: {}]
  %s12 = inlined_call_operand.<no memory space> [shape: f32[1,1], index: 12, kind: input, shape index: {}]
  %s13 = inlined_call_operand.vmem [shape: f32[4,1], index: 13, kind: output, shape index: {}]
  %s14 = sld [smem:[#allocation0]]
  $region70: #{discriminator_audio_forward.1} parent=0
    _
  %s16 = ssub.s32 1, %s14
  %s17 = scalar_select 0, %s16, %s14
  %v18 = vstv %s12
  %19 = vst [vmem:[#allocation2] sm:$0x1] %v18
  $region1: #{discriminator_audio_forward.1} parent=0
    #allocation3 [shape = 'u8[262144]{0}', space=vmem, size = 0x40000, scoped, tag = 'input window, operand 1, single buffered']
    #allocation4 [shape = 's32[1]{0}', space=sflag, size = 0x4, scoped, tag = 'scoped memory for discriminator_audio_forward.1']
    #allocation5 [shape = 'u8[262144]{0}', space=vmem, size = 0x40000, scoped, tag = 'input window, operand 3, single buffered']
    #allocation6 [shape = 's32[1]{0}', space=sflag, size = 0x4, scoped, tag = 'scoped memory for discriminator_audio_forward.1']
    %20 = vsyncpa [#allocation4], 0
    %21 = vsyncpa [#allocation6], 0
    // Predicated region
    $region2: #{discriminator_audio_forward.1} parent=1 // pred_check
      _
    $region3: #{discriminator_audio_forward.1} parent=1 // pred_check_branch
      %23 = sbr.rel (0) target = $region5
    $region4: #{discriminator_audio_forward.1} parent=1 // pred_region
      _
    $region5: #{discriminator_audio_forward.1} parent=1 // pred_fallthru
      _
    // Predicated region
    $region6: #{discriminator_audio_forward.1} parent=1 // pred_check
      _
    $region7: #{discriminator_audio_forward.1} parent=1 // pred_check_branch
      %25 = sbr.rel (0) target = $region9
    $region8: #{discriminator_audio_forward.1} parent=1 // pred_region
      %s27 = ssub.s32 8192, 8192
      %28 = vsyncadd [#allocation4], %s27
      %s29 = sshll.u32 [#allocation3], 4
      %s30 = int_to_ptr.vmem [resolvable:$true] %s29
      %35 = dma.hbm_to_vmem [thread:$0]  %s1, 8192, %s30, [#allocation4], 256, 256, 16
    $region9: #{discriminator_audio_forward.1} parent=1 // pred_fallthru
      _
    // Predicated region
    $region10: #{discriminator_audio_forward.1} parent=1 // pred_check
      _
    $region11: #{discriminator_audio_forward.1} parent=1 // pred_check_branch
      %37 = sbr.rel (0) target = $region13
    $region12: #{discriminator_audio_forward.1} parent=1 // pred_region
      _
    $region13: #{discriminator_audio_forward.1} parent=1 // pred_fallthru
      _
    // Predicated region
    $region14: #{discriminator_audio_forward.1} parent=1 // pred_check
      _
    $region15: #{discriminator_audio_forward.1} parent=1 // pred_check_branch
      %39 = sbr.rel (0) target = $region17
    $region16: #{discriminator_audio_forward.1} parent=1 // pred_region
      %s41 = ssub.s32 8192, 8192
      %42 = vsyncadd [#allocation6], %s41
      %s43 = sshll.u32 [#allocation5], 4
      %s44 = int_to_ptr.vmem [resolvable:$true] %s43
      %49 = dma.hbm_to_vmem [thread:$0]  %s3, 8192, %s44, [#allocation6], 128, 128, 8
    $region17: #{discriminator_audio_forward.1} parent=1 // pred_fallthru
      _
    // Predicated region
    $region18: #{discriminator_audio_forward.1} parent=1 // pred_check
      _
    $region19: #{discriminator_audio_forward.1} parent=1 // pred_check_branch
      %51 = sbr.rel (0) target = $region21
    $region20: #{discriminator_audio_forward.1} parent=1 // pred_region
      _
    $region21: #{discriminator_audio_forward.1} parent=1 // pred_fallthru
      _
    // Predicated region
    $region22: #{discriminator_audio_forward.1} parent=1 // pred_check
      _
    $region23: #{discriminator_audio_forward.1} parent=1 // pred_check_branch
      %53 = sbr.rel (0) target = $region25
    $region24: #{discriminator_audio_forward.1} parent=1 // pred_region
      _
    $region25: #{discriminator_audio_forward.1} parent=1 // pred_fallthru
      _
    // Predicated region
    $region26: #{discriminator_audio_forward.1} parent=1 // pred_check
      _
    $region27: #{discriminator_audio_forward.1} parent=1 // pred_check_branch
      %55 = sbr.rel (0) target = $region29
    $region28: #{discriminator_audio_forward.1} parent=1 // pred_region
      _
    $region29: #{discriminator_audio_forward.1} parent=1 // pred_fallthru
      _
    // Predicated region
    $region30: #{discriminator_audio_forward.1} parent=1 // pred_check
      _
    $region31: #{discriminator_audio_forward.1} parent=1 // pred_check_branch
      %57 = sbr.rel (0) target = $region33
    $region32: #{discriminator_audio_forward.1} parent=1 // pred_region
      _
    $region33: #{discriminator_audio_forward.1} parent=1 // pred_fallthru
      _
    // Predicated region
    $region34: #{discriminator_audio_forward.1} parent=1 // pred_check
      _
    $region35: #{discriminator_audio_forward.1} parent=1 // pred_check_branch
      %59 = sbr.rel (0) target = $region37
    $region36: #{discriminator_audio_forward.1} parent=1 // pred_region
      _
    $region37: #{discriminator_audio_forward.1} parent=1 // pred_fallthru
      _
    // Predicated region
    $region38: #{discriminator_audio_forward.1} parent=1 // pred_check
      _
    $region39: #{discriminator_audio_forward.1} parent=1 // pred_check_branch
      %61 = sbr.rel (0) target = $region41
    $region40: #{discriminator_audio_forward.1} parent=1 // pred_region
      _
    $region41: #{discriminator_audio_forward.1} parent=1 // pred_fallthru
      _
    // Predicated region
    $region42: #{discriminator_audio_forward.1} parent=1 // pred_check
      _
    $region43: #{discriminator_audio_forward.1} parent=1 // pred_check_branch
      %63 = sbr.rel (0) target = $region45
    $region44: #{discriminator_audio_forward.1} parent=1 // pred_region
      _
    $region45: #{discriminator_audio_forward.1} parent=1 // pred_fallthru
      _
    // Predicated region
    $region46: #{discriminator_audio_forward.1} parent=1 // pred_check
      _
    $region47: #{discriminator_audio_forward.1} parent=1 // pred_check_branch
      %65 = sbr.rel (0) target = $region49
    $region48: #{discriminator_audio_forward.1} parent=1 // pred_region
      _
    $region49: #{discriminator_audio_forward.1} parent=1 // pred_fallthru
      _
    // Predicated region
    $region50: #{discriminator_audio_forward.1} parent=1 // pred_check
      _
    $region51: #{discriminator_audio_forward.1} parent=1 // pred_check_branch
      %67 = sbr.rel (0) target = $region53
    $region52: #{discriminator_audio_forward.1} parent=1 // pred_region
      _
    $region53: #{discriminator_audio_forward.1} parent=1 // pred_fallthru
      _
    // Predicated region
    $region54: #{discriminator_audio_forward.1} parent=1 // pred_check
      _
    $region55: #{discriminator_audio_forward.1} parent=1 // pred_check_branch
      %69 = sbr.rel (0) target = $region57
    $region56: #{discriminator_audio_forward.1} parent=1 // pred_region
      %70 = dma.done [#allocation4], 8192
    $region57: #{discriminator_audio_forward.1} parent=1 // pred_fallthru
      _
    // Predicated region
    $region58: #{discriminator_audio_forward.1} parent=1 // pred_check
      _
    $region59: #{discriminator_audio_forward.1} parent=1 // pred_check_branch
      %72 = sbr.rel (0) target = $region61
    $region60: #{discriminator_audio_forward.1} parent=1 // pred_region
      %73 = dma.done [#allocation6], 8192
    $region61: #{discriminator_audio_forward.1} parent=1 // pred_fallthru
      _
    %v75 = vld [vmem:[%s0] sm:$0xf]
    %v76 = vld [vmem:[#allocation3] sm:$0xff]
    %v77 = vld [vmem:[#allocation3 + $0x8] sm:$0xff]
    %v78 = vld [vmem:[#allocation3 + $0x10] sm:$0xff]
    %v79 = vld [vmem:[#allocation3 + $0x18] sm:$0xff]
    %v80 = vld [vmem:[#allocation3 + $0x20] sm:$0xff]
    %v81 = vld [vmem:[#allocation3 + $0x28] sm:$0xff]
    %v82 = vld [vmem:[#allocation3 + $0x30] sm:$0xff]
    %v83 = vld [vmem:[#allocation3 + $0x38] sm:$0xff]
    %v84 = vld [vmem:[#allocation3 + $0x40] sm:$0xff]
    %v85 = vld [vmem:[#allocation3 + $0x48] sm:$0xff]
    %v86 = vld [vmem:[#allocation3 + $0x50] sm:$0xff]
    %v87 = vld [vmem:[#allocation3 + $0x58] sm:$0xff]
    %v88 = vld [vmem:[#allocation3 + $0x60] sm:$0xff]
    %v89 = vld [vmem:[#allocation3 + $0x68] sm:$0xff]
    %v90 = vld [vmem:[#allocation3 + $0x70] sm:$0xff]
    %v91 = vld [vmem:[#allocation3 + $0x78] sm:$0xff]
    %v92 = vld [vmem:[#allocation3 + $0x80] sm:$0xff]
    %v93 = vld [vmem:[#allocation3 + $0x88] sm:$0xff]
    %v94 = vld [vmem:[#allocation3 + $0x90] sm:$0xff]
    %v95 = vld [vmem:[#allocation3 + $0x98] sm:$0xff]
    %v96 = vld [vmem:[#allocation3 + $0xa0] sm:$0xff]
    %v97 = vld [vmem:[#allocation3 + $0xa8] sm:$0xff]
    %v98 = vld [vmem:[#allocation3 + $0xb0] sm:$0xff]
    %v99 = vld [vmem:[#allocation3 + $0xb8] sm:$0xff]
    %v100 = vld [vmem:[#allocation3 + $0xc0] sm:$0xff]
    %v101 = vld [vmem:[#allocation3 + $0xc8] sm:$0xff]
    %v102 = vld [vmem:[#allocation3 + $0xd0] sm:$0xff]
    %v103 = vld [vmem:[#allocation3 + $0xd8] sm:$0xff]
    %v104 = vld [vmem:[#allocation3 + $0xe0] sm:$0xff]
    %v105 = vld [vmem:[#allocation3 + $0xe8] sm:$0xff]
    %v106 = vld [vmem:[#allocation3 + $0xf0] sm:$0xff]
    %v107 = vld [vmem:[#allocation3 + $0xf8] sm:$0xff]
    %v108 = vld [vmem:[#allocation3 + $0x100] sm:$0xff]
    %v109 = vld [vmem:[#allocation3 + $0x108] sm:$0xff]
    %v110 = vld [vmem:[#allocation3 + $0x110] sm:$0xff]
    %v111 = vld [vmem:[#allocation3 + $0x118] sm:$0xff]
    %v112 = vld [vmem:[#allocation3 + $0x120] sm:$0xff]
    %v113 = vld [vmem:[#allocation3 + $0x128] sm:$0xff]
    %v114 = vld [vmem:[#allocation3 + $0x130] sm:$0xff]
    %v115 = vld [vmem:[#allocation3 + $0x138] sm:$0xff]
    %v116 = vld [vmem:[#allocation3 + $0x140] sm:$0xff]
    %v117 = vld [vmem:[#allocation3 + $0x148] sm:$0xff]
    %v118 = vld [vmem:[#allocation3 + $0x150] sm:$0xff]
    %v119 = vld [vmem:[#allocation3 + $0x158] sm:$0xff]
    %v120 = vld [vmem:[#allocation3 + $0x160] sm:$0xff]
    %v121 = vld [vmem:[#allocation3 + $0x168] sm:$0xff]
    %v122 = vld [vmem:[#allocation3 + $0x170] sm:$0xff]
    %v123 = vld [vmem:[#allocation3 + $0x178] sm:$0xff]
    %v124 = vld [vmem:[#allocation3 + $0x180] sm:$0xff]
    %v125 = vld [vmem:[#allocation3 + $0x188] sm:$0xff]
    %v126 = vld [vmem:[#allocation3 + $0x190] sm:$0xff]
    %v127 = vld [vmem:[#allocation3 + $0x198] sm:$0xff]
    %v128 = vld [vmem:[#allocation3 + $0x1a0] sm:$0xff]
    %v129 = vld [vmem:[#allocation3 + $0x1a8] sm:$0xff]
    %v130 = vld [vmem:[#allocation3 + $0x1b0] sm:$0xff]
    %v131 = vld [vmem:[#allocation3 + $0x1b8] sm:$0xff]
    %v132 = vld [vmem:[#allocation3 + $0x1c0] sm:$0xff]
    %v133 = vld [vmem:[#allocation3 + $0x1c8] sm:$0xff]
    %v134 = vld [vmem:[#allocation3 + $0x1d0] sm:$0xff]
    %v135 = vld [vmem:[#allocation3 + $0x1d8] sm:$0xff]
    %v136 = vld [vmem:[#allocation3 + $0x1e0] sm:$0xff]
    %v137 = vld [vmem:[#allocation3 + $0x1e8] sm:$0xff]
    %v138 = vld [vmem:[#allocation3 + $0x1f0] sm:$0xff]
    %v139 = vld [vmem:[#allocation3 + $0x1f8] sm:$0xff]
    %v140 = vld [vmem:[%s2] sm:$0xf]
    %v142 = vlaneseq
    %v143 = vshrl.u32 %v142, 7
    %v144 = vsub.s32 0, %v143
    %v145 = vrot.slane %v140, %v144
    %v146 = vlaneseq
    %v147 = vshrl.u32 %v146, 7
    %v148 = vsub.s32 1, %v147
    %v149 = vrot.slane %v140, %v148
    %v150 = vlaneseq
    %v151 = vshrl.u32 %v150, 7
    %v152 = vsub.s32 2, %v151
    %v153 = vrot.slane %v140, %v152
    %v154 = vlaneseq
    %v155 = vshrl.u32 %v154, 7
    %v156 = vsub.s32 3, %v155
    %v157 = vrot.slane %v140, %v156
    %v164 = vunpack.c.l.s4 1983009808
    %v165 = vunpack.c.0.s8 %v164
    %v166 = vlaneseq
    %v167 = vshrl.u32 %v166, 7
    %v168 = vsub.s32 %v165, %v167
    %v169 = vrot.slane %v75, %v168
    %v170 = vcombine.high %v169, %v169
    %v237 = vunpack.c.l.b16 %v76
    %v238 = vunpack.c.h.b16 %v76
    %v239 = vunpack.c.l.b16 %v77
    %v240 = vunpack.c.h.b16 %v77
    %v241 = vunpack.c.l.b16 %v78
    %v242 = vunpack.c.h.b16 %v78
    %v243 = vunpack.c.l.b16 %v79
    %v244 = vunpack.c.h.b16 %v79
    %v245 = vunpack.c.l.b16 %v80
    %v246 = vunpack.c.h.b16 %v80
    %v247 = vunpack.c.l.b16 %v81
    %v248 = vunpack.c.h.b16 %v81
    %v249 = vunpack.c.l.b16 %v82
    %v250 = vunpack.c.h.b16 %v82
    %v251 = vunpack.c.l.b16 %v83
    %v252 = vunpack.c.h.b16 %v83
    %v253 = vunpack.c.l.b16 %v84
    %v254 = vunpack.c.h.b16 %v84
    %v255 = vunpack.c.l.b16 %v85
    %v256 = vunpack.c.h.b16 %v85
    %v257 = vunpack.c.l.b16 %v86
    %v258 = vunpack.c.h.b16 %v86
    %v259 = vunpack.c.l.b16 %v87
    %v260 = vunpack.c.h.b16 %v87
    %v261 = vunpack.c.l.b16 %v88
    %v262 = vunpack.c.h.b16 %v88
    %v263 = vunpack.c.l.b16 %v89
    %v264 = vunpack.c.h.b16 %v89
    %v265 = vunpack.c.l.b16 %v90
    %v266 = vunpack.c.h.b16 %v90
    %v267 = vunpack.c.l.b16 %v91
    %v268 = vunpack.c.h.b16 %v91
    %v269 = vunpack.c.l.b16 %v92
    %v270 = vunpack.c.h.b16 %v92
    %v271 = vunpack.c.l.b16 %v93
    %v272 = vunpack.c.h.b16 %v93
    %v273 = vunpack.c.l.b16 %v94
    %v274 = vunpack.c.h.b16 %v94
    %v275 = vunpack.c.l.b16 %v95
    %v276 = vunpack.c.h.b16 %v95
    %v277 = vunpack.c.l.b16 %v96
    %v278 = vunpack.c.h.b16 %v96
    %v279 = vunpack.c.l.b16 %v97
    %v280 = vunpack.c.h.b16 %v97
    %v281 = vunpack.c.l.b16 %v98
    %v282 = vunpack.c.h.b16 %v98
    %v283 = vunpack.c.l.b16 %v99
    %v284 = vunpack.c.h.b16 %v99
    %v285 = vunpack.c.l.b16 %v100
    %v286 = vunpack.c.h.b16 %v100
    %v287 = vunpack.c.l.b16 %v101
    %v288 = vunpack.c.h.b16 %v101
    %v289 = vunpack.c.l.b16 %v102
    %v290 = vunpack.c.h.b16 %v102
    %v291 = vunpack.c.l.b16 %v103
    %v292 = vunpack.c.h.b16 %v103
    %v293 = vunpack.c.l.b16 %v104
    %v294 = vunpack.c.h.b16 %v104
    %v295 = vunpack.c.l.b16 %v105
    %v296 = vunpack.c.h.b16 %v105
    %v297 = vunpack.c.l.b16 %v106
    %v298 = vunpack.c.h.b16 %v106
    %v299 = vunpack.c.l.b16 %v107
    %v300 = vunpack.c.h.b16 %v107
    %v301 = vunpack.c.l.b16 %v108
    %v302 = vunpack.c.h.b16 %v108
    %v303 = vunpack.c.l.b16 %v109
    %v304 = vunpack.c.h.b16 %v109
    %v305 = vunpack.c.l.b16 %v110
    %v306 = vunpack.c.h.b16 %v110
    %v307 = vunpack.c.l.b16 %v111
    %v308 = vunpack.c.h.b16 %v111
    %v309 = vunpack.c.l.b16 %v112
    %v310 = vunpack.c.h.b16 %v112
    %v311 = vunpack.c.l.b16 %v113
    %v312 = vunpack.c.h.b16 %v113
    %v313 = vunpack.c.l.b16 %v114
    %v314 = vunpack.c.h.b16 %v114
    %v315 = vunpack.c.l.b16 %v115
    %v316 = vunpack.c.h.b16 %v115
    %v317 = vunpack.c.l.b16 %v116
    %v318 = vunpack.c.h.b16 %v116
    %v319 = vunpack.c.l.b16 %v117
    %v320 = vunpack.c.h.b16 %v117
    %v321 = vunpack.c.l.b16 %v118
    %v322 = vunpack.c.h.b16 %v118
    %v323 = vunpack.c.l.b16 %v119
    %v324 = vunpack.c.h.b16 %v119
    %v325 = vunpack.c.l.b16 %v120
    %v326 = vunpack.c.h.b16 %v120
    %v327 = vunpack.c.l.b16 %v121
    %v328 = vunpack.c.h.b16 %v121
    %v329 = vunpack.c.l.b16 %v122
    %v330 = vunpack.c.h.b16 %v122
    %v331 = vunpack.c.l.b16 %v123
    %v332 = vunpack.c.h.b16 %v123
    %v333 = vunpack.c.l.b16 %v124
    %v334 = vunpack.c.h.b16 %v124
    %v335 = vunpack.c.l.b16 %v125
    %v336 = vunpack.c.h.b16 %v125
    %v337 = vunpack.c.l.b16 %v126
    %v338 = vunpack.c.h.b16 %v126
    %v339 = vunpack.c.l.b16 %v127
    %v340 = vunpack.c.h.b16 %v127
    %v341 = vunpack.c.l.b16 %v128
    %v342 = vunpack.c.h.b16 %v128
    %v343 = vunpack.c.l.b16 %v129
    %v344 = vunpack.c.h.b16 %v129
    %v345 = vunpack.c.l.b16 %v130
    %v346 = vunpack.c.h.b16 %v130
    %v347 = vunpack.c.l.b16 %v131
    %v348 = vunpack.c.h.b16 %v131
    %v349 = vunpack.c.l.b16 %v132
    %v350 = vunpack.c.h.b16 %v132
    %v351 = vunpack.c.l.b16 %v133
    %v352 = vunpack.c.h.b16 %v133
    %v353 = vunpack.c.l.b16 %v134
    %v354 = vunpack.c.h.b16 %v134
    %v355 = vunpack.c.l.b16 %v135
    %v356 = vunpack.c.h.b16 %v135
    %v357 = vunpack.c.l.b16 %v136
    %v358 = vunpack.c.h.b16 %v136
    %v359 = vunpack.c.l.b16 %v137
    %v360 = vunpack.c.h.b16 %v137
    %v361 = vunpack.c.l.b16 %v138
    %v362 = vunpack.c.h.b16 %v138
    %v363 = vunpack.c.l.b16 %v139
    %v364 = vunpack.c.h.b16 %v139
    %v365 = vpack.c.b16 %v241, %v237
    %v366 = vpack.c.b16 %v242, %v238
    %v367 = vpack.c.b16 %v243, %v239
    %v368 = vpack.c.b16 %v244, %v240
    %v369 = vpack.c.b16 %v249, %v245
    %v370 = vpack.c.b16 %v250, %v246
    %v371 = vpack.c.b16 %v251, %v247
    %v372 = vpack.c.b16 %v252, %v248
    %v373 = vpack.c.b16 %v257, %v253
    %v374 = vpack.c.b16 %v258, %v254
    %v375 = vpack.c.b16 %v259, %v255
    %v376 = vpack.c.b16 %v260, %v256
    %v377 = vpack.c.b16 %v265, %v261
    %v378 = vpack.c.b16 %v266, %v262
    %v379 = vpack.c.b16 %v267, %v263
    %v380 = vpack.c.b16 %v268, %v264
    %v381 = vpack.c.b16 %v273, %v269
    %v382 = vpack.c.b16 %v274, %v270
    %v383 = vpack.c.b16 %v275, %v271
    %v384 = vpack.c.b16 %v276, %v272
    %v385 = vpack.c.b16 %v281, %v277
    %v386 = vpack.c.b16 %v282, %v278
    %v387 = vpack.c.b16 %v283, %v279
    %v388 = vpack.c.b16 %v284, %v280
    %v389 = vpack.c.b16 %v289, %v285
    %v390 = vpack.c.b16 %v290, %v286
    %v391 = vpack.c.b16 %v291, %v287
    %v392 = vpack.c.b16 %v292, %v288
    %v393 = vpack.c.b16 %v297, %v293
    %v394 = vpack.c.b16 %v298, %v294
    %v395 = vpack.c.b16 %v299, %v295
    %v396 = vpack.c.b16 %v300, %v296
    %v397 = vpack.c.b16 %v305, %v301
    %v398 = vpack.c.b16 %v306, %v302
    %v399 = vpack.c.b16 %v307, %v303
    %v400 = vpack.c.b16 %v308, %v304
    %v401 = vpack.c.b16 %v313, %v309
    %v402 = vpack.c.b16 %v314, %v310
    %v403 = vpack.c.b16 %v315, %v311
    %v404 = vpack.c.b16 %v316, %v312
    %v405 = vpack.c.b16 %v321, %v317
    %v406 = vpack.c.b16 %v322, %v318
    %v407 = vpack.c.b16 %v323, %v319
    %v408 = vpack.c.b16 %v324, %v320
    %v409 = vpack.c.b16 %v329, %v325
    %v410 = vpack.c.b16 %v330, %v326
    %v411 = vpack.c.b16 %v331, %v327
    %v412 = vpack.c.b16 %v332, %v328
    %v413 = vpack.c.b16 %v337, %v333
    %v414 = vpack.c.b16 %v338, %v334
    %v415 = vpack.c.b16 %v339, %v335
    %v416 = vpack.c.b16 %v340, %v336
    %v417 = vpack.c.b16 %v345, %v341
    %v418 = vpack.c.b16 %v346, %v342
    %v419 = vpack.c.b16 %v347, %v343
    %v420 = vpack.c.b16 %v348, %v344
    %v421 = vpack.c.b16 %v353, %v349
    %v422 = vpack.c.b16 %v354, %v350
    %v423 = vpack.c.b16 %v355, %v351
    %v424 = vpack.c.b16 %v356, %v352
    %v425 = vpack.c.b16 %v361, %v357
    %v426 = vpack.c.b16 %v362, %v358
    %v427 = vpack.c.b16 %v363, %v359
    %v428 = vpack.c.b16 %v364, %v360
    %493 = vmatprep.subr.bf16.mxu0 %v366
    %494 = vmatpush1.bf16.msra.mxu0 %v365
    %495 = vmatprep.subr.bf16.mxu0 %v370
    %496 = vmatpush1.bf16.msra.mxu0 %v369
    %497 = vmatprep.subr.bf16.mxu0 %v374
    %498 = vmatpush1.bf16.msra.mxu0 %v373
    %499 = vmatprep.subr.bf16.mxu0 %v378
    %500 = vmatpush1.bf16.msra.mxu0 %v377
    %501 = vmatprep.subr.bf16.mxu0 %v382
    %502 = vmatpush1.bf16.msra.mxu0 %v381
    %503 = vmatprep.subr.bf16.mxu0 %v386
    %504 = vmatpush1.bf16.msra.mxu0 %v385
    %505 = vmatprep.subr.bf16.mxu0 %v390
    %506 = vmatpush1.bf16.msra.mxu0 %v389
    %507 = vmatprep.subr.bf16.mxu0 %v394
    %508 = vmatpush1.bf16.msra.mxu0 %v393
    %509 = vmatprep.subr.bf16.mxu0 %v398
    %510 = vmatpush1.bf16.msra.mxu0 %v397
    %511 = vmatprep.subr.bf16.mxu0 %v402
    %512 = vmatpush1.bf16.msra.mxu0 %v401
    %513 = vmatprep.subr.bf16.mxu0 %v406
    %514 = vmatpush1.bf16.msra.mxu0 %v405
    %515 = vmatprep.subr.bf16.mxu0 %v410
    %516 = vmatpush1.bf16.msra.mxu0 %v409
    %517 = vmatprep.subr.bf16.mxu0 %v414
    %518 = vmatpush1.bf16.msra.mxu0 %v413
    %519 = vmatprep.subr.bf16.mxu0 %v418
    %520 = vmatpush1.bf16.msra.mxu0 %v417
    %521 = vmatprep.subr.bf16.mxu0 %v422
    %522 = vmatpush1.bf16.msra.mxu0 %v421
    %523 = vmatprep.subr.bf16.mxu0 %v426
    %524 = vmatpush1.bf16.msra.mxu0 %v425
    %525 = vmatprep.mubr.bf16.mxu0 %v170
    %526 = vmatmul.mubr.bf16.gmra.mrb[0].mxu0 %v169
    %v527 = vpop.f32.mrb[0].mxu0
    %v528 = vadd.f32 %v145, %v527
    %v529 = vpop.f32.mrb[0].mxu0
    %v530 = vadd.f32 %v149, %v529
    %v531 = vpop.f32.mrb[0].mxu0
    %v532 = vpop.f32.mrb[0].mxu0
    %533 = vdwg.mxu0
    %534 = vmatprep.subr.bf16.mxu0 %v368
    %535 = vmatpush1.bf16.msra.mxu0 %v367
    %536 = vmatprep.subr.bf16.mxu0 %v372
    %537 = vmatpush1.bf16.msra.mxu0 %v371
    %538 = vmatprep.subr.bf16.mxu0 %v376
    %539 = vmatpush1.bf16.msra.mxu0 %v375
    %540 = vmatprep.subr.bf16.mxu0 %v380
    %541 = vmatpush1.bf16.msra.mxu0 %v379
    %542 = vmatprep.subr.bf16.mxu0 %v384
    %543 = vmatpush1.bf16.msra.mxu0 %v383
    %544 = vmatprep.subr.bf16.mxu0 %v388
    %545 = vmatpush1.bf16.msra.mxu0 %v387
    %546 = vmatprep.subr.bf16.mxu0 %v392
    %547 = vmatpush1.bf16.msra.mxu0 %v391
    %548 = vmatprep.subr.bf16.mxu0 %v396
    %549 = vmatpush1.bf16.msra.mxu0 %v395
    %550 = vmatprep.subr.bf16.mxu0 %v400
    %551 = vmatpush1.bf16.msra.mxu0 %v399
    %552 = vmatprep.subr.bf16.mxu0 %v404
    %553 = vmatpush1.bf16.msra.mxu0 %v403
    %554 = vmatprep.subr.bf16.mxu0 %v408
    %555 = vmatpush1.bf16.msra.mxu0 %v407
    %556 = vmatprep.subr.bf16.mxu0 %v412
    %557 = vmatpush1.bf16.msra.mxu0 %v411
    %558 = vmatprep.subr.bf16.mxu0 %v416
    %559 = vmatpush1.bf16.msra.mxu0 %v415
    %560 = vmatprep.subr.bf16.mxu0 %v420
    %561 = vmatpush1.bf16.msra.mxu0 %v419
    %562 = vmatprep.subr.bf16.mxu0 %v424
    %563 = vmatpush1.bf16.msra.mxu0 %v423
    %564 = vmatprep.subr.bf16.mxu0 %v428
    %565 = vmatpush1.bf16.msra.mxu0 %v427
    %566 = vmatprep.mubr.bf16.mxu0 %v170
    %567 = vmatmul.mubr.bf16.gmra.mrb[0].mxu0 %v169
    %v568 = vpop.f32.mrb[0].mxu0
    %v569 = vadd.f32 %v153, %v568
    %v570 = vpop.f32.mrb[0].mxu0
    %v571 = vadd.f32 %v157, %v570
    %v572 = vpop.f32.mrb[0].mxu0
    %v573 = vpop.f32.mrb[0].mxu0
    %574 = vdwg.mxu0
    %vm575 = vcmp.gt.f32.partialorder %v528, 0.0
    %vm576 = vcmp.gt.f32.partialorder %v530, 0.0
    %vm577 = vcmp.gt.f32.partialorder %v569, 0.0
    %vm578 = vcmp.gt.f32.partialorder %v571, 0.0
    %v579 = vmul.f32 %v528, 0.01
    %v580 = vmul.f32 %v530, 0.01
    %v581 = vmul.f32 %v569, 0.01
    %v582 = vmul.f32 %v571, 0.01
    %v583 = vsel %vm575, %v528, %v579
    %v584 = vsel %vm576, %v530, %v580
    %v585 = vsel %vm577, %v569, %v581
    %v586 = vsel %vm578, %v571, %v582
    %v587 = vpack.c.bf16 %v583, %v583
    %v588 = vpack.c.bf16 %v584, %v584
    %v589 = vpack.c.bf16 %v585, %v585
    %v590 = vpack.c.bf16 %v586, %v586
    %v591 = vld [vmem:[#allocation5] sm:$0xff]
    %v592 = vld [vmem:[#allocation5 + $0x8] sm:$0xff]
    %v593 = vld [vmem:[#allocation5 + $0x10] sm:$0xff]
    %v594 = vld [vmem:[#allocation5 + $0x18] sm:$0xff]
    %v595 = vld [vmem:[#allocation5 + $0x20] sm:$0xff]
    %v596 = vld [vmem:[#allocation5 + $0x28] sm:$0xff]
    %v597 = vld [vmem:[#allocation5 + $0x30] sm:$0xff]
    %v598 = vld [vmem:[#allocation5 + $0x38] sm:$0xff]
    %v599 = vld [vmem:[#allocation5 + $0x40] sm:$0xff]
    %v600 = vld [vmem:[#allocation5 + $0x48] sm:$0xff]
    %v601 = vld [vmem:[#allocation5 + $0x50] sm:$0xff]
    %v602 = vld [vmem:[#allocation5 + $0x58] sm:$0xff]
    %v603 = vld [vmem:[#allocation5 + $0x60] sm:$0xff]
    %v604 = vld [vmem:[#allocation5 + $0x68] sm:$0xff]
    %v605 = vld [vmem:[#allocation5 + $0x70] sm:$0xff]
    %v606 = vld [vmem:[#allocation5 + $0x78] sm:$0xff]
    %v607 = vld [vmem:[#allocation5 + $0x80] sm:$0xff]
    %v608 = vld [vmem:[#allocation5 + $0x88] sm:$0xff]
    %v609 = vld [vmem:[#allocation5 + $0x90] sm:$0xff]
    %v610 = vld [vmem:[#allocation5 + $0x98] sm:$0xff]
    %v611 = vld [vmem:[#allocation5 + $0xa0] sm:$0xff]
    %v612 = vld [vmem:[#allocation5 + $0xa8] sm:$0xff]
    %v613 = vld [vmem:[#allocation5 + $0xb0] sm:$0xff]
    %v614 = vld [vmem:[#allocation5 + $0xb8] sm:$0xff]
    %v615 = vld [vmem:[#allocation5 + $0xc0] sm:$0xff]
    %v616 = vld [vmem:[#allocation5 + $0xc8] sm:$0xff]
    %v617 = vld [vmem:[#allocation5 + $0xd0] sm:$0xff]
    %v618 = vld [vmem:[#allocation5 + $0xd8] sm:$0xff]
    %v619 = vld [vmem:[#allocation5 + $0xe0] sm:$0xff]
    %v620 = vld [vmem:[#allocation5 + $0xe8] sm:$0xff]
    %v621 = vld [vmem:[#allocation5 + $0xf0] sm:$0xff]
    %v622 = vld [vmem:[#allocation5 + $0xf8] sm:$0xff]
    %v623 = vld [vmem:[#allocation5 + $0x100] sm:$0xff]
    %v624 = vld [vmem:[#allocation5 + $0x108] sm:$0xff]
    %v625 = vld [vmem:[#allocation5 + $0x110] sm:$0xff]
    %v626 = vld [vmem:[#allocation5 + $0x118] sm:$0xff]
    %v627 = vld [vmem:[#allocation5 + $0x120] sm:$0xff]
    %v628 = vld [vmem:[#allocation5 + $0x128] sm:$0xff]
    %v629 = vld [vmem:[#allocation5 + $0x130] sm:$0xff]
    %v630 = vld [vmem:[#allocation5 + $0x138] sm:$0xff]
    %v631 = vld [vmem:[#allocation5 + $0x140] sm:$0xff]
    %v632 = vld [vmem:[#allocation5 + $0x148] sm:$0xff]
    %v633 = vld [vmem:[#allocation5 + $0x150] sm:$0xff]
    %v634 = vld [vmem:[#allocation5 + $0x158] sm:$0xff]
    %v635 = vld [vmem:[#allocation5 + $0x160] sm:$0xff]
    %v636 = vld [vmem:[#allocation5 + $0x168] sm:$0xff]
    %v637 = vld [vmem:[#allocation5 + $0x170] sm:$0xff]
    %v638 = vld [vmem:[#allocation5 + $0x178] sm:$0xff]
    %v639 = vld [vmem:[#allocation5 + $0x180] sm:$0xff]
    %v640 = vld [vmem:[#allocation5 + $0x188] sm:$0xff]
    %v641 = vld [vmem:[#allocation5 + $0x190] sm:$0xff]
    %v642 = vld [vmem:[#allocation5 + $0x198] sm:$0xff]
    %v643 = vld [vmem:[#allocation5 + $0x1a0] sm:$0xff]
    %v644 = vld [vmem:[#allocation5 + $0x1a8] sm:$0xff]
    %v645 = vld [vmem:[#allocation5 + $0x1b0] sm:$0xff]
    %v646 = vld [vmem:[#allocation5 + $0x1b8] sm:$0xff]
    %v647 = vld [vmem:[#allocation5 + $0x1c0] sm:$0xff]
    %v648 = vld [vmem:[#allocation5 + $0x1c8] sm:$0xff]
    %v649 = vld [vmem:[#allocation5 + $0x1d0] sm:$0xff]
    %v650 = vld [vmem:[#allocation5 + $0x1d8] sm:$0xff]
    %v651 = vld [vmem:[#allocation5 + $0x1e0] sm:$0xff]
    %v652 = vld [vmem:[#allocation5 + $0x1e8] sm:$0xff]
    %v653 = vld [vmem:[#allocation5 + $0x1f0] sm:$0xff]
    %v654 = vld [vmem:[#allocation5 + $0x1f8] sm:$0xff]
    %v655 = vld [vmem:[%s4] sm:$0x3]
    %v657 = vlaneseq
    %v658 = vshrl.u32 %v657, 7
    %v659 = vsub.s32 0, %v658
    %v660 = vrot.slane %v655, %v659
    %v661 = vlaneseq
    %v662 = vshrl.u32 %v661, 7
    %v663 = vsub.s32 1, %v662
    %v664 = vrot.slane %v655, %v663
    %v731 = vunpack.c.l.b16 %v591
    %v732 = vunpack.c.h.b16 %v591
    %v733 = vunpack.c.l.b16 %v592
    %v734 = vunpack.c.h.b16 %v592
    %v735 = vunpack.c.l.b16 %v593
    %v736 = vunpack.c.h.b16 %v593
    %v737 = vunpack.c.l.b16 %v594
    %v738 = vunpack.c.h.b16 %v594
    %v739 = vunpack.c.l.b16 %v595
    %v740 = vunpack.c.h.b16 %v595
    %v741 = vunpack.c.l.b16 %v596
    %v742 = vunpack.c.h.b16 %v596
    %v743 = vunpack.c.l.b16 %v597
    %v744 = vunpack.c.h.b16 %v597
    %v745 = vunpack.c.l.b16 %v598
    %v746 = vunpack.c.h.b16 %v598
    %v747 = vunpack.c.l.b16 %v599
    %v748 = vunpack.c.h.b16 %v599
    %v749 = vunpack.c.l.b16 %v600
    %v750 = vunpack.c.h.b16 %v600
    %v751 = vunpack.c.l.b16 %v601
    %v752 = vunpack.c.h.b16 %v601
    %v753 = vunpack.c.l.b16 %v602
    %v754 = vunpack.c.h.b16 %v602
    %v755 = vunpack.c.l.b16 %v603
    %v756 = vunpack.c.h.b16 %v603
    %v757 = vunpack.c.l.b16 %v604
    %v758 = vunpack.c.h.b16 %v604
    %v759 = vunpack.c.l.b16 %v605
    %v760 = vunpack.c.h.b16 %v605
    %v761 = vunpack.c.l.b16 %v606
    %v762 = vunpack.c.h.b16 %v606
    %v763 = vunpack.c.l.b16 %v607
    %v764 = vunpack.c.h.b16 %v607
    %v765 = vunpack.c.l.b16 %v608
    %v766 = vunpack.c.h.b16 %v608
    %v767 = vunpack.c.l.b16 %v609
    %v768 = vunpack.c.h.b16 %v609
    %v769 = vunpack.c.l.b16 %v610
    %v770 = vunpack.c.h.b16 %v610
    %v771 = vunpack.c.l.b16 %v611
    %v772 = vunpack.c.h.b16 %v611
    %v773 = vunpack.c.l.b16 %v612
    %v774 = vunpack.c.h.b16 %v612
    %v775 = vunpack.c.l.b16 %v613
    %v776 = vunpack.c.h.b16 %v613
    %v777 = vunpack.c.l.b16 %v614
    %v778 = vunpack.c.h.b16 %v614
    %v779 = vunpack.c.l.b16 %v615
    %v780 = vunpack.c.h.b16 %v615
    %v781 = vunpack.c.l.b16 %v616
    %v782 = vunpack.c.h.b16 %v616
    %v783 = vunpack.c.l.b16 %v617
    %v784 = vunpack.c.h.b16 %v617
    %v785 = vunpack.c.l.b16 %v618
    %v786 = vunpack.c.h.b16 %v618
    %v787 = vunpack.c.l.b16 %v619
    %v788 = vunpack.c.h.b16 %v619
    %v789 = vunpack.c.l.b16 %v620
    %v790 = vunpack.c.h.b16 %v620
    %v791 = vunpack.c.l.b16 %v621
    %v792 = vunpack.c.h.b16 %v621
    %v793 = vunpack.c.l.b16 %v622
    %v794 = vunpack.c.h.b16 %v622
    %v795 = vunpack.c.l.b16 %v623
    %v796 = vunpack.c.h.b16 %v623
    %v797 = vunpack.c.l.b16 %v624
    %v798 = vunpack.c.h.b16 %v624
    %v799 = vunpack.c.l.b16 %v625
    %v800 = vunpack.c.h.b16 %v625
    %v801 = vunpack.c.l.b16 %v626
    %v802 = vunpack.c.h.b16 %v626
    %v803 = vunpack.c.l.b16 %v627
    %v804 = vunpack.c.h.b16 %v627
    %v805 = vunpack.c.l.b16 %v628
    %v806 = vunpack.c.h.b16 %v628
    %v807 = vunpack.c.l.b16 %v629
    %v808 = vunpack.c.h.b16 %v629
    %v809 = vunpack.c.l.b16 %v630
    %v810 = vunpack.c.h.b16 %v630
    %v811 = vunpack.c.l.b16 %v631
    %v812 = vunpack.c.h.b16 %v631
    %v813 = vunpack.c.l.b16 %v632
    %v814 = vunpack.c.h.b16 %v632
    %v815 = vunpack.c.l.b16 %v633
    %v816 = vunpack.c.h.b16 %v633
    %v817 = vunpack.c.l.b16 %v634
    %v818 = vunpack.c.h.b16 %v634
    %v819 = vunpack.c.l.b16 %v635
    %v820 = vunpack.c.h.b16 %v635
    %v821 = vunpack.c.l.b16 %v636
    %v822 = vunpack.c.h.b16 %v636
    %v823 = vunpack.c.l.b16 %v637
    %v824 = vunpack.c.h.b16 %v637
    %v825 = vunpack.c.l.b16 %v638
    %v826 = vunpack.c.h.b16 %v638
    %v827 = vunpack.c.l.b16 %v639
    %v828 = vunpack.c.h.b16 %v639
    %v829 = vunpack.c.l.b16 %v640
    %v830 = vunpack.c.h.b16 %v640
    %v831 = vunpack.c.l.b16 %v641
    %v832 = vunpack.c.h.b16 %v641
    %v833 = vunpack.c.l.b16 %v642
    %v834 = vunpack.c.h.b16 %v642
    %v835 = vunpack.c.l.b16 %v643
    %v836 = vunpack.c.h.b16 %v643
    %v837 = vunpack.c.l.b16 %v644
    %v838 = vunpack.c.h.b16 %v644
    %v839 = vunpack.c.l.b16 %v645
    %v840 = vunpack.c.h.b16 %v645
    %v841 = vunpack.c.l.b16 %v646
    %v842 = vunpack.c.h.b16 %v646
    %v843 = vunpack.c.l.b16 %v647
    %v844 = vunpack.c.h.b16 %v647
    %v845 = vunpack.c.l.b16 %v648
    %v846 = vunpack.c.h.b16 %v648
    %v847 = vunpack.c.l.b16 %v649
    %v848 = vunpack.c.h.b16 %v649
    %v849 = vunpack.c.l.b16 %v650
    %v850 = vunpack.c.h.b16 %v650
    %v851 = vunpack.c.l.b16 %v651
    %v852 = vunpack.c.h.b16 %v651
    %v853 = vunpack.c.l.b16 %v652
    %v854 = vunpack.c.h.b16 %v652
    %v855 = vunpack.c.l.b16 %v653
    %v856 = vunpack.c.h.b16 %v653
    %v857 = vunpack.c.l.b16 %v654
    %v858 = vunpack.c.h.b16 %v654
    %v859 = vpack.c.b16 %v733, %v731
    %v860 = vpack.c.b16 %v734, %v732
    %v861 = vpack.c.b16 %v737, %v735
    %v862 = vpack.c.b16 %v738, %v736
    %v863 = vpack.c.b16 %v741, %v739
    %v864 = vpack.c.b16 %v742, %v740
    %v865 = vpack.c.b16 %v745, %v743
    %v866 = vpack.c.b16 %v746, %v744
    %v867 = vpack.c.b16 %v749, %v747
    %v868 = vpack.c.b16 %v750, %v748
    %v869 = vpack.c.b16 %v753, %v751
    %v870 = vpack.c.b16 %v754, %v752
    %v871 = vpack.c.b16 %v757, %v755
    %v872 = vpack.c.b16 %v758, %v756
    %v873 = vpack.c.b16 %v761, %v759
    %v874 = vpack.c.b16 %v762, %v760
    %v875 = vpack.c.b16 %v765, %v763
    %v876 = vpack.c.b16 %v766, %v764
    %v877 = vpack.c.b16 %v769, %v767
    %v878 = vpack.c.b16 %v770, %v768
    %v879 = vpack.c.b16 %v773, %v771
    %v880 = vpack.c.b16 %v774, %v772
    %v881 = vpack.c.b16 %v777, %v775
    %v882 = vpack.c.b16 %v778, %v776
    %v883 = vpack.c.b16 %v781, %v779
    %v884 = vpack.c.b16 %v782, %v780
    %v885 = vpack.c.b16 %v785, %v783
    %v886 = vpack.c.b16 %v786, %v784
    %v887 = vpack.c.b16 %v789, %v787
    %v888 = vpack.c.b16 %v790, %v788
    %v889 = vpack.c.b16 %v793, %v791
    %v890 = vpack.c.b16 %v794, %v792
    %v891 = vpack.c.b16 %v797, %v795
    %v892 = vpack.c.b16 %v798, %v796
    %v893 = vpack.c.b16 %v801, %v799
    %v894 = vpack.c.b16 %v802, %v800
    %v895 = vpack.c.b16 %v805, %v803
    %v896 = vpack.c.b16 %v806, %v804
    %v897 = vpack.c.b16 %v809, %v807
    %v898 = vpack.c.b16 %v810, %v808
    %v899 = vpack.c.b16 %v813, %v811
    %v900 = vpack.c.b16 %v814, %v812
    %v901 = vpack.c.b16 %v817, %v815
    %v902 = vpack.c.b16 %v818, %v816
    %v903 = vpack.c.b16 %v821, %v819
    %v904 = vpack.c.b16 %v822, %v820
    %v905 = vpack.c.b16 %v825, %v823
    %v906 = vpack.c.b16 %v826, %v824
    %v907 = vpack.c.b16 %v829, %v827
    %v908 = vpack.c.b16 %v830, %v828
    %v909 = vpack.c.b16 %v833, %v831
    %v910 = vpack.c.b16 %v834, %v832
    %v911 = vpack.c.b16 %v837, %v835
    %v912 = vpack.c.b16 %v838, %v836
    %v913 = vpack.c.b16 %v841, %v839
    %v914 = vpack.c.b16 %v842, %v840
    %v915 = vpack.c.b16 %v845, %v843
    %v916 = vpack.c.b16 %v846, %v844
    %v917 = vpack.c.b16 %v849, %v847
    %v918 = vpack.c.b16 %v850, %v848
    %v919 = vpack.c.b16 %v853, %v851
    %v920 = vpack.c.b16 %v854, %v852
    %v921 = vpack.c.b16 %v857, %v855
    %v922 = vpack.c.b16 %v858, %v856
    %987 = vmatprep.subr.bf16.mxu0 %v860
    %988 = vmatpush1.bf16.msra.mxu0 %v859
    %989 = vmatprep.subr.bf16.mxu0 %v862
    %990 = vmatpush1.bf16.msra.mxu0 %v861
    %991 = vmatprep.subr.bf16.mxu0 %v864
    %992 = vmatpush1.bf16.msra.mxu0 %v863
    %993 = vmatprep.subr.bf16.mxu0 %v866
    %994 = vmatpush1.bf16.msra.mxu0 %v865
    %995 = vmatprep.subr.bf16.mxu0 %v868
    %996 = vmatpush1.bf16.msra.mxu0 %v867
    %997 = vmatprep.subr.bf16.mxu0 %v870
    %998 = vmatpush1.bf16.msra.mxu0 %v869
    %999 = vmatprep.subr.bf16.mxu0 %v872
    %1000 = vmatpush1.bf16.msra.mxu0 %v871
    %1001 = vmatprep.subr.bf16.mxu0 %v874
    %1002 = vmatpush1.bf16.msra.mxu0 %v873
    %1003 = vmatprep.subr.bf16.mxu0 %v876
    %1004 = vmatpush1.bf16.msra.mxu0 %v875
    %1005 = vmatprep.subr.bf16.mxu0 %v878
    %1006 = vmatpush1.bf16.msra.mxu0 %v877
    %1007 = vmatprep.subr.bf16.mxu0 %v880
    %1008 = vmatpush1.bf16.msra.mxu0 %v879
    %1009 = vmatprep.subr.bf16.mxu0 %v882
    %1010 = vmatpush1.bf16.msra.mxu0 %v881
    %1011 = vmatprep.subr.bf16.mxu0 %v884
    %1012 = vmatpush1.bf16.msra.mxu0 %v883
    %1013 = vmatprep.subr.bf16.mxu0 %v886
    %1014 = vmatpush1.bf16.msra.mxu0 %v885
    %1015 = vmatprep.subr.bf16.mxu0 %v888
    %1016 = vmatpush1.bf16.msra.mxu0 %v887
    %1017 = vmatprep.subr.bf16.mxu0 %v890
    %1018 = vmatpush1.bf16.msra.mxu0 %v889
    %1019 = vmatprep.mubr.bf16.mxu0 %v588
    %1020 = vmatmul.mubr.bf16.gmra.mrb[0].mxu0 %v587
    %v1021 = vpop.f32.mrb[0].mxu0
    %v1022 = vadd.f32 %v660, %v1021
    %v1023 = vpop.f32.mrb[0].mxu0
    %v1024 = vadd.f32 %v664, %v1023
    %v1025 = vpop.f32.mrb[0].mxu0
    %v1026 = vpop.f32.mrb[0].mxu0
    %1027 = vdwg.mxu0
    %1028 = vmatprep.subr.bf16.mxu0 %v892
    %1029 = vmatpush1.bf16.msra.mxu0 %v891
    %1030 = vmatprep.subr.bf16.mxu0 %v894
    %1031 = vmatpush1.bf16.msra.mxu0 %v893
    %1032 = vmatprep.subr.bf16.mxu0 %v896
    %1033 = vmatpush1.bf16.msra.mxu0 %v895
    %1034 = vmatprep.subr.bf16.mxu0 %v898
    %1035 = vmatpush1.bf16.msra.mxu0 %v897
    %1036 = vmatprep.subr.bf16.mxu0 %v900
    %1037 = vmatpush1.bf16.msra.mxu0 %v899
    %1038 = vmatprep.subr.bf16.mxu0 %v902
    %1039 = vmatpush1.bf16.msra.mxu0 %v901
    %1040 = vmatprep.subr.bf16.mxu0 %v904
    %1041 = vmatpush1.bf16.msra.mxu0 %v903
    %1042 = vmatprep.subr.bf16.mxu0 %v906
    %1043 = vmatpush1.bf16.msra.mxu0 %v905
    %1044 = vmatprep.subr.bf16.mxu0 %v908
    %1045 = vmatpush1.bf16.msra.mxu0 %v907
    %1046 = vmatprep.subr.bf16.mxu0 %v910
    %1047 = vmatpush1.bf16.msra.mxu0 %v909
    %1048 = vmatprep.subr.bf16.mxu0 %v912
    %1049 = vmatpush1.bf16.msra.mxu0 %v911
    %1050 = vmatprep.subr.bf16.mxu0 %v914
    %1051 = vmatpush1.bf16.msra.mxu0 %v913
    %1052 = vmatprep.subr.bf16.mxu0 %v916
    %1053 = vmatpush1.bf16.msra.mxu0 %v915
    %1054 = vmatprep.subr.bf16.mxu0 %v918
    %1055 = vmatpush1.bf16.msra.mxu0 %v917
    %1056 = vmatprep.subr.bf16.mxu0 %v920
    %1057 = vmatpush1.bf16.msra.mxu0 %v919
    %1058 = vmatprep.subr.bf16.mxu0 %v922
    %1059 = vmatpush1.bf16.msra.mxu0 %v921
    %1060 = vmatprep.mubr.bf16.mxu0 %v590
    %1061 = vmatmul.mubr.bf16.gmra.mrb[0].mxu0 %v589
    %v1062 = vpop.f32.mrb[0].mxu0
    %v1063 = vadd.f32 %v1022, %v1062
    %v1064 = vpop.f32.mrb[0].mxu0
    %v1065 = vadd.f32 %v1024, %v1064
    %v1066 = vpop.f32.mrb[0].mxu0
    %v1067 = vpop.f32.mrb[0].mxu0
    %1068 = vdwg.mxu0
    %vm1069 = vcmp.gt.f32.partialorder %v1063, 0.0
    %vm1070 = vcmp.gt.f32.partialorder %v1065, 0.0
    %v1071 = vmul.f32 %v1063, 0.01
    %v1072 = vmul.f32 %v1065, 0.01
    %v1073 = vsel %vm1069, %v1063, %v1071
    %v1074 = vsel %vm1070, %v1065, %v1072
    %v1075 = vpack.c.bf16 %v1073, %v1073
    %v1076 = vpack.c.bf16 %v1074, %v1074
    %v1077 = vld [vmem:[%s5] sm:$0xf]
    %v1078 = vld [vmem:[%s5 + $0x4] sm:$0xf]
    %v1079 = vld [vmem:[%s5 + $0x8] sm:$0xf]
    %v1080 = vld [vmem:[%s5 + $0xc] sm:$0xf]
    %v1081 = vld [vmem:[%s5 + $0x10] sm:$0xf]
    %v1082 = vld [vmem:[%s5 + $0x14] sm:$0xf]
    %v1083 = vld [vmem:[%s5 + $0x18] sm:$0xf]
    %v1084 = vld [vmem:[%s5 + $0x1c] sm:$0xf]
    %v1085 = vld [vmem:[%s5 + $0x20] sm:$0xf]
    %v1086 = vld [vmem:[%s5 + $0x24] sm:$0xf]
    %v1087 = vld [vmem:[%s5 + $0x28] sm:$0xf]
    %v1088 = vld [vmem:[%s5 + $0x2c] sm:$0xf]
    %v1089 = vld [vmem:[%s5 + $0x30] sm:$0xf]
    %v1090 = vld [vmem:[%s5 + $0x34] sm:$0xf]
    %v1091 = vld [vmem:[%s5 + $0x38] sm:$0xf]
    %v1092 = vld [vmem:[%s5 + $0x3c] sm:$0xf]
    %v1093 = vld [vmem:[%s5 + $0x40] sm:$0xf]
    %v1094 = vld [vmem:[%s5 + $0x44] sm:$0xf]
    %v1095 = vld [vmem:[%s5 + $0x48] sm:$0xf]
    %v1096 = vld [vmem:[%s5 + $0x4c] sm:$0xf]
    %v1097 = vld [vmem:[%s5 + $0x50] sm:$0xf]
    %v1098 = vld [vmem:[%s5 + $0x54] sm:$0xf]
    %v1099 = vld [vmem:[%s5 + $0x58] sm:$0xf]
    %v1100 = vld [vmem:[%s5 + $0x5c] sm:$0xf]
    %v1101 = vld [vmem:[%s5 + $0x60] sm:$0xf]
    %v1102 = vld [vmem:[%s5 + $0x64] sm:$0xf]
    %v1103 = vld [vmem:[%s5 + $0x68] sm:$0xf]
    %v1104 = vld [vmem:[%s5 + $0x6c] sm:$0xf]
    %v1105 = vld [vmem:[%s5 + $0x70] sm:$0xf]
    %v1106 = vld [vmem:[%s5 + $0x74] sm:$0xf]
    %v1107 = vld [vmem:[%s5 + $0x78] sm:$0xf]
    %v1108 = vld [vmem:[%s5 + $0x7c] sm:$0xf]
    %v1109 = vld [vmem:[%s6] sm:$0x1]
    %v1111 = vlaneseq
    %v1112 = vshrl.u32 %v1111, 7
    %v1113 = vsub.s32 0, %v1112
    %v1114 = vrot.slane %v1109, %v1113
    %v1148 = vunpack.c.l.b16 %v1077
    %v1149 = vunpack.c.l.b16 %v1078
    %v1150 = vunpack.c.l.b16 %v1079
    %v1151 = vunpack.c.l.b16 %v1080
    %v1152 = vunpack.c.l.b16 %v1081
    %v1153 = vunpack.c.l.b16 %v1082
    %v1154 = vunpack.c.l.b16 %v1083
    %v1155 = vunpack.c.l.b16 %v1084
    %v1156 = vunpack.c.l.b16 %v1085
    %v1157 = vunpack.c.l.b16 %v1086
    %v1158 = vunpack.c.l.b16 %v1087
    %v1159 = vunpack.c.l.b16 %v1088
    %v1160 = vunpack.c.l.b16 %v1089
    %v1161 = vunpack.c.l.b16 %v1090
    %v1162 = vunpack.c.l.b16 %v1091
    %v1163 = vunpack.c.l.b16 %v1092
    %v1164 = vunpack.c.l.b16 %v1093
    %v1165 = vunpack.c.l.b16 %v1094
    %v1166 = vunpack.c.l.b16 %v1095
    %v1167 = vunpack.c.l.b16 %v1096
    %v1168 = vunpack.c.l.b16 %v1097
    %v1169 = vunpack.c.l.b16 %v1098
    %v1170 = vunpack.c.l.b16 %v1099
    %v1171 = vunpack.c.l.b16 %v1100
    %v1172 = vunpack.c.l.b16 %v1101
    %v1173 = vunpack.c.l.b16 %v1102
    %v1174 = vunpack.c.l.b16 %v1103
    %v1175 = vunpack.c.l.b16 %v1104
    %v1176 = vunpack.c.l.b16 %v1105
    %v1177 = vunpack.c.l.b16 %v1106
    %v1178 = vunpack.c.l.b16 %v1107
    %v1179 = vunpack.c.l.b16 %v1108
    %v1180 = vpack.c.b16 %v1149, %v1148
    %v1181 = vpack.c.b16 %v1151, %v1150
    %v1182 = vpack.c.b16 %v1153, %v1152
    %v1183 = vpack.c.b16 %v1155, %v1154
    %v1184 = vpack.c.b16 %v1157, %v1156
    %v1185 = vpack.c.b16 %v1159, %v1158
    %v1186 = vpack.c.b16 %v1161, %v1160
    %v1187 = vpack.c.b16 %v1163, %v1162
    %v1188 = vpack.c.b16 %v1165, %v1164
    %v1189 = vpack.c.b16 %v1167, %v1166
    %v1190 = vpack.c.b16 %v1169, %v1168
    %v1191 = vpack.c.b16 %v1171, %v1170
    %v1192 = vpack.c.b16 %v1173, %v1172
    %v1193 = vpack.c.b16 %v1175, %v1174
    %v1194 = vpack.c.b16 %v1177, %v1176
    %v1195 = vpack.c.b16 %v1179, %v1178
    %1212 = vmatprep.subr.bf16.mxu0 0
    %1213 = vmatpush1.bf16.msra.mxu0 %v1180
    %1214 = vmatprep.subr.bf16.mxu0 0
    %1215 = vmatpush1.bf16.msra.mxu0 %v1181
    %1216 = vmatprep.subr.bf16.mxu0 0
    %1217 = vmatpush1.bf16.msra.mxu0 %v1182
    %1218 = vmatprep.subr.bf16.mxu0 0
    %1219 = vmatpush1.bf16.msra.mxu0 %v1183
    %1220 = vmatprep.subr.bf16.mxu0 0
    %1221 = vmatpush1.bf16.msra.mxu0 %v1184
    %1222 = vmatprep.subr.bf16.mxu0 0
    %1223 = vmatpush1.bf16.msra.mxu0 %v1185
    %1224 = vmatprep.subr.bf16.mxu0 0
    %1225 = vmatpush1.bf16.msra.mxu0 %v1186
    %1226 = vmatprep.subr.bf16.mxu0 0
    %1227 = vmatpush1.bf16.msra.mxu0 %v1187
    %1228 = vmatprep.subr.bf16.mxu0 0
    %1229 = vmatpush1.bf16.msra.mxu0 %v1188
    %1230 = vmatprep.subr.bf16.mxu0 0
    %1231 = vmatpush1.bf16.msra.mxu0 %v1189
    %1232 = vmatprep.subr.bf16.mxu0 0
    %1233 = vmatpush1.bf16.msra.mxu0 %v1190
    %1234 = vmatprep.subr.bf16.mxu0 0
    %1235 = vmatpush1.bf16.msra.mxu0 %v1191
    %1236 = vmatprep.subr.bf16.mxu0 0
    %1237 = vmatpush1.bf16.msra.mxu0 %v1192
    %1238 = vmatprep.subr.bf16.mxu0 0
    %1239 = vmatpush1.bf16.msra.mxu0 %v1193
    %1240 = vmatprep.subr.bf16.mxu0 0
    %1241 = vmatpush1.bf16.msra.mxu0 %v1194
    %1242 = vmatprep.subr.bf16.mxu0 0
    %1243 = vmatpush1.bf16.msra.mxu0 %v1195
    %1244 = vmatprep.mubr.bf16.mxu0 %v1076
    %1245 = vmatmul.mubr.bf16.gmra.mrb[0].mxu0 %v1075
    %v1246 = vpop.f32.mrb[0].mxu0
    %v1247 = vadd.f32 %v1114, %v1246
    %v1248 = vpop.f32.mrb[0].mxu0
    %v1249 = vpop.f32.mrb[0].mxu0
    %v1250 = vpop.f32.mrb[0].mxu0
    %1251 = vdwg.mxu0
    %vm1252 = vcmp.gt.f32.partialorder %v1247, 0.0
    %v1253 = vmul.f32 %v1247, 0.01
    %v1254 = vsel %vm1252, %v1247, %v1253
    %v1255 = vpack.c.bf16 %v1254, %v1254
    %v1256 = vld [vmem:[%s7] sm:$0xf]
    %v1257 = vld [vmem:[%s7 + $0x4] sm:$0xf]
    %v1258 = vld [vmem:[%s7 + $0x8] sm:$0xf]
    %v1259 = vld [vmem:[%s7 + $0xc] sm:$0xf]
    %v1260 = vld [vmem:[%s7 + $0x10] sm:$0xf]
    %v1261 = vld [vmem:[%s7 + $0x14] sm:$0xf]
    %v1262 = vld [vmem:[%s7 + $0x18] sm:$0xf]
    %v1263 = vld [vmem:[%s7 + $0x1c] sm:$0xf]
    %v1264 = vld [vmem:[%s7 + $0x20] sm:$0xf]
    %v1265 = vld [vmem:[%s7 + $0x24] sm:$0xf]
    %v1266 = vld [vmem:[%s7 + $0x28] sm:$0xf]
    %v1267 = vld [vmem:[%s7 + $0x2c] sm:$0xf]
    %v1268 = vld [vmem:[%s7 + $0x30] sm:$0xf]
    %v1269 = vld [vmem:[%s7 + $0x34] sm:$0xf]
    %v1270 = vld [vmem:[%s7 + $0x38] sm:$0xf]
    %v1271 = vld [vmem:[%s7 + $0x3c] sm:$0xf]
    %v1272 = vld [vmem:[%s8] sm:$0x1]
    %v1274 = vlaneseq
    %v1275 = vshrl.u32 %v1274, 7
    %v1276 = vsub.s32 0, %v1275
    %v1277 = vrot.slane %v1272, %v1276
    %v1295 = vunpack.c.l.b16 %v1256
    %v1296 = vunpack.c.l.b16 %v1257
    %v1297 = vunpack.c.l.b16 %v1258
    %v1298 = vunpack.c.l.b16 %v1259
    %v1299 = vunpack.c.l.b16 %v1260
    %v1300 = vunpack.c.l.b16 %v1261
    %v1301 = vunpack.c.l.b16 %v1262
    %v1302 = vunpack.c.l.b16 %v1263
    %v1303 = vunpack.c.l.b16 %v1264
    %v1304 = vunpack.c.l.b16 %v1265
    %v1305 = vunpack.c.l.b16 %v1266
    %v1306 = vunpack.c.l.b16 %v1267
    %v1307 = vunpack.c.l.b16 %v1268
    %v1308 = vunpack.c.l.b16 %v1269
    %v1309 = vunpack.c.l.b16 %v1270
    %v1310 = vunpack.c.l.b16 %v1271
    %v1311 = vpack.c.b16 %v1296, %v1295
    %v1312 = vpack.c.b16 %v1298, %v1297
    %v1313 = vpack.c.b16 %v1300, %v1299
    %v1314 = vpack.c.b16 %v1302, %v1301
    %v1315 = vpack.c.b16 %v1304, %v1303
    %v1316 = vpack.c.b16 %v1306, %v1305
    %v1317 = vpack.c.b16 %v1308, %v1307
    %v1318 = vpack.c.b16 %v1310, %v1309
    %1327 = vmatprep.subr.bf16.mxu0 0
    %1328 = vmatpush1.bf16.msra.mxu0 %v1311
    %1329 = vmatprep.subr.bf16.mxu0 0
    %1330 = vmatpush1.bf16.msra.mxu0 %v1312
    %1331 = vmatprep.subr.bf16.mxu0 0
    %1332 = vmatpush1.bf16.msra.mxu0 %v1313
    %1333 = vmatprep.subr.bf16.mxu0 0
    %1334 = vmatpush1.bf16.msra.mxu0 %v1314
    %1335 = vmatprep.subr.bf16.mxu0 0
    %1336 = vmatpush1.bf16.msra.mxu0 %v1315
    %1337 = vmatprep.subr.bf16.mxu0 0
    %1338 = vmatpush1.bf16.msra.mxu0 %v1316
    %1339 = vmatprep.subr.bf16.mxu0 0
    %1340 = vmatpush1.bf16.msra.mxu0 %v1317
    %1341 = vmatprep.subr.bf16.mxu0 0
    %1342 = vmatpush1.bf16.msra.mxu0 %v1318
    %1343 = vmatprep.subr.bf16.mxu0 0
    %1344 = vmatpush1.bf16.msra.mxu0 0
    %1345 = vmatprep.subr.bf16.mxu0 0
    %1346 = vmatpush1.bf16.msra.mxu0 0
    %1347 = vmatprep.subr.bf16.mxu0 0
    %1348 = vmatpush1.bf16.msra.mxu0 0
    %1349 = vmatprep.subr.bf16.mxu0 0
    %1350 = vmatpush1.bf16.msra.mxu0 0
    %1351 = vmatprep.subr.bf16.mxu0 0
    %1352 = vmatpush1.bf16.msra.mxu0 0
    %1353 = vmatprep.subr.bf16.mxu0 0
    %1354 = vmatpush1.bf16.msra.mxu0 0
    %1355 = vmatprep.subr.bf16.mxu0 0
    %1356 = vmatpush1.bf16.msra.mxu0 0
    %1357 = vmatprep.subr.bf16.mxu0 0
    %1358 = vmatpush1.bf16.msra.mxu0 0
    %1359 = vmatprep.mubr.bf16.mxu0 0
    %1360 = vmatmul.mubr.bf16.gmra.mrb[0].mxu0 %v1255
    %v1361 = vpop.f32.mrb[0].mxu0
    %v1362 = vadd.f32 %v1277, %v1361
    %v1363 = vpop.f32.mrb[0].mxu0
    %v1364 = vpop.f32.mrb[0].mxu0
    %v1365 = vpop.f32.mrb[0].mxu0
    %1366 = vdwg.mxu0
    %vm1367 = vcmp.gt.f32.partialorder %v1362, 0.0
    %v1368 = vmul.f32 %v1362, 0.01
    %v1369 = vsel %vm1367, %v1362, %v1368
    %v1370 = vpack.c.bf16 %v1369, %v1369
    %v1371 = vld [vmem:[%s9] sm:$0xf]
    %v1372 = vld [vmem:[%s9 + $0x4] sm:$0xf]
    %v1373 = vld [vmem:[%s9 + $0x8] sm:$0xf]
    %v1374 = vld [vmem:[%s9 + $0xc] sm:$0xf]
    %v1375 = vld [vmem:[%s9 + $0x10] sm:$0xf]
    %v1376 = vld [vmem:[%s9 + $0x14] sm:$0xf]
    %v1377 = vld [vmem:[%s9 + $0x18] sm:$0xf]
    %v1378 = vld [vmem:[%s9 + $0x1c] sm:$0xf]
    %v1379 = vld [vmem:[%s10] sm:$0x1]
    %v1381 = vlaneseq
    %v1382 = vshrl.u32 %v1381, 7
    %v1383 = vsub.s32 0, %v1382
    %v1384 = vrot.slane %v1379, %v1383
    %v1394 = vunpack.c.l.b16 %v1371
    %v1395 = vunpack.c.l.b16 %v1372
    %v1396 = vunpack.c.l.b16 %v1373
    %v1397 = vunpack.c.l.b16 %v1374
    %v1398 = vunpack.c.l.b16 %v1375
    %v1399 = vunpack.c.l.b16 %v1376
    %v1400 = vunpack.c.l.b16 %v1377
    %v1401 = vunpack.c.l.b16 %v1378
    %v1402 = vpack.c.b16 %v1395, %v1394
    %v1403 = vpack.c.b16 %v1397, %v1396
    %v1404 = vpack.c.b16 %v1399, %v1398
    %v1405 = vpack.c.b16 %v1401, %v1400
    %vm1410 = vcmask 523264
    %v1412 = vsel %vm1410, %v1370, 0
    %1414 = vmatprep.subr.bf16.mxu0 0
    %1415 = vmatpush1.bf16.msra.mxu0 %v1402
    %1416 = vmatprep.subr.bf16.mxu0 0
    %1417 = vmatpush1.bf16.msra.mxu0 %v1403
    %1418 = vmatprep.subr.bf16.mxu0 0
    %1419 = vmatpush1.bf16.msra.mxu0 %v1404
    %1420 = vmatprep.subr.bf16.mxu0 0
    %1421 = vmatpush1.bf16.msra.mxu0 %v1405
    %1422 = vmatprep.subr.bf16.mxu0 0
    %1423 = vmatpush1.bf16.msra.mxu0 0
    %1424 = vmatprep.subr.bf16.mxu0 0
    %1425 = vmatpush1.bf16.msra.mxu0 0
    %1426 = vmatprep.subr.bf16.mxu0 0
    %1427 = vmatpush1.bf16.msra.mxu0 0
    %1428 = vmatprep.subr.bf16.mxu0 0
    %1429 = vmatpush1.bf16.msra.mxu0 0
    %1430 = vmatprep.subr.bf16.mxu0 0
    %1431 = vmatpush1.bf16.msra.mxu0 0
    %1432 = vmatprep.subr.bf16.mxu0 0
    %1433 = vmatpush1.bf16.msra.mxu0 0
    %1434 = vmatprep.subr.bf16.mxu0 0
    %1435 = vmatpush1.bf16.msra.mxu0 0
    %1436 = vmatprep.subr.bf16.mxu0 0
    %1437 = vmatpush1.bf16.msra.mxu0 0
    %1438 = vmatprep.subr.bf16.mxu0 0
    %1439 = vmatpush1.bf16.msra.mxu0 0
    %1440 = vmatprep.subr.bf16.mxu0 0
    %1441 = vmatpush1.bf16.msra.mxu0 0
    %1442 = vmatprep.subr.bf16.mxu0 0
    %1443 = vmatpush1.bf16.msra.mxu0 0
    %1444 = vmatprep.subr.bf16.mxu0 0
    %1445 = vmatpush1.bf16.msra.mxu0 0
    %1446 = vmatprep.mubr.bf16.mxu0 0
    %1447 = vmatmul.mubr.bf16.gmra.mrb[0].mxu0 %v1412
    %v1448 = vpop.f32.mrb[0].mxu0
    %v1449 = vadd.f32 %v1384, %v1448
    %v1450 = vpop.f32.mrb[0].mxu0
    %v1451 = vpop.f32.mrb[0].mxu0
    %v1452 = vpop.f32.mrb[0].mxu0
    %1453 = vdwg.mxu0
    %vm1454 = vcmp.gt.f32.partialorder %v1449, 0.0
    %v1455 = vmul.f32 %v1449, 0.01
    %v1456 = vsel %vm1454, %v1449, %v1455
    %v1457 = vpack.c.bf16 %v1456, %v1456
    %v1458 = vld [vmem:[%s11] sm:$0xf]
    %v1459 = vld [vmem:[%s11 + $0x4] sm:$0xf]
    %v1460 = vld [vmem:[%s11 + $0x8] sm:$0xf]
    %v1461 = vld [vmem:[%s11 + $0xc] sm:$0xf]
    %v1462 = vld [vmem:[#allocation2] sm:$0x1]
    %v1464 = vlaneseq
    %v1465 = vshrl.u32 %v1464, 7
    %v1466 = vsub.s32 0, %v1465
    %v1467 = vrot.slane %v1462, %v1466
    %v1473 = vunpack.c.l.b16 %v1458
    %v1474 = vunpack.c.l.b16 %v1459
    %v1475 = vunpack.c.l.b16 %v1460
    %v1476 = vunpack.c.l.b16 %v1461
    %v1477 = vpack.c.b16 %v1474, %v1473
    %v1478 = vpack.c.b16 %v1476, %v1475
    %vm1481 = vcmask 261120
    %v1483 = vsel %vm1481, %v1457, 0
    %1485 = vmatprep.subr.bf16.mxu0 0
    %1486 = vmatpush1.bf16.msra.mxu0 %v1477
    %1487 = vmatprep.subr.bf16.mxu0 0
    %1488 = vmatpush1.bf16.msra.mxu0 %v1478
    %1489 = vmatprep.subr.bf16.mxu0 0
    %1490 = vmatpush1.bf16.msra.mxu0 0
    %1491 = vmatprep.subr.bf16.mxu0 0
    %1492 = vmatpush1.bf16.msra.mxu0 0
    %1493 = vmatprep.subr.bf16.mxu0 0
    %1494 = vmatpush1.bf16.msra.mxu0 0
    %1495 = vmatprep.subr.bf16.mxu0 0
    %1496 = vmatpush1.bf16.msra.mxu0 0
    %1497 = vmatprep.subr.bf16.mxu0 0
    %1498 = vmatpush1.bf16.msra.mxu0 0
    %1499 = vmatprep.subr.bf16.mxu0 0
    %1500 = vmatpush1.bf16.msra.mxu0 0
    %1501 = vmatprep.subr.bf16.mxu0 0
    %1502 = vmatpush1.bf16.msra.mxu0 0
    %1503 = vmatprep.subr.bf16.mxu0 0
    %1504 = vmatpush1.bf16.msra.mxu0 0
    %1505 = vmatprep.subr.bf16.mxu0 0
    %1506 = vmatpush1.bf16.msra.mxu0 0
    %1507 = vmatprep.subr.bf16.mxu0 0
    %1508 = vmatpush1.bf16.msra.mxu0 0
    %1509 = vmatprep.subr.bf16.mxu0 0
    %1510 = vmatpush1.bf16.msra.mxu0 0
    %1511 = vmatprep.subr.bf16.mxu0 0
    %1512 = vmatpush1.bf16.msra.mxu0 0
    %1513 = vmatprep.subr.bf16.mxu0 0
    %1514 = vmatpush1.bf16.msra.mxu0 0
    %1515 = vmatprep.subr.bf16.mxu0 0
    %1516 = vmatpush1.bf16.msra.mxu0 0
    %1517 = vmatprep.mubr.bf16.mxu0 0
    %1518 = vmatmul.mubr.bf16.gmra.mrb[0].mxu0 %v1483
    %v1519 = vpop.f32.mrb[0].mxu0
    %v1520 = vadd.f32 %v1467, %v1519
    %v1521 = vpop.f32.mrb[0].mxu0
    %v1522 = vpop.f32.mrb[0].mxu0
    %v1523 = vpop.f32.mrb[0].mxu0
    %1524 = vdwg.mxu0
    %v1525 = vsub.f32 0.0, %v1520
    %v1526 = vmul.f32 %v1525, 1.442695
    %v1527 = vpow.pop %v1526
    %v1528 = vadd.f32 %v1527, 1.0
    %v1529 = vrcp.pop %v1528
    %vm1530 = vcmask 3072
    %1531 = vst.msk [vmem:[%s13] sm:$0xf] %vm1530, %v1529
    // Predicated region
    $region62: #{discriminator_audio_forward.1} parent=1 // pred_check
      _
    $region63: #{discriminator_audio_forward.1} parent=1 // pred_check_branch
      %1533 = sbr.rel (0) target = $region65
    $region64: #{discriminator_audio_forward.1} parent=1 // pred_region
      _
    $region65: #{discriminator_audio_forward.1} parent=1 // pred_fallthru
      _
    // Predicated region
    $region66: #{discriminator_audio_forward.1} parent=1 // pred_check
      _
    $region67: #{discriminator_audio_forward.1} parent=1 // pred_check_branch
      %1535 = sbr.rel (0) target = $region69
    $region68: #{discriminator_audio_forward.1} parent=1 // pred_region
      _
    $region69: #{discriminator_audio_forward.1} parent=1 // pred_fallthru
      _
    %1536 = vsyncpa [#allocation4], 1
    %1537 = vsyncpa [#allocation6], 1

</llo_original>
